<compile_context>
chip_gen: v6e
topology: v6e:2x2x1
jax: 0.10.0
libtpu: 0.0.40
codegen_flags: <defaults>
</compile_context>

<pallas_src>
import math

import jax
import jax.numpy as jnp
from jax import lax
from jax.experimental import pallas as pl
from jax.experimental.pallas import tpu as pltpu


def cglstm_kernel(x_ref, w_ih_ref, w_hh_ref, b_g_ref,
                  w_im_ref, b_im_ref, w_oa_ref, w_ob_ref, b_o_ref,
                  out_ref, gi_ref, seq_ref):
    """CGLSTMCellv1 forward, fully VMEM-resident.

    x_ref    : [T, Bp, D]    time-major, batch padded to a sublane tile
    w_ih_ref : [D, 4*Hp]     LSTM input weights, gate order i|f|g|o, lane-padded
    w_hh_ref : [Hp, 4*Hp]    LSTM recurrent weights (padded rows are zero)
    b_g_ref  : [1, 4*Hp]     b_ih + b_hh, gate-padded
    w_im_ref : [D, Hp]       input_mapped Linear (transposed, lane-padded)
    b_im_ref : [1, Hp]
    w_oa_ref : [Hp, Hp]      out_mapped weight, rows multiplying `ht`
    w_ob_ref : [Hp, Hp]      out_mapped weight, rows multiplying `output`
    b_o_ref  : [1, Hp]
    out_ref  : [T, Bp, Hp]
    gi_ref   : [T, Bp, 4*Hp] scratch: hoisted gate pre-activations
    seq_ref  : [T, Bp, Hp]   scratch: LSTM output sequence
    """
    T, Bp, D = x_ref.shape
    Hp = w_hh_ref.shape[0]

    # ---- hoisted input projection: one big matmul for ALL timesteps ---------
    x_flat = x_ref[...].reshape(T * Bp, D)
    gi = jnp.dot(x_flat, w_ih_ref[...],
                 preferred_element_type=jnp.float32) + b_g_ref[...]
    gi_ref[...] = gi.reshape(T, Bp, 4 * Hp)

    # ---- serial LSTM recurrence: only h @ W_hh per step ----------------------
    # Fully unrolled (T static & small) -> static ref indices, cross-step
    # scheduling. For long T switch to lax.fori_loop(..., unroll=2..4).
    w_hh = w_hh_ref[...]
    h = jnp.zeros((Bp, Hp), jnp.float32)
    c = jnp.zeros((Bp, Hp), jnp.float32)
    for t in range(T):
        g = gi_ref[t] + jnp.dot(h, w_hh, preferred_element_type=jnp.float32)
        i_g = jax.nn.sigmoid(g[:, 0 * Hp:1 * Hp])   # whole-lane-tile gate slabs
        f_g = jax.nn.sigmoid(g[:, 1 * Hp:2 * Hp])
        c_g = jnp.tanh(g[:, 2 * Hp:3 * Hp])
        o_g = jax.nn.sigmoid(g[:, 3 * Hp:4 * Hp])
        c = f_g * c + i_g * c_g
        h = o_g * jnp.tanh(c)
        seq_ref[t] = h

    output = seq_ref[...]                                          # [T, Bp, Hp]

    # ---- input_mapped (second hoisted matmul, computed after the loop) ------
    im = (jnp.dot(x_flat, w_im_ref[...], preferred_element_type=jnp.float32)
          + b_im_ref[...]).reshape(T, Bp, Hp)

    # ---- cosine-similarity gates along the time axis -------------------------
    # prv_output = [0, output[:-1]]; its dot products / norm only involve
    # output[:-1], so the shifted sequence is never materialized.
    # (For non-degenerate vectors this matches torch cosine_similarity with
    #  eps=1e-12 to float rounding.)
    eps = 1e-12
    n_im = jnp.maximum(jnp.sqrt(jnp.sum(im * im, axis=0)), eps)    # [Bp, Hp]

    num_ic = jnp.sum(im[1:] * output[:-1], axis=0)
    n_prv = jnp.maximum(
        jnp.sqrt(jnp.sum(output[:-1] * output[:-1], axis=0)), eps)
    gate_ic = (num_ic / (n_im * n_prv))[None]                      # [1, Bp, Hp]

    num_co = jnp.sum(im * output, axis=0)
    n_out = jnp.maximum(jnp.sqrt(jnp.sum(output * output, axis=0)), eps)
    gate_co = (num_co / (n_im * n_out))[None]                      # [1, Bp, Hp]

    # ---- output head ----------------------------------------------------------
    # out_mapped(concat([ht, output], -1)) == ht @ W_oa + output @ W_ob + b_o
    ht = (im * gate_ic + output) * gate_co                         # [T, Bp, Hp]
    y = (jnp.dot(ht.reshape(T * Bp, Hp), w_oa_ref[...],
                 preferred_element_type=jnp.float32)
         + jnp.dot(output.reshape(T * Bp, Hp), w_ob_ref[...],
                   preferred_element_type=jnp.float32)
         + b_o_ref[...]).reshape(T, Bp, Hp)
    out_ref[...] = y * gate_co


def cglstm_forward(x, params, hidden_size):
    """x: [B, T, input_size] (batch_first). Returns [B, T, hidden_size]."""
    B, T, D = x.shape
    H = hidden_size
    Hp = params["w_hh_p"].shape[0]
    Bp = ((B + 7) // 8) * 8                      # pad batch to one sublane tile

    x_tm = jnp.transpose(x, (1, 0, 2)).astype(jnp.float32)     # [T, B, D]
    x_tm = jnp.pad(x_tm, ((0, 0), (0, Bp - B), (0, 0)))        # [T, Bp, D]

    vmem = pl.BlockSpec(memory_space=pltpu.MemorySpace.VMEM)
    out = pl.pallas_call(
        cglstm_kernel,
        out_shape=jax.ShapeDtypeStruct((T, Bp, Hp), jnp.float32),
        in_specs=[vmem] * 9,
        out_specs=vmem,
        scratch_shapes=[
            pltpu.VMEM((T, Bp, 4 * Hp), jnp.float32),   # hoisted gate pre-acts
            pltpu.VMEM((T, Bp, Hp), jnp.float32),       # LSTM output sequence
        ],
    )(x_tm,
      params["w_ih_p"], params["w_hh_p"], params["b_g_p"],
      params["w_im_p"], params["b_im_p"],
      params["w_oa_p"], params["w_ob_p"], params["b_o_p"])

    return jnp.transpose(out, (1, 0, 2))[:B, :, :H]             # back to [B,T,H]


def init_raw_params(key, input_size, hidden_size):
    """Deterministic synthetic init with PyTorch parameter shapes.

    nn.LSTM(D, H): weight_ih_l0 [4H, D], weight_hh_l0 [4H, H],
                   bias_ih_l0 [4H], bias_hh_l0 [4H]      (gate order i|f|g|o)
    nn.Linear(D, H):   weight [H, D],  bias [H]          (input_mapped)
    nn.Linear(2H, H):  weight [H, 2H], bias [H]          (out_mapped)
    """
    D, H = input_size, hidden_size
    ks = jax.random.split(key, 8)
    bH = 1.0 / math.sqrt(H)
    bD = 1.0 / math.sqrt(D)
    b2H = 1.0 / math.sqrt(2 * H)
    u = lambda k, shape, b: jax.random.uniform(k, shape, jnp.float32, -b, b)
    return {
        "w_ih": u(ks[0], (4 * H, D), bH),
        "w_hh": u(ks[1], (4 * H, H), bH),
        "b_ih": u(ks[2], (4 * H,), bH),
        "b_hh": u(ks[3], (4 * H,), bH),
        "w_im": u(ks[4], (H, D), bD),
        "b_im": u(ks[5], (H,), bD),
        "w_out": u(ks[6], (H, 2 * H), b2H),
        "b_out": u(ks[7], (H,), b2H),
    }


def pack_params(raw, hidden_size):
    """Transpose + zero-pad weights so every LSTM gate is a whole 128-lane tile.

    Zero padding is exact: padded gate columns give i=f=o=0.5, g=0, so padded
    hidden/cell lanes stay identically zero and never feed real lanes (padded
    W_hh rows are zero); padded output channels stay zero through the gates and
    out_mapped and are sliced off in the wrapper.
    """
    H = hidden_size
    Hp = max(128, ((H + 127) // 128) * 128)

    def pad_gates(w_t):          # [K, 4H] -> [K, 4Hp], lane-aligned gate slabs
        return jnp.concatenate(
            [jnp.pad(w_t[:, g * H:(g + 1) * H], ((0, 0), (0, Hp - H)))
             for g in range(4)], axis=1)

    b_gate = (raw["b_ih"] + raw["b_hh"]).reshape(1, 4 * H)   # fold both biases
    return {
        "w_ih_p": pad_gates(raw["w_ih"].T),                               # [D, 4Hp]
        "w_hh_p": jnp.pad(pad_gates(raw["w_hh"].T), ((0, Hp - H), (0, 0))),  # [Hp, 4Hp]
        "b_g_p": pad_gates(b_gate),                                       # [1, 4Hp]
        "w_im_p": jnp.pad(raw["w_im"].T, ((0, 0), (0, Hp - H))),          # [D, Hp]
        "b_im_p": jnp.pad(raw["b_im"].reshape(1, H), ((0, 0), (0, Hp - H))),
        "w_oa_p": jnp.pad(raw["w_out"][:, :H].T, ((0, Hp - H), (0, Hp - H))),
        "w_ob_p": jnp.pad(raw["w_out"][:, H:].T, ((0, Hp - H), (0, Hp - H))),
        "b_o_p": jnp.pad(raw["b_out"].reshape(1, H), ((0, 0), (0, Hp - H))),
    }


def reference_forward(x, raw):
    """Pure-JAX reference mirroring CGLSTMCellv1.forward (correctness check)."""
    with jax.default_matmul_precision("float32"):
        B, T, D = x.shape
        H = raw["w_im"].shape[0]
        w_ih, w_hh = raw["w_ih"], raw["w_hh"]
        bias = raw["b_ih"] + raw["b_hh"]

        def step(carry, xt):
            h, c = carry
            g = xt @ w_ih.T + h @ w_hh.T + bias
            i, f, gg, o = jnp.split(g, 4, axis=-1)
            c = jax.nn.sigmoid(f) * c + jax.nn.sigmoid(i) * jnp.tanh(gg)
            h = jax.nn.sigmoid(o) * jnp.tanh(c)
            return (h, c), h

        h0 = jnp.zeros((B, H), jnp.float32)
        (_, _), out_tm = lax.scan(step, (h0, h0), jnp.swapaxes(x, 0, 1))
        output = jnp.swapaxes(out_tm, 0, 1)                        # [B, T, H]

        im = x @ raw["w_im"].T + raw["b_im"]                       # [B, T, H]
        prv = jnp.concatenate(
            [jnp.zeros((B, 1, H), jnp.float32), output[:, :-1]], axis=1)

        eps = 1e-12

        def cos_t(a, b):
            num = jnp.sum(a * b, axis=1)
            na = jnp.maximum(jnp.sqrt(jnp.sum(a * a, axis=1)), eps)
            nb = jnp.maximum(jnp.sqrt(jnp.sum(b * b, axis=1)), eps)
            return (num / (na * nb))[:, None, :]

        gate_ic = cos_t(im, prv)
        gate_co = cos_t(im, output)
        ht = (im * gate_ic + output) * gate_co
        y = jnp.concatenate([ht, output], axis=-1) @ raw["w_out"].T + raw["b_out"]
        return y * gate_co


if __name__ == "__main__":
    B, T = 2, 8
    input_size, hidden_size = 32, 32

    key = jax.random.PRNGKey(0)
    k_x, k_p = jax.random.split(key)
    x = jax.random.normal(k_x, (B, T, input_size), jnp.float32)

    raw = init_raw_params(k_p, input_size, hidden_size)
    params = pack_params(raw, hidden_size)

    out = cglstm_forward(x, params, hidden_size)
    out = jax.block_until_ready(out)
    assert out.shape == (B, T, hidden_size)
    assert bool(jnp.all(jnp.isfinite(out)))

    ref = reference_forward(x, raw)
    assert bool(jnp.allclose(out, ref, rtol=1e-2, atol=1e-3)), (
        "kernel/reference mismatch: max abs err = "
        f"{float(jnp.max(jnp.abs(out - ref)))}")
    print("KERNEL_OK")
</pallas_src>

<mosaic_0001>
module attributes {stable_mosaic.version = 11 : i64} {
  func.func @cglstm_kernel(%arg0: memref<8x8x32xf32, #tpu.memory_space<vmem>>, %arg1: memref<32x512xf32, #tpu.memory_space<vmem>>, %arg2: memref<128x512xf32, #tpu.memory_space<vmem>>, %arg3: memref<1x512xf32, #tpu.memory_space<vmem>>, %arg4: memref<32x128xf32, #tpu.memory_space<vmem>>, %arg5: memref<1x128xf32, #tpu.memory_space<vmem>>, %arg6: memref<128x128xf32, #tpu.memory_space<vmem>>, %arg7: memref<128x128xf32, #tpu.memory_space<vmem>>, %arg8: memref<1x128xf32, #tpu.memory_space<vmem>>, %arg9: memref<8x8x128xf32, #tpu.memory_space<vmem>>, %arg10: memref<8x8x512xf32, #tpu.memory_space<vmem>>, %arg11: memref<8x8x128xf32, #tpu.memory_space<vmem>>) attributes {dimension_semantics = [], scalar_prefetch = 0 : i64, scratch_operands = 2 : i64, tpu.core_type = #tpu.core_type<tc>} {
    %c0 = arith.constant 0 : index
    %c0_0 = arith.constant 0 : index
    %c0_1 = arith.constant 0 : index
    %0 = vector.load %arg0[%c0, %c0_0, %c0_1] : memref<8x8x32xf32, #tpu.memory_space<vmem>>, vector<8x8x32xf32>
    %1 = vector.shape_cast %0 : vector<8x8x32xf32> to vector<64x32xf32>
    %c0_2 = arith.constant 0 : index
    %c0_3 = arith.constant 0 : index
    %2 = vector.load %arg1[%c0_2, %c0_3] : memref<32x512xf32, #tpu.memory_space<vmem>>, vector<32x512xf32>
    %cst = arith.constant dense<0.000000e+00> : vector<64x512xf32>
    %3 = tpu.matmul %1, %2, %cst {dimension_numbers = #tpu.dot_dimension_numbers<[1], [0], [0], [1], [0, 0, 1, 1], [], []>} : vector<64x32xf32>, vector<32x512xf32>, vector<64x512xf32> -> vector<64x512xf32>
    %c0_4 = arith.constant 0 : index
    %c0_5 = arith.constant 0 : index
    %4 = vector.load %arg3[%c0_4, %c0_5] : memref<1x512xf32, #tpu.memory_space<vmem>>, vector<1x512xf32>
    %5 = vector.broadcast %4 : vector<1x512xf32> to vector<64x512xf32>
    %6 = arith.addf %3, %5 : vector<64x512xf32>
    %7 = vector.shape_cast %6 : vector<64x512xf32> to vector<8x8x512xf32>
    %c0_6 = arith.constant 0 : index
    %c0_7 = arith.constant 0 : index
    %c0_8 = arith.constant 0 : index
    %8 = vector.load %arg10[%c0_6, %c0_7, %c0_8] : memref<8x8x512xf32, #tpu.memory_space<vmem>>, vector<8x8x512xf32>
    tpu.vector_store %arg10[%c0_6, %c0_7, %c0_8], %7 {strides = array<i32>} : memref<8x8x512xf32, #tpu.memory_space<vmem>>, vector<8x8x512xf32>,
    %c0_9 = arith.constant 0 : index
    %c0_10 = arith.constant 0 : index
    %9 = vector.load %arg2[%c0_9, %c0_10] : memref<128x512xf32, #tpu.memory_space<vmem>>, vector<128x512xf32>
    %cst_11 = arith.constant 0.000000e+00 : f32
    %10 = vector.broadcast %cst_11 : f32 to vector<8x128xf32>
    %cst_12 = arith.constant 0.000000e+00 : f32
    %11 = vector.broadcast %cst_12 : f32 to vector<8x128xf32>
    %c0_13 = arith.constant 0 : index
    %c0_14 = arith.constant 0 : index
    %c0_15 = arith.constant 0 : index
    %12 = vector.load %arg10[%c0_13, %c0_14, %c0_15] : memref<8x8x512xf32, #tpu.memory_space<vmem>>, vector<1x8x512xf32>
    %13 = vector.shape_cast %12 : vector<1x8x512xf32> to vector<8x512xf32>
    %cst_16 = arith.constant dense<0.000000e+00> : vector<8x512xf32>
    %14 = tpu.matmul %10, %9, %cst_16 {dimension_numbers = #tpu.dot_dimension_numbers<[1], [0], [0], [1], [0, 0, 1, 1], [], []>} : vector<8x128xf32>, vector<128x512xf32>, vector<8x512xf32> -> vector<8x512xf32>
    %15 = arith.addf %13, %14 : vector<8x512xf32>
    %16 = vector.extract_strided_slice %15 {offsets = [0, 0], sizes = [8, 128], strides = [1, 1]} : vector<8x512xf32> to vector<8x128xf32>
    %17 = arith.negf %16 : vector<8x128xf32>
    %18 = math.exp %17 : vector<8x128xf32>
    %cst_17 = arith.constant 1.000000e+00 : f32
    %19 = vector.broadcast %cst_17 : f32 to vector<8x128xf32>
    %20 = arith.addf %19, %18 : vector<8x128xf32>
    %21 = arith.divf %19, %20 : vector<8x128xf32>
    %22 = vector.extract_strided_slice %15 {offsets = [0, 128], sizes = [8, 128], strides = [1, 1]} : vector<8x512xf32> to vector<8x128xf32>
    %23 = arith.negf %22 : vector<8x128xf32>
    %24 = math.exp %23 : vector<8x128xf32>
    %cst_18 = arith.constant 1.000000e+00 : f32
    %25 = vector.broadcast %cst_18 : f32 to vector<8x128xf32>
    %26 = arith.addf %25, %24 : vector<8x128xf32>
    %27 = arith.divf %25, %26 : vector<8x128xf32>
    %28 = vector.extract_strided_slice %15 {offsets = [0, 256], sizes = [8, 128], strides = [1, 1]} : vector<8x512xf32> to vector<8x128xf32>
    %29 = math.tanh %28 : vector<8x128xf32>
    %30 = vector.extract_strided_slice %15 {offsets = [0, 384], sizes = [8, 128], strides = [1, 1]} : vector<8x512xf32> to vector<8x128xf32>
    %31 = arith.negf %30 : vector<8x128xf32>
    %32 = math.exp %31 : vector<8x128xf32>
    %cst_19 = arith.constant 1.000000e+00 : f32
    %33 = vector.broadcast %cst_19 : f32 to vector<8x128xf32>
    %34 = arith.addf %33, %32 : vector<8x128xf32>
    %35 = arith.divf %33, %34 : vector<8x128xf32>
    %36 = arith.mulf %27, %11 : vector<8x128xf32>
    %37 = arith.mulf %21, %29 : vector<8x128xf32>
    %38 = arith.addf %36, %37 : vector<8x128xf32>
    %39 = math.tanh %38 : vector<8x128xf32>
    %40 = arith.mulf %35, %39 : vector<8x128xf32>
    %c0_20 = arith.constant 0 : index
    %c0_21 = arith.constant 0 : index
    %c0_22 = arith.constant 0 : index
    %41 = vector.load %arg11[%c0_20, %c0_21, %c0_22] : memref<8x8x128xf32, #tpu.memory_space<vmem>>, vector<1x8x128xf32>
    %42 = vector.shape_cast %41 : vector<1x8x128xf32> to vector<8x128xf32>
    %43 = vector.shape_cast %40 : vector<8x128xf32> to vector<1x8x128xf32>
    tpu.vector_store %arg11[%c0_20, %c0_21, %c0_22], %43 {strides = array<i32>} : memref<8x8x128xf32, #tpu.memory_space<vmem>>, vector<1x8x128xf32>,
    %c1 = arith.constant 1 : index
    %c0_23 = arith.constant 0 : index
    %c0_24 = arith.constant 0 : index
    %44 = vector.load %arg10[%c1, %c0_23, %c0_24] : memref<8x8x512xf32, #tpu.memory_space<vmem>>, vector<1x8x512xf32>
    %45 = vector.shape_cast %44 : vector<1x8x512xf32> to vector<8x512xf32>
    %cst_25 = arith.constant dense<0.000000e+00> : vector<8x512xf32>
    %46 = tpu.matmul %40, %9, %cst_25 {dimension_numbers = #tpu.dot_dimension_numbers<[1], [0], [0], [1], [0, 0, 1, 1], [], []>} : vector<8x128xf32>, vector<128x512xf32>, vector<8x512xf32> -> vector<8x512xf32>
    %47 = arith.addf %45, %46 : vector<8x512xf32>
    %48 = vector.extract_strided_slice %47 {offsets = [0, 0], sizes = [8, 128], strides = [1, 1]} : vector<8x512xf32> to vector<8x128xf32>
    %49 = arith.negf %48 : vector<8x128xf32>
    %50 = math.exp %49 : vector<8x128xf32>
    %cst_26 = arith.constant 1.000000e+00 : f32
    %51 = vector.broadcast %cst_26 : f32 to vector<8x128xf32>
    %52 = arith.addf %51, %50 : vector<8x128xf32>
    %53 = arith.divf %51, %52 : vector<8x128xf32>
    %54 = vector.extract_strided_slice %47 {offsets = [0, 128], sizes = [8, 128], strides = [1, 1]} : vector<8x512xf32> to vector<8x128xf32>
    %55 = arith.negf %54 : vector<8x128xf32>
    %56 = math.exp %55 : vector<8x128xf32>
    %cst_27 = arith.constant 1.000000e+00 : f32
    %57 = vector.broadcast %cst_27 : f32 to vector<8x128xf32>
    %58 = arith.addf %57, %56 : vector<8x128xf32>
    %59 = arith.divf %57, %58 : vector<8x128xf32>
    %60 = vector.extract_strided_slice %47 {offsets = [0, 256], sizes = [8, 128], strides = [1, 1]} : vector<8x512xf32> to vector<8x128xf32>
    %61 = math.tanh %60 : vector<8x128xf32>
    %62 = vector.extract_strided_slice %47 {offsets = [0, 384], sizes = [8, 128], strides = [1, 1]} : vector<8x512xf32> to vector<8x128xf32>
    %63 = arith.negf %62 : vector<8x128xf32>
    %64 = math.exp %63 : vector<8x128xf32>
    %cst_28 = arith.constant 1.000000e+00 : f32
    %65 = vector.broadcast %cst_28 : f32 to vector<8x128xf32>
    %66 = arith.addf %65, %64 : vector<8x128xf32>
    %67 = arith.divf %65, %66 : vector<8x128xf32>
    %68 = arith.mulf %59, %38 : vector<8x128xf32>
    %69 = arith.mulf %53, %61 : vector<8x128xf32>
    %70 = arith.addf %68, %69 : vector<8x128xf32>
    %71 = math.tanh %70 : vector<8x128xf32>
    %72 = arith.mulf %67, %71 : vector<8x128xf32>
    %c1_29 = arith.constant 1 : index
    %c0_30 = arith.constant 0 : index
    %c0_31 = arith.constant 0 : index
    %73 = vector.load %arg11[%c1_29, %c0_30, %c0_31] : memref<8x8x128xf32, #tpu.memory_space<vmem>>, vector<1x8x128xf32>
    %74 = vector.shape_cast %73 : vector<1x8x128xf32> to vector<8x128xf32>
    %75 = vector.shape_cast %72 : vector<8x128xf32> to vector<1x8x128xf32>
    tpu.vector_store %arg11[%c1_29, %c0_30, %c0_31], %75 {strides = array<i32>} : memref<8x8x128xf32, #tpu.memory_space<vmem>>, vector<1x8x128xf32>,
    %c2 = arith.constant 2 : index
    %c0_32 = arith.constant 0 : index
    %c0_33 = arith.constant 0 : index
    %76 = vector.load %arg10[%c2, %c0_32, %c0_33] : memref<8x8x512xf32, #tpu.memory_space<vmem>>, vector<1x8x512xf32>
    %77 = vector.shape_cast %76 : vector<1x8x512xf32> to vector<8x512xf32>
    %cst_34 = arith.constant dense<0.000000e+00> : vector<8x512xf32>
    %78 = tpu.matmul %72, %9, %cst_34 {dimension_numbers = #tpu.dot_dimension_numbers<[1], [0], [0], [1], [0, 0, 1, 1], [], []>} : vector<8x128xf32>, vector<128x512xf32>, vector<8x512xf32> -> vector<8x512xf32>
    %79 = arith.addf %77, %78 : vector<8x512xf32>
    %80 = vector.extract_strided_slice %79 {offsets = [0, 0], sizes = [8, 128], strides = [1, 1]} : vector<8x512xf32> to vector<8x128xf32>
    %81 = arith.negf %80 : vector<8x128xf32>
    %82 = math.exp %81 : vector<8x128xf32>
    %cst_35 = arith.constant 1.000000e+00 : f32
    %83 = vector.broadcast %cst_35 : f32 to vector<8x128xf32>
    %84 = arith.addf %83, %82 : vector<8x128xf32>
    %85 = arith.divf %83, %84 : vector<8x128xf32>
    %86 = vector.extract_strided_slice %79 {offsets = [0, 128], sizes = [8, 128], strides = [1, 1]} : vector<8x512xf32> to vector<8x128xf32>
    %87 = arith.negf %86 : vector<8x128xf32>
    %88 = math.exp %87 : vector<8x128xf32>
    %cst_36 = arith.constant 1.000000e+00 : f32
    %89 = vector.broadcast %cst_36 : f32 to vector<8x128xf32>
    %90 = arith.addf %89, %88 : vector<8x128xf32>
    %91 = arith.divf %89, %90 : vector<8x128xf32>
    %92 = vector.extract_strided_slice %79 {offsets = [0, 256], sizes = [8, 128], strides = [1, 1]} : vector<8x512xf32> to vector<8x128xf32>
    %93 = math.tanh %92 : vector<8x128xf32>
    %94 = vector.extract_strided_slice %79 {offsets = [0, 384], sizes = [8, 128], strides = [1, 1]} : vector<8x512xf32> to vector<8x128xf32>
    %95 = arith.negf %94 : vector<8x128xf32>
    %96 = math.exp %95 : vector<8x128xf32>
    %cst_37 = arith.constant 1.000000e+00 : f32
    %97 = vector.broadcast %cst_37 : f32 to vector<8x128xf32>
    %98 = arith.addf %97, %96 : vector<8x128xf32>
    %99 = arith.divf %97, %98 : vector<8x128xf32>
    %100 = arith.mulf %91, %70 : vector<8x128xf32>
    %101 = arith.mulf %85, %93 : vector<8x128xf32>
    %102 = arith.addf %100, %101 : vector<8x128xf32>
    %103 = math.tanh %102 : vector<8x128xf32>
    %104 = arith.mulf %99, %103 : vector<8x128xf32>
    %c2_38 = arith.constant 2 : index
    %c0_39 = arith.constant 0 : index
    %c0_40 = arith.constant 0 : index
    %105 = vector.load %arg11[%c2_38, %c0_39, %c0_40] : memref<8x8x128xf32, #tpu.memory_space<vmem>>, vector<1x8x128xf32>
    %106 = vector.shape_cast %105 : vector<1x8x128xf32> to vector<8x128xf32>
    %107 = vector.shape_cast %104 : vector<8x128xf32> to vector<1x8x128xf32>
    tpu.vector_store %arg11[%c2_38, %c0_39, %c0_40], %107 {strides = array<i32>} : memref<8x8x128xf32, #tpu.memory_space<vmem>>, vector<1x8x128xf32>,
    %c3 = arith.constant 3 : index
    %c0_41 = arith.constant 0 : index
    %c0_42 = arith.constant 0 : index
    %108 = vector.load %arg10[%c3, %c0_41, %c0_42] : memref<8x8x512xf32, #tpu.memory_space<vmem>>, vector<1x8x512xf32>
    %109 = vector.shape_cast %108 : vector<1x8x512xf32> to vector<8x512xf32>
    %cst_43 = arith.constant dense<0.000000e+00> : vector<8x512xf32>
    %110 = tpu.matmul %104, %9, %cst_43 {dimension_numbers = #tpu.dot_dimension_numbers<[1], [0], [0], [1], [0, 0, 1, 1], [], []>} : vector<8x128xf32>, vector<128x512xf32>, vector<8x512xf32> -> vector<8x512xf32>
    %111 = arith.addf %109, %110 : vector<8x512xf32>
    %112 = vector.extract_strided_slice %111 {offsets = [0, 0], sizes = [8, 128], strides = [1, 1]} : vector<8x512xf32> to vector<8x128xf32>
    %113 = arith.negf %112 : vector<8x128xf32>
    %114 = math.exp %113 : vector<8x128xf32>
    %cst_44 = arith.constant 1.000000e+00 : f32
    %115 = vector.broadcast %cst_44 : f32 to vector<8x128xf32>
    %116 = arith.addf %115, %114 : vector<8x128xf32>
    %117 = arith.divf %115, %116 : vector<8x128xf32>
    %118 = vector.extract_strided_slice %111 {offsets = [0, 128], sizes = [8, 128], strides = [1, 1]} : vector<8x512xf32> to vector<8x128xf32>
    %119 = arith.negf %118 : vector<8x128xf32>
    %120 = math.exp %119 : vector<8x128xf32>
    %cst_45 = arith.constant 1.000000e+00 : f32
    %121 = vector.broadcast %cst_45 : f32 to vector<8x128xf32>
    %122 = arith.addf %121, %120 : vector<8x128xf32>
    %123 = arith.divf %121, %122 : vector<8x128xf32>
    %124 = vector.extract_strided_slice %111 {offsets = [0, 256], sizes = [8, 128], strides = [1, 1]} : vector<8x512xf32> to vector<8x128xf32>
    %125 = math.tanh %124 : vector<8x128xf32>
    %126 = vector.extract_strided_slice %111 {offsets = [0, 384], sizes = [8, 128], strides = [1, 1]} : vector<8x512xf32> to vector<8x128xf32>
    %127 = arith.negf %126 : vector<8x128xf32>
    %128 = math.exp %127 : vector<8x128xf32>
    %cst_46 = arith.constant 1.000000e+00 : f32
    %129 = vector.broadcast %cst_46 : f32 to vector<8x128xf32>
    %130 = arith.addf %129, %128 : vector<8x128xf32>
    %131 = arith.divf %129, %130 : vector<8x128xf32>
    %132 = arith.mulf %123, %102 : vector<8x128xf32>
    %133 = arith.mulf %117, %125 : vector<8x128xf32>
    %134 = arith.addf %132, %133 : vector<8x128xf32>
    %135 = math.tanh %134 : vector<8x128xf32>
    %136 = arith.mulf %131, %135 : vector<8x128xf32>
    %c3_47 = arith.constant 3 : index
    %c0_48 = arith.constant 0 : index
    %c0_49 = arith.constant 0 : index
    %137 = vector.load %arg11[%c3_47, %c0_48, %c0_49] : memref<8x8x128xf32, #tpu.memory_space<vmem>>, vector<1x8x128xf32>
    %138 = vector.shape_cast %137 : vector<1x8x128xf32> to vector<8x128xf32>
    %139 = vector.shape_cast %136 : vector<8x128xf32> to vector<1x8x128xf32>
    tpu.vector_store %arg11[%c3_47, %c0_48, %c0_49], %139 {strides = array<i32>} : memref<8x8x128xf32, #tpu.memory_space<vmem>>, vector<1x8x128xf32>,
    %c4 = arith.constant 4 : index
    %c0_50 = arith.constant 0 : index
    %c0_51 = arith.constant 0 : index
    %140 = vector.load %arg10[%c4, %c0_50, %c0_51] : memref<8x8x512xf32, #tpu.memory_space<vmem>>, vector<1x8x512xf32>
    %141 = vector.shape_cast %140 : vector<1x8x512xf32> to vector<8x512xf32>
    %cst_52 = arith.constant dense<0.000000e+00> : vector<8x512xf32>
    %142 = tpu.matmul %136, %9, %cst_52 {dimension_numbers = #tpu.dot_dimension_numbers<[1], [0], [0], [1], [0, 0, 1, 1], [], []>} : vector<8x128xf32>, vector<128x512xf32>, vector<8x512xf32> -> vector<8x512xf32>
    %143 = arith.addf %141, %142 : vector<8x512xf32>
    %144 = vector.extract_strided_slice %143 {offsets = [0, 0], sizes = [8, 128], strides = [1, 1]} : vector<8x512xf32> to vector<8x128xf32>
    %145 = arith.negf %144 : vector<8x128xf32>
    %146 = math.exp %145 : vector<8x128xf32>
    %cst_53 = arith.constant 1.000000e+00 : f32
    %147 = vector.broadcast %cst_53 : f32 to vector<8x128xf32>
    %148 = arith.addf %147, %146 : vector<8x128xf32>
    %149 = arith.divf %147, %148 : vector<8x128xf32>
    %150 = vector.extract_strided_slice %143 {offsets = [0, 128], sizes = [8, 128], strides = [1, 1]} : vector<8x512xf32> to vector<8x128xf32>
    %151 = arith.negf %150 : vector<8x128xf32>
    %152 = math.exp %151 : vector<8x128xf32>
    %cst_54 = arith.constant 1.000000e+00 : f32
    %153 = vector.broadcast %cst_54 : f32 to vector<8x128xf32>
    %154 = arith.addf %153, %152 : vector<8x128xf32>
    %155 = arith.divf %153, %154 : vector<8x128xf32>
    %156 = vector.extract_strided_slice %143 {offsets = [0, 256], sizes = [8, 128], strides = [1, 1]} : vector<8x512xf32> to vector<8x128xf32>
    %157 = math.tanh %156 : vector<8x128xf32>
    %158 = vector.extract_strided_slice %143 {offsets = [0, 384], sizes = [8, 128], strides = [1, 1]} : vector<8x512xf32> to vector<8x128xf32>
    %159 = arith.negf %158 : vector<8x128xf32>
    %160 = math.exp %159 : vector<8x128xf32>
    %cst_55 = arith.constant 1.000000e+00 : f32
    %161 = vector.broadcast %cst_55 : f32 to vector<8x128xf32>
    %162 = arith.addf %161, %160 : vector<8x128xf32>
    %163 = arith.divf %161, %162 : vector<8x128xf32>
    %164 = arith.mulf %155, %134 : vector<8x128xf32>
    %165 = arith.mulf %149, %157 : vector<8x128xf32>
    %166 = arith.addf %164, %165 : vector<8x128xf32>
    %167 = math.tanh %166 : vector<8x128xf32>
    %168 = arith.mulf %163, %167 : vector<8x128xf32>
    %c4_56 = arith.constant 4 : index
    %c0_57 = arith.constant 0 : index
    %c0_58 = arith.constant 0 : index
    %169 = vector.load %arg11[%c4_56, %c0_57, %c0_58] : memref<8x8x128xf32, #tpu.memory_space<vmem>>, vector<1x8x128xf32>
    %170 = vector.shape_cast %169 : vector<1x8x128xf32> to vector<8x128xf32>
    %171 = vector.shape_cast %168 : vector<8x128xf32> to vector<1x8x128xf32>
    tpu.vector_store %arg11[%c4_56, %c0_57, %c0_58], %171 {strides = array<i32>} : memref<8x8x128xf32, #tpu.memory_space<vmem>>, vector<1x8x128xf32>,
    %c5 = arith.constant 5 : index
    %c0_59 = arith.constant 0 : index
    %c0_60 = arith.constant 0 : index
    %172 = vector.load %arg10[%c5, %c0_59, %c0_60] : memref<8x8x512xf32, #tpu.memory_space<vmem>>, vector<1x8x512xf32>
    %173 = vector.shape_cast %172 : vector<1x8x512xf32> to vector<8x512xf32>
    %cst_61 = arith.constant dense<0.000000e+00> : vector<8x512xf32>
    %174 = tpu.matmul %168, %9, %cst_61 {dimension_numbers = #tpu.dot_dimension_numbers<[1], [0], [0], [1], [0, 0, 1, 1], [], []>} : vector<8x128xf32>, vector<128x512xf32>, vector<8x512xf32> -> vector<8x512xf32>
    %175 = arith.addf %173, %174 : vector<8x512xf32>
    %176 = vector.extract_strided_slice %175 {offsets = [0, 0], sizes = [8, 128], strides = [1, 1]} : vector<8x512xf32> to vector<8x128xf32>
    %177 = arith.negf %176 : vector<8x128xf32>
    %178 = math.exp %177 : vector<8x128xf32>
    %cst_62 = arith.constant 1.000000e+00 : f32
    %179 = vector.broadcast %cst_62 : f32 to vector<8x128xf32>
    %180 = arith.addf %179, %178 : vector<8x128xf32>
    %181 = arith.divf %179, %180 : vector<8x128xf32>
    %182 = vector.extract_strided_slice %175 {offsets = [0, 128], sizes = [8, 128], strides = [1, 1]} : vector<8x512xf32> to vector<8x128xf32>
    %183 = arith.negf %182 : vector<8x128xf32>
    %184 = math.exp %183 : vector<8x128xf32>
    %cst_63 = arith.constant 1.000000e+00 : f32
    %185 = vector.broadcast %cst_63 : f32 to vector<8x128xf32>
    %186 = arith.addf %185, %184 : vector<8x128xf32>
    %187 = arith.divf %185, %186 : vector<8x128xf32>
    %188 = vector.extract_strided_slice %175 {offsets = [0, 256], sizes = [8, 128], strides = [1, 1]} : vector<8x512xf32> to vector<8x128xf32>
    %189 = math.tanh %188 : vector<8x128xf32>
    %190 = vector.extract_strided_slice %175 {offsets = [0, 384], sizes = [8, 128], strides = [1, 1]} : vector<8x512xf32> to vector<8x128xf32>
    %191 = arith.negf %190 : vector<8x128xf32>
    %192 = math.exp %191 : vector<8x128xf32>
    %cst_64 = arith.constant 1.000000e+00 : f32
    %193 = vector.broadcast %cst_64 : f32 to vector<8x128xf32>
    %194 = arith.addf %193, %192 : vector<8x128xf32>
    %195 = arith.divf %193, %194 : vector<8x128xf32>
    %196 = arith.mulf %187, %166 : vector<8x128xf32>
    %197 = arith.mulf %181, %189 : vector<8x128xf32>
    %198 = arith.addf %196, %197 : vector<8x128xf32>
    %199 = math.tanh %198 : vector<8x128xf32>
    %200 = arith.mulf %195, %199 : vector<8x128xf32>
    %c5_65 = arith.constant 5 : index
    %c0_66 = arith.constant 0 : index
    %c0_67 = arith.constant 0 : index
    %201 = vector.load %arg11[%c5_65, %c0_66, %c0_67] : memref<8x8x128xf32, #tpu.memory_space<vmem>>, vector<1x8x128xf32>
    %202 = vector.shape_cast %201 : vector<1x8x128xf32> to vector<8x128xf32>
    %203 = vector.shape_cast %200 : vector<8x128xf32> to vector<1x8x128xf32>
    tpu.vector_store %arg11[%c5_65, %c0_66, %c0_67], %203 {strides = array<i32>} : memref<8x8x128xf32, #tpu.memory_space<vmem>>, vector<1x8x128xf32>,
    %c6 = arith.constant 6 : index
    %c0_68 = arith.constant 0 : index
    %c0_69 = arith.constant 0 : index
    %204 = vector.load %arg10[%c6, %c0_68, %c0_69] : memref<8x8x512xf32, #tpu.memory_space<vmem>>, vector<1x8x512xf32>
    %205 = vector.shape_cast %204 : vector<1x8x512xf32> to vector<8x512xf32>
    %cst_70 = arith.constant dense<0.000000e+00> : vector<8x512xf32>
    %206 = tpu.matmul %200, %9, %cst_70 {dimension_numbers = #tpu.dot_dimension_numbers<[1], [0], [0], [1], [0, 0, 1, 1], [], []>} : vector<8x128xf32>, vector<128x512xf32>, vector<8x512xf32> -> vector<8x512xf32>
    %207 = arith.addf %205, %206 : vector<8x512xf32>
    %208 = vector.extract_strided_slice %207 {offsets = [0, 0], sizes = [8, 128], strides = [1, 1]} : vector<8x512xf32> to vector<8x128xf32>
    %209 = arith.negf %208 : vector<8x128xf32>
    %210 = math.exp %209 : vector<8x128xf32>
    %cst_71 = arith.constant 1.000000e+00 : f32
    %211 = vector.broadcast %cst_71 : f32 to vector<8x128xf32>
    %212 = arith.addf %211, %210 : vector<8x128xf32>
    %213 = arith.divf %211, %212 : vector<8x128xf32>
    %214 = vector.extract_strided_slice %207 {offsets = [0, 128], sizes = [8, 128], strides = [1, 1]} : vector<8x512xf32> to vector<8x128xf32>
    %215 = arith.negf %214 : vector<8x128xf32>
    %216 = math.exp %215 : vector<8x128xf32>
    %cst_72 = arith.constant 1.000000e+00 : f32
    %217 = vector.broadcast %cst_72 : f32 to vector<8x128xf32>
    %218 = arith.addf %217, %216 : vector<8x128xf32>
    %219 = arith.divf %217, %218 : vector<8x128xf32>
    %220 = vector.extract_strided_slice %207 {offsets = [0, 256], sizes = [8, 128], strides = [1, 1]} : vector<8x512xf32> to vector<8x128xf32>
    %221 = math.tanh %220 : vector<8x128xf32>
    %222 = vector.extract_strided_slice %207 {offsets = [0, 384], sizes = [8, 128], strides = [1, 1]} : vector<8x512xf32> to vector<8x128xf32>
    %223 = arith.negf %222 : vector<8x128xf32>
    %224 = math.exp %223 : vector<8x128xf32>
    %cst_73 = arith.constant 1.000000e+00 : f32
    %225 = vector.broadcast %cst_73 : f32 to vector<8x128xf32>
    %226 = arith.addf %225, %224 : vector<8x128xf32>
    %227 = arith.divf %225, %226 : vector<8x128xf32>
    %228 = arith.mulf %219, %198 : vector<8x128xf32>
    %229 = arith.mulf %213, %221 : vector<8x128xf32>
    %230 = arith.addf %228, %229 : vector<8x128xf32>
    %231 = math.tanh %230 : vector<8x128xf32>
    %232 = arith.mulf %227, %231 : vector<8x128xf32>
    %c6_74 = arith.constant 6 : index
    %c0_75 = arith.constant 0 : index
    %c0_76 = arith.constant 0 : index
    %233 = vector.load %arg11[%c6_74, %c0_75, %c0_76] : memref<8x8x128xf32, #tpu.memory_space<vmem>>, vector<1x8x128xf32>
    %234 = vector.shape_cast %233 : vector<1x8x128xf32> to vector<8x128xf32>
    %235 = vector.shape_cast %232 : vector<8x128xf32> to vector<1x8x128xf32>
    tpu.vector_store %arg11[%c6_74, %c0_75, %c0_76], %235 {strides = array<i32>} : memref<8x8x128xf32, #tpu.memory_space<vmem>>, vector<1x8x128xf32>,
    %c7 = arith.constant 7 : index
    %c0_77 = arith.constant 0 : index
    %c0_78 = arith.constant 0 : index
    %236 = vector.load %arg10[%c7, %c0_77, %c0_78] : memref<8x8x512xf32, #tpu.memory_space<vmem>>, vector<1x8x512xf32>
    %237 = vector.shape_cast %236 : vector<1x8x512xf32> to vector<8x512xf32>
    %cst_79 = arith.constant dense<0.000000e+00> : vector<8x512xf32>
    %238 = tpu.matmul %232, %9, %cst_79 {dimension_numbers = #tpu.dot_dimension_numbers<[1], [0], [0], [1], [0, 0, 1, 1], [], []>} : vector<8x128xf32>, vector<128x512xf32>, vector<8x512xf32> -> vector<8x512xf32>
    %239 = arith.addf %237, %238 : vector<8x512xf32>
    %240 = vector.extract_strided_slice %239 {offsets = [0, 0], sizes = [8, 128], strides = [1, 1]} : vector<8x512xf32> to vector<8x128xf32>
    %241 = arith.negf %240 : vector<8x128xf32>
    %242 = math.exp %241 : vector<8x128xf32>
    %cst_80 = arith.constant 1.000000e+00 : f32
    %243 = vector.broadcast %cst_80 : f32 to vector<8x128xf32>
    %244 = arith.addf %243, %242 : vector<8x128xf32>
    %245 = arith.divf %243, %244 : vector<8x128xf32>
    %246 = vector.extract_strided_slice %239 {offsets = [0, 128], sizes = [8, 128], strides = [1, 1]} : vector<8x512xf32> to vector<8x128xf32>
    %247 = arith.negf %246 : vector<8x128xf32>
    %248 = math.exp %247 : vector<8x128xf32>
    %cst_81 = arith.constant 1.000000e+00 : f32
    %249 = vector.broadcast %cst_81 : f32 to vector<8x128xf32>
    %250 = arith.addf %249, %248 : vector<8x128xf32>
    %251 = arith.divf %249, %250 : vector<8x128xf32>
    %252 = vector.extract_strided_slice %239 {offsets = [0, 256], sizes = [8, 128], strides = [1, 1]} : vector<8x512xf32> to vector<8x128xf32>
    %253 = math.tanh %252 : vector<8x128xf32>
    %254 = vector.extract_strided_slice %239 {offsets = [0, 384], sizes = [8, 128], strides = [1, 1]} : vector<8x512xf32> to vector<8x128xf32>
    %255 = arith.negf %254 : vector<8x128xf32>
    %256 = math.exp %255 : vector<8x128xf32>
    %cst_82 = arith.constant 1.000000e+00 : f32
    %257 = vector.broadcast %cst_82 : f32 to vector<8x128xf32>
    %258 = arith.addf %257, %256 : vector<8x128xf32>
    %259 = arith.divf %257, %258 : vector<8x128xf32>
    %260 = arith.mulf %251, %230 : vector<8x128xf32>
    %261 = arith.mulf %245, %253 : vector<8x128xf32>
    %262 = arith.addf %260, %261 : vector<8x128xf32>
    %263 = math.tanh %262 : vector<8x128xf32>
    %264 = arith.mulf %259, %263 : vector<8x128xf32>
    %c7_83 = arith.constant 7 : index
    %c0_84 = arith.constant 0 : index
    %c0_85 = arith.constant 0 : index
    %265 = vector.load %arg11[%c7_83, %c0_84, %c0_85] : memref<8x8x128xf32, #tpu.memory_space<vmem>>, vector<1x8x128xf32>
    %266 = vector.shape_cast %265 : vector<1x8x128xf32> to vector<8x128xf32>
    %267 = vector.shape_cast %264 : vector<8x128xf32> to vector<1x8x128xf32>
    tpu.vector_store %arg11[%c7_83, %c0_84, %c0_85], %267 {strides = array<i32>} : memref<8x8x128xf32, #tpu.memory_space<vmem>>, vector<1x8x128xf32>,
    %c0_86 = arith.constant 0 : index
    %c0_87 = arith.constant 0 : index
    %c0_88 = arith.constant 0 : index
    %268 = vector.load %arg11[%c0_86, %c0_87, %c0_88] : memref<8x8x128xf32, #tpu.memory_space<vmem>>, vector<8x8x128xf32>
    %c0_89 = arith.constant 0 : index
    %c0_90 = arith.constant 0 : index
    %269 = vector.load %arg4[%c0_89, %c0_90] : memref<32x128xf32, #tpu.memory_space<vmem>>, vector<32x128xf32>
    %cst_91 = arith.constant dense<0.000000e+00> : vector<64x128xf32>
    %270 = tpu.matmul %1, %269, %cst_91 {dimension_numbers = #tpu.dot_dimension_numbers<[1], [0], [0], [1], [0, 0, 1, 1], [], []>} : vector<64x32xf32>, vector<32x128xf32>, vector<64x128xf32> -> vector<64x128xf32>
    %c0_92 = arith.constant 0 : index
    %c0_93 = arith.constant 0 : index
    %271 = vector.load %arg5[%c0_92, %c0_93] : memref<1x128xf32, #tpu.memory_space<vmem>>, vector<1x128xf32>
    %272 = vector.broadcast %271 : vector<1x128xf32> to vector<64x128xf32>
    %273 = arith.addf %270, %272 : vector<64x128xf32>
    %274 = vector.shape_cast %273 : vector<64x128xf32> to vector<8x8x128xf32>
    %275 = arith.mulf %274, %274 : vector<8x8x128xf32>
    %cst_94 = arith.constant dense<0.000000e+00> : vector<8x128xf32>
    %276 = vector.multi_reduction <add>, %275, %cst_94 [0] : vector<8x8x128xf32> to vector<8x128xf32>
    %277 = math.sqrt %276 : vector<8x128xf32>
    %cst_95 = arith.constant 9.99999996E-13 : f32
    %278 = vector.broadcast %cst_95 : f32 to vector<8x128xf32>
    %279 = arith.maximumf %277, %278 : vector<8x128xf32>
    %280 = vector.extract_strided_slice %274 {offsets = [1, 0, 0], sizes = [7, 8, 128], strides = [1, 1, 1]} : vector<8x8x128xf32> to vector<7x8x128xf32>
    %281 = vector.extract_strided_slice %268 {offsets = [0, 0, 0], sizes = [7, 8, 128], strides = [1, 1, 1]} : vector<8x8x128xf32> to vector<7x8x128xf32>
    %282 = arith.mulf %280, %281 : vector<7x8x128xf32>
    %cst_96 = arith.constant dense<0.000000e+00> : vector<8x128xf32>
    %283 = vector.multi_reduction <add>, %282, %cst_96 [0] : vector<7x8x128xf32> to vector<8x128xf32>
    %284 = vector.extract_strided_slice %268 {offsets = [0, 0, 0], sizes = [7, 8, 128], strides = [1, 1, 1]} : vector<8x8x128xf32> to vector<7x8x128xf32>
    %285 = vector.extract_strided_slice %268 {offsets = [0, 0, 0], sizes = [7, 8, 128], strides = [1, 1, 1]} : vector<8x8x128xf32> to vector<7x8x128xf32>
    %286 = arith.mulf %284, %285 : vector<7x8x128xf32>
    %cst_97 = arith.constant dense<0.000000e+00> : vector<8x128xf32>
    %287 = vector.multi_reduction <add>, %286, %cst_97 [0] : vector<7x8x128xf32> to vector<8x128xf32>
    %288 = math.sqrt %287 : vector<8x128xf32>
    %cst_98 = arith.constant 9.99999996E-13 : f32
    %289 = vector.broadcast %cst_98 : f32 to vector<8x128xf32>
    %290 = arith.maximumf %288, %289 : vector<8x128xf32>
    %291 = arith.mulf %279, %290 : vector<8x128xf32>
    %292 = arith.divf %283, %291 : vector<8x128xf32>
    %293 = vector.shape_cast %292 : vector<8x128xf32> to vector<1x8x128xf32>
    %294 = arith.mulf %274, %268 : vector<8x8x128xf32>
    %cst_99 = arith.constant dense<0.000000e+00> : vector<8x128xf32>
    %295 = vector.multi_reduction <add>, %294, %cst_99 [0] : vector<8x8x128xf32> to vector<8x128xf32>
    %296 = arith.mulf %268, %268 : vector<8x8x128xf32>
    %cst_100 = arith.constant dense<0.000000e+00> : vector<8x128xf32>
    %297 = vector.multi_reduction <add>, %296, %cst_100 [0] : vector<8x8x128xf32> to vector<8x128xf32>
    %298 = math.sqrt %297 : vector<8x128xf32>
    %cst_101 = arith.constant 9.99999996E-13 : f32
    %299 = vector.broadcast %cst_101 : f32 to vector<8x128xf32>
    %300 = arith.maximumf %298, %299 : vector<8x128xf32>
    %301 = arith.mulf %279, %300 : vector<8x128xf32>
    %302 = arith.divf %295, %301 : vector<8x128xf32>
    %303 = vector.shape_cast %302 : vector<8x128xf32> to vector<1x8x128xf32>
    %304 = vector.broadcast %293 : vector<1x8x128xf32> to vector<8x8x128xf32>
    %305 = arith.mulf %274, %304 : vector<8x8x128xf32>
    %306 = arith.addf %305, %268 : vector<8x8x128xf32>
    %307 = vector.broadcast %303 : vector<1x8x128xf32> to vector<8x8x128xf32>
    %308 = arith.mulf %306, %307 : vector<8x8x128xf32>
    %309 = vector.shape_cast %308 : vector<8x8x128xf32> to vector<64x128xf32>
    %c0_102 = arith.constant 0 : index
    %c0_103 = arith.constant 0 : index
    %310 = vector.load %arg6[%c0_102, %c0_103] : memref<128x128xf32, #tpu.memory_space<vmem>>, vector<128x128xf32>
    %cst_104 = arith.constant dense<0.000000e+00> : vector<64x128xf32>
    %311 = tpu.matmul %309, %310, %cst_104 {dimension_numbers = #tpu.dot_dimension_numbers<[1], [0], [0], [1], [0, 0, 1, 1], [], []>} : vector<64x128xf32>, vector<128x128xf32>, vector<64x128xf32> -> vector<64x128xf32>
    %312 = vector.shape_cast %268 : vector<8x8x128xf32> to vector<64x128xf32>
    %c0_105 = arith.constant 0 : index
    %c0_106 = arith.constant 0 : index
    %313 = vector.load %arg7[%c0_105, %c0_106] : memref<128x128xf32, #tpu.memory_space<vmem>>, vector<128x128xf32>
    %cst_107 = arith.constant dense<0.000000e+00> : vector<64x128xf32>
    %314 = tpu.matmul %312, %313, %cst_107 {dimension_numbers = #tpu.dot_dimension_numbers<[1], [0], [0], [1], [0, 0, 1, 1], [], []>} : vector<64x128xf32>, vector<128x128xf32>, vector<64x128xf32> -> vector<64x128xf32>
    %315 = arith.addf %311, %314 : vector<64x128xf32>
    %c0_108 = arith.constant 0 : index
    %c0_109 = arith.constant 0 : index
    %316 = vector.load %arg8[%c0_108, %c0_109] : memref<1x128xf32, #tpu.memory_space<vmem>>, vector<1x128xf32>
    %317 = vector.broadcast %316 : vector<1x128xf32> to vector<64x128xf32>
    %318 = arith.addf %315, %317 : vector<64x128xf32>
    %319 = vector.shape_cast %318 : vector<64x128xf32> to vector<8x8x128xf32>
    %320 = vector.broadcast %303 : vector<1x8x128xf32> to vector<8x8x128xf32>
    %321 = arith.mulf %319, %320 : vector<8x8x128xf32>
    %c0_110 = arith.constant 0 : index
    %c0_111 = arith.constant 0 : index
    %c0_112 = arith.constant 0 : index
    %322 = vector.load %arg9[%c0_110, %c0_111, %c0_112] : memref<8x8x128xf32, #tpu.memory_space<vmem>>, vector<8x8x128xf32>
    tpu.vector_store %arg9[%c0_110, %c0_111, %c0_112], %321 {strides = array<i32>} : memref<8x8x128xf32, #tpu.memory_space<vmem>>, vector<8x8x128xf32>,
    return
  }
}

</mosaic_0001>

<llo_original>
// kernel: tpu_custom_call.1
$region0: #{tpu_custom_call.1}
  #allocation0 [shape = 'u32[]', space=smem, size = 0x4, offset = 0x4, fixed_abs, tag = 'smem constant byte address 0x4 - core index']
  #allocation1 [shape = 'u32[144,128]{1,0:T(1,128)}', space=vmem, size = 0x12000, scoped, tag = 'internal scratch']
  #allocation2 [shape = 'f32[8,8,512]{2,1,0:T(8,128)}', space=vmem, size = 0x20000, scoped, tag = 'scratch operand']
  #allocation3 [shape = 'f32[8,8,128]{2,1,0:T(8,128)}', space=vmem, size = 0x8000, scoped, tag = 'scratch operand']
  %s0 = inlined_call_operand.hbm [shape: f32[8,8,32], index: 0, kind: input, shape index: {}]
  %s1 = inlined_call_operand.hbm [shape: f32[32,512], index: 1, kind: input, shape index: {}]
  %s2 = inlined_call_operand.hbm [shape: f32[128,512], index: 2, kind: input, shape index: {}]
  %s3 = inlined_call_operand.vmem [shape: f32[1,512], index: 3, kind: input, shape index: {}]
  %s4 = inlined_call_operand.hbm [shape: f32[32,128], index: 4, kind: input, shape index: {}]
  %s5 = inlined_call_operand.vmem [shape: f32[1,128], index: 5, kind: input, shape index: {}]
  %s6 = inlined_call_operand.hbm [shape: f32[128,128], index: 6, kind: input, shape index: {}]
  %s7 = inlined_call_operand.hbm [shape: f32[128,128], index: 7, kind: input, shape index: {}]
  %s8 = inlined_call_operand.vmem [shape: f32[1,128], index: 8, kind: input, shape index: {}]
  %s9 = inlined_call_operand.hbm [shape: f32[8,8,128], index: 9, kind: output, shape index: {}]
  %s10 = sld [smem:[#allocation0]]
  $region70: #{tpu_custom_call.1} parent=0
    _
  %s12 = ssub.s32 1, %s10
  %s13 = scalar_select 0, %s12, %s10
  $region1: #{tpu_custom_call.1} parent=0
    #allocation4 [shape = 'u8[32768]{0}', space=vmem, size = 0x8000, scoped, tag = 'input window, operand 0, single buffered']
    #allocation5 [shape = 's32[1]{0}', space=sflag, size = 0x4, scoped, tag = 'scoped memory for tpu_custom_call.1']
    #allocation6 [shape = 's32[1]{0}', space=sflag, size = 0x4, scoped, tag = 'scoped memory for tpu_custom_call.1']
    #allocation7 [shape = 'u8[65536]{0}', space=vmem, size = 0x10000, scoped, tag = 'input window, operand 1, single buffered']
    #allocation8 [shape = 's32[1]{0}', space=sflag, size = 0x4, scoped, tag = 'scoped memory for tpu_custom_call.1']
    #allocation9 [shape = 'u8[262144]{0}', space=vmem, size = 0x40000, scoped, tag = 'input window, operand 2, single buffered']
    #allocation10 [shape = 'u8[16384]{0}', space=vmem, size = 0x4000, scoped, tag = 'input window, operand 4, single buffered']
    #allocation11 [shape = 's32[1]{0}', space=sflag, size = 0x4, scoped, tag = 'scoped memory for tpu_custom_call.1']
    #allocation12 [shape = 'u8[65536]{0}', space=vmem, size = 0x10000, scoped, tag = 'input window, operand 6, single buffered']
    #allocation13 [shape = 'u8[65536]{0}', space=vmem, size = 0x10000, scoped, tag = 'input window, operand 7, single buffered']
    #allocation14 [shape = 's32[1]{0}', space=sflag, size = 0x4, scoped, tag = 'scoped memory for tpu_custom_call.1']
    #allocation15 [shape = 'u8[32768]{0}', space=vmem, size = 0x8000, scoped, tag = 'output window, operand 0, single buffered']
    %14 = vsyncpa [#allocation5], 0
    %15 = vsyncpa [#allocation8], 0
    %16 = vsyncpa [#allocation11], 0
    %17 = vsyncpa [#allocation14], 0
    %18 = vsyncpa [#allocation6], 0
    // Predicated region
    $region2: #{tpu_custom_call.1} parent=1 // pred_check
      _
    $region3: #{tpu_custom_call.1} parent=1 // pred_check_branch
      %20 = sbr.rel (0) target = $region5
    $region4: #{tpu_custom_call.1} parent=1 // pred_region
      %s22 = ssub.s32 1024, 1024
      %23 = vsyncadd [#allocation5], %s22
      %s24 = sshll.u32 [#allocation4], 4
      %s25 = int_to_ptr.vmem [resolvable:$true] %s24
      %30 = dma.hbm_to_vmem [thread:$0]  %s0, 1024, %s25, [#allocation5], 128, 128, 8
    $region5: #{tpu_custom_call.1} parent=1 // pred_fallthru
      _
    // Predicated region
    $region6: #{tpu_custom_call.1} parent=1 // pred_check
      _
    $region7: #{tpu_custom_call.1} parent=1 // pred_check_branch
      %32 = sbr.rel (0) target = $region9
    $region8: #{tpu_custom_call.1} parent=1 // pred_region
      %s34 = ssub.s32 2048, 2048
      %35 = vsyncadd [#allocation8], %s34
      %s36 = sshll.u32 [#allocation7], 4
      %s37 = int_to_ptr.vmem [resolvable:$true] %s36
      %42 = dma.hbm_to_vmem [thread:$0]  %s1, 2048, %s37, [#allocation8], 512, 512, 32
    $region9: #{tpu_custom_call.1} parent=1 // pred_fallthru
      _
    // Predicated region
    $region10: #{tpu_custom_call.1} parent=1 // pred_check
      _
    $region11: #{tpu_custom_call.1} parent=1 // pred_check_branch
      %44 = sbr.rel (0) target = $region13
    $region12: #{tpu_custom_call.1} parent=1 // pred_region
      %s46 = ssub.s32 8192, 8192
      %47 = vsyncadd [#allocation8], %s46
      %s48 = sshll.u32 [#allocation9], 4
      %s49 = int_to_ptr.vmem [resolvable:$true] %s48
      %54 = dma.hbm_to_vmem [thread:$0]  %s2, 8192, %s49, [#allocation8], 512, 512, 32
    $region13: #{tpu_custom_call.1} parent=1 // pred_fallthru
      _
    // Predicated region
    $region14: #{tpu_custom_call.1} parent=1 // pred_check
      _
    $region15: #{tpu_custom_call.1} parent=1 // pred_check_branch
      %56 = sbr.rel (0) target = $region17
    $region16: #{tpu_custom_call.1} parent=1 // pred_region
      _
    $region17: #{tpu_custom_call.1} parent=1 // pred_fallthru
      _
    // Predicated region
    $region18: #{tpu_custom_call.1} parent=1 // pred_check
      _
    $region19: #{tpu_custom_call.1} parent=1 // pred_check_branch
      %58 = sbr.rel (0) target = $region21
    $region20: #{tpu_custom_call.1} parent=1 // pred_region
      %s60 = ssub.s32 512, 512
      %61 = vsyncadd [#allocation11], %s60
      %s62 = sshll.u32 [#allocation10], 4
      %s63 = int_to_ptr.vmem [resolvable:$true] %s62
      %68 = dma.hbm_to_vmem [thread:$0]  %s4, 512, %s63, [#allocation11], 128, 128, 8
    $region21: #{tpu_custom_call.1} parent=1 // pred_fallthru
      _
    // Predicated region
    $region22: #{tpu_custom_call.1} parent=1 // pred_check
      _
    $region23: #{tpu_custom_call.1} parent=1 // pred_check_branch
      %70 = sbr.rel (0) target = $region25
    $region24: #{tpu_custom_call.1} parent=1 // pred_region
      _
    $region25: #{tpu_custom_call.1} parent=1 // pred_fallthru
      _
    // Predicated region
    $region26: #{tpu_custom_call.1} parent=1 // pred_check
      _
    $region27: #{tpu_custom_call.1} parent=1 // pred_check_branch
      %72 = sbr.rel (0) target = $region29
    $region28: #{tpu_custom_call.1} parent=1 // pred_region
      %s74 = ssub.s32 2048, 2048
      %75 = vsyncadd [#allocation11], %s74
      %s76 = sshll.u32 [#allocation12], 4
      %s77 = int_to_ptr.vmem [resolvable:$true] %s76
      %82 = dma.hbm_to_vmem [thread:$0]  %s6, 2048, %s77, [#allocation11], 128, 128, 8
    $region29: #{tpu_custom_call.1} parent=1 // pred_fallthru
      _
    // Predicated region
    $region30: #{tpu_custom_call.1} parent=1 // pred_check
      _
    $region31: #{tpu_custom_call.1} parent=1 // pred_check_branch
      %84 = sbr.rel (0) target = $region33
    $region32: #{tpu_custom_call.1} parent=1 // pred_region
      %s86 = ssub.s32 2048, 2048
      %87 = vsyncadd [#allocation14], %s86
      %s88 = sshll.u32 [#allocation13], 4
      %s89 = int_to_ptr.vmem [resolvable:$true] %s88
      %94 = dma.hbm_to_vmem [thread:$0]  %s7, 2048, %s89, [#allocation14], 128, 128, 8
    $region33: #{tpu_custom_call.1} parent=1 // pred_fallthru
      _
    // Predicated region
    $region34: #{tpu_custom_call.1} parent=1 // pred_check
      _
    $region35: #{tpu_custom_call.1} parent=1 // pred_check_branch
      %96 = sbr.rel (0) target = $region37
    $region36: #{tpu_custom_call.1} parent=1 // pred_region
      _
    $region37: #{tpu_custom_call.1} parent=1 // pred_fallthru
      _
    // Predicated region
    $region38: #{tpu_custom_call.1} parent=1 // pred_check
      _
    $region39: #{tpu_custom_call.1} parent=1 // pred_check_branch
      %98 = sbr.rel (0) target = $region41
    $region40: #{tpu_custom_call.1} parent=1 // pred_region
      %99 = dma.done [#allocation5], 1024
    $region41: #{tpu_custom_call.1} parent=1 // pred_fallthru
      _
    // Predicated region
    $region42: #{tpu_custom_call.1} parent=1 // pred_check
      _
    $region43: #{tpu_custom_call.1} parent=1 // pred_check_branch
      %101 = sbr.rel (0) target = $region45
    $region44: #{tpu_custom_call.1} parent=1 // pred_region
      %102 = dma.done [#allocation8], 2048
    $region45: #{tpu_custom_call.1} parent=1 // pred_fallthru
      _
    // Predicated region
    $region46: #{tpu_custom_call.1} parent=1 // pred_check
      _
    $region47: #{tpu_custom_call.1} parent=1 // pred_check_branch
      %104 = sbr.rel (0) target = $region49
    $region48: #{tpu_custom_call.1} parent=1 // pred_region
      %105 = dma.done [#allocation8], 8192
    $region49: #{tpu_custom_call.1} parent=1 // pred_fallthru
      _
    // Predicated region
    $region50: #{tpu_custom_call.1} parent=1 // pred_check
      _
    $region51: #{tpu_custom_call.1} parent=1 // pred_check_branch
      %107 = sbr.rel (0) target = $region53
    $region52: #{tpu_custom_call.1} parent=1 // pred_region
      %108 = dma.done [#allocation11], 512
    $region53: #{tpu_custom_call.1} parent=1 // pred_fallthru
      _
    // Predicated region
    $region54: #{tpu_custom_call.1} parent=1 // pred_check
      _
    $region55: #{tpu_custom_call.1} parent=1 // pred_check_branch
      %110 = sbr.rel (0) target = $region57
    $region56: #{tpu_custom_call.1} parent=1 // pred_region
      %111 = dma.done [#allocation11], 2048
    $region57: #{tpu_custom_call.1} parent=1 // pred_fallthru
      _
    // Predicated region
    $region58: #{tpu_custom_call.1} parent=1 // pred_check
      _
    $region59: #{tpu_custom_call.1} parent=1 // pred_check_branch
      %113 = sbr.rel (0) target = $region61
    $region60: #{tpu_custom_call.1} parent=1 // pred_region
      %114 = dma.done [#allocation14], 2048
    $region61: #{tpu_custom_call.1} parent=1 // pred_fallthru
      _
    %v115 = vld [vmem:[#allocation4] sm:$0xff]
    %v116 = vld [vmem:[#allocation4 + $0x8] sm:$0xff]
    %v117 = vld [vmem:[#allocation4 + $0x10] sm:$0xff]
    %v118 = vld [vmem:[#allocation4 + $0x18] sm:$0xff]
    %v119 = vld [vmem:[#allocation4 + $0x20] sm:$0xff]
    %v120 = vld [vmem:[#allocation4 + $0x28] sm:$0xff]
    %v121 = vld [vmem:[#allocation4 + $0x30] sm:$0xff]
    %v122 = vld [vmem:[#allocation4 + $0x38] sm:$0xff]
    %v123 = vld [vmem:[#allocation7] sm:$0xff]
    %v124 = vld [vmem:[#allocation7 + $0x8] sm:$0xff]
    %v125 = vld [vmem:[#allocation7 + $0x10] sm:$0xff]
    %v126 = vld [vmem:[#allocation7 + $0x18] sm:$0xff]
    %v127 = vld [vmem:[#allocation7 + $0x20] sm:$0xff]
    %v128 = vld [vmem:[#allocation7 + $0x28] sm:$0xff]
    %v129 = vld [vmem:[#allocation7 + $0x30] sm:$0xff]
    %v130 = vld [vmem:[#allocation7 + $0x38] sm:$0xff]
    %v131 = vld [vmem:[#allocation7 + $0x40] sm:$0xff]
    %v132 = vld [vmem:[#allocation7 + $0x48] sm:$0xff]
    %v133 = vld [vmem:[#allocation7 + $0x50] sm:$0xff]
    %v134 = vld [vmem:[#allocation7 + $0x58] sm:$0xff]
    %v135 = vld [vmem:[#allocation7 + $0x60] sm:$0xff]
    %v136 = vld [vmem:[#allocation7 + $0x68] sm:$0xff]
    %v137 = vld [vmem:[#allocation7 + $0x70] sm:$0xff]
    %v138 = vld [vmem:[#allocation7 + $0x78] sm:$0xff]
    %v139 = vld [vmem:[%s3] sm:$0xf]
    %v141 = vlaneseq
    %v142 = vshrl.u32 %v141, 7
    %v143 = vsub.s32 0, %v142
    %v144 = vrot.slane %v139, %v143
    %v145 = vlaneseq
    %v146 = vshrl.u32 %v145, 7
    %v147 = vsub.s32 1, %v146
    %v148 = vrot.slane %v139, %v147
    %v149 = vlaneseq
    %v150 = vshrl.u32 %v149, 7
    %v151 = vsub.s32 2, %v150
    %v152 = vrot.slane %v139, %v151
    %v153 = vlaneseq
    %v154 = vshrl.u32 %v153, 7
    %v155 = vsub.s32 3, %v154
    %v156 = vrot.slane %v139, %v155
    %vm161 = vcmask 261120
    %v163 = vsel %vm161, %v115, 0
    %v166 = vsel %vm161, %v116, 0
    %v169 = vsel %vm161, %v117, 0
    %v172 = vsel %vm161, %v118, 0
    %v175 = vsel %vm161, %v119, 0
    %v178 = vsel %vm161, %v120, 0
    %v181 = vsel %vm161, %v121, 0
    %v184 = vsel %vm161, %v122, 0
    %186 = vmatprep.subr.mxu0 0.0
    %187 = vmatpush1.msra.mxu0 0.0
    %188 = vmatprep.subr.mxu0 0.0
    %189 = vmatpush1.msra.mxu0 0.0
    %190 = vmatprep.subr.mxu0 0.0
    %191 = vmatpush1.msra.mxu0 0.0
    %192 = vmatprep.subr.mxu0 0.0
    %193 = vmatpush1.msra.mxu0 0.0
    %194 = vmatprep.subr.mxu0 0.0
    %195 = vmatpush1.msra.mxu0 0.0
    %196 = vmatprep.subr.mxu0 0.0
    %197 = vmatpush1.msra.mxu0 0.0
    %198 = vmatprep.subr.mxu0 0.0
    %199 = vmatpush1.msra.mxu0 0.0
    %200 = vmatprep.subr.mxu0 0.0
    %201 = vmatpush1.msra.mxu0 0.0
    %202 = vmatprep.subr.mxu0 0.0
    %203 = vmatpush1.msra.mxu0 0.0
    %204 = vmatprep.subr.mxu0 0.0
    %205 = vmatpush1.msra.mxu0 0.0
    %206 = vmatprep.subr.mxu0 0.0
    %207 = vmatpush1.msra.mxu0 0.0
    %208 = vmatprep.subr.mxu0 0.0
    %209 = vmatpush1.msra.mxu0 0.0
    %210 = vmatprep.subr.mxu0 %v136
    %211 = vmatpush1.msra.mxu0 %v135
    %212 = vmatprep.subr.mxu0 %v132
    %213 = vmatpush1.msra.mxu0 %v131
    %214 = vmatprep.subr.mxu0 %v128
    %215 = vmatpush1.msra.mxu0 %v127
    %216 = vmatprep.subr.mxu0 %v124
    %217 = vmatpush1.msra.mxu0 %v123
    %218 = vmatprep.subr.mxu0 0.0
    %219 = vmatpush2.msra.mxu0 0.0
    %220 = vmatprep.subr.mxu0 0.0
    %221 = vmatpush2.msra.mxu0 0.0
    %222 = vmatprep.subr.mxu0 0.0
    %223 = vmatpush2.msra.mxu0 0.0
    %224 = vmatprep.subr.mxu0 0.0
    %225 = vmatpush2.msra.mxu0 0.0
    %226 = vmatprep.subr.mxu0 0.0
    %227 = vmatpush2.msra.mxu0 0.0
    %228 = vmatprep.subr.mxu0 0.0
    %229 = vmatpush2.msra.mxu0 0.0
    %230 = vmatprep.subr.mxu0 0.0
    %231 = vmatpush2.msra.mxu0 0.0
    %232 = vmatprep.subr.mxu0 0.0
    %233 = vmatpush2.msra.mxu0 0.0
    %234 = vmatprep.subr.mxu0 0.0
    %235 = vmatpush2.msra.mxu0 0.0
    %236 = vmatprep.subr.mxu0 0.0
    %237 = vmatpush2.msra.mxu0 0.0
    %238 = vmatprep.subr.mxu0 0.0
    %239 = vmatpush2.msra.mxu0 0.0
    %240 = vmatprep.subr.mxu0 0.0
    %241 = vmatpush2.msra.mxu0 0.0
    %242 = vmatprep.subr.mxu0 0.0
    %243 = vmatpush2.msra.mxu0 0.0
    %244 = vmatprep.subr.mxu0 0.0
    %245 = vmatpush2.msra.mxu0 0.0
    %246 = vmatprep.subr.mxu0 0.0
    %247 = vmatpush2.msra.mxu0 0.0
    %248 = vmatprep.subr.mxu0 0.0
    %249 = vmatpush2.msra.mxu0 0.0
    %250 = vmatprep.mubr.f32.mxu0 0.0
    %251 = vmatmul.mubr.f32.gmra.mxu0 %v163
    %v252 = vpop.f32.mrf.mxu0
    %v253 = vadd.f32 %v144, %v252
    %v254 = vpop.f32.mrf.mxu0
    %v255 = vadd.f32 %v148, %v254
    %256 = vmatprep.mubr.f32.mxu0 0.0
    %257 = vmatmul.mubr.f32.gmra.mxu0 %v166
    %v258 = vpop.f32.mrf.mxu0
    %v259 = vadd.f32 %v144, %v258
    %v260 = vpop.f32.mrf.mxu0
    %v261 = vadd.f32 %v148, %v260
    %262 = vmatprep.mubr.f32.mxu0 0.0
    %263 = vmatmul.mubr.f32.gmra.mxu0 %v169
    %v264 = vpop.f32.mrf.mxu0
    %v265 = vadd.f32 %v144, %v264
    %v266 = vpop.f32.mrf.mxu0
    %v267 = vadd.f32 %v148, %v266
    %268 = vmatprep.mubr.f32.mxu0 0.0
    %269 = vmatmul.mubr.f32.gmra.mxu0 %v172
    %v270 = vpop.f32.mrf.mxu0
    %v271 = vadd.f32 %v144, %v270
    %v272 = vpop.f32.mrf.mxu0
    %v273 = vadd.f32 %v148, %v272
    %274 = vmatprep.mubr.f32.mxu0 0.0
    %275 = vmatmul.mubr.f32.gmra.mxu0 %v175
    %v276 = vpop.f32.mrf.mxu0
    %v277 = vadd.f32 %v144, %v276
    %v278 = vpop.f32.mrf.mxu0
    %v279 = vadd.f32 %v148, %v278
    %280 = vmatprep.mubr.f32.mxu0 0.0
    %281 = vmatmul.mubr.f32.gmra.mxu0 %v178
    %v282 = vpop.f32.mrf.mxu0
    %v283 = vadd.f32 %v144, %v282
    %v284 = vpop.f32.mrf.mxu0
    %v285 = vadd.f32 %v148, %v284
    %286 = vmatprep.mubr.f32.mxu0 0.0
    %287 = vmatmul.mubr.f32.gmra.mxu0 %v181
    %v288 = vpop.f32.mrf.mxu0
    %v289 = vadd.f32 %v144, %v288
    %v290 = vpop.f32.mrf.mxu0
    %v291 = vadd.f32 %v148, %v290
    %292 = vmatprep.mubr.f32.mxu0 0.0
    %293 = vmatmul.mubr.f32.gmra.mxu0 %v184
    %v294 = vpop.f32.mrf.mxu0
    %v295 = vadd.f32 %v144, %v294
    %v296 = vpop.f32.mrf.mxu0
    %v297 = vadd.f32 %v148, %v296
    %298 = vdwg.mxu0
    %299 = vmatprep.subr.mxu0 0.0
    %300 = vmatpush1.msra.mxu0 0.0
    %301 = vmatprep.subr.mxu0 0.0
    %302 = vmatpush1.msra.mxu0 0.0
    %303 = vmatprep.subr.mxu0 0.0
    %304 = vmatpush1.msra.mxu0 0.0
    %305 = vmatprep.subr.mxu0 0.0
    %306 = vmatpush1.msra.mxu0 0.0
    %307 = vmatprep.subr.mxu0 0.0
    %308 = vmatpush1.msra.mxu0 0.0
    %309 = vmatprep.subr.mxu0 0.0
    %310 = vmatpush1.msra.mxu0 0.0
    %311 = vmatprep.subr.mxu0 0.0
    %312 = vmatpush1.msra.mxu0 0.0
    %313 = vmatprep.subr.mxu0 0.0
    %314 = vmatpush1.msra.mxu0 0.0
    %315 = vmatprep.subr.mxu0 0.0
    %316 = vmatpush1.msra.mxu0 0.0
    %317 = vmatprep.subr.mxu0 0.0
    %318 = vmatpush1.msra.mxu0 0.0
    %319 = vmatprep.subr.mxu0 0.0
    %320 = vmatpush1.msra.mxu0 0.0
    %321 = vmatprep.subr.mxu0 0.0
    %322 = vmatpush1.msra.mxu0 0.0
    %323 = vmatprep.subr.mxu0 %v138
    %324 = vmatpush1.msra.mxu0 %v137
    %325 = vmatprep.subr.mxu0 %v134
    %326 = vmatpush1.msra.mxu0 %v133
    %327 = vmatprep.subr.mxu0 %v130
    %328 = vmatpush1.msra.mxu0 %v129
    %329 = vmatprep.subr.mxu0 %v126
    %330 = vmatpush1.msra.mxu0 %v125
    %331 = vmatprep.subr.mxu0 0.0
    %332 = vmatpush2.msra.mxu0 0.0
    %333 = vmatprep.subr.mxu0 0.0
    %334 = vmatpush2.msra.mxu0 0.0
    %335 = vmatprep.subr.mxu0 0.0
    %336 = vmatpush2.msra.mxu0 0.0
    %337 = vmatprep.subr.mxu0 0.0
    %338 = vmatpush2.msra.mxu0 0.0
    %339 = vmatprep.subr.mxu0 0.0
    %340 = vmatpush2.msra.mxu0 0.0
    %341 = vmatprep.subr.mxu0 0.0
    %342 = vmatpush2.msra.mxu0 0.0
    %343 = vmatprep.subr.mxu0 0.0
    %344 = vmatpush2.msra.mxu0 0.0
    %345 = vmatprep.subr.mxu0 0.0
    %346 = vmatpush2.msra.mxu0 0.0
    %347 = vmatprep.subr.mxu0 0.0
    %348 = vmatpush2.msra.mxu0 0.0
    %349 = vmatprep.subr.mxu0 0.0
    %350 = vmatpush2.msra.mxu0 0.0
    %351 = vmatprep.subr.mxu0 0.0
    %352 = vmatpush2.msra.mxu0 0.0
    %353 = vmatprep.subr.mxu0 0.0
    %354 = vmatpush2.msra.mxu0 0.0
    %355 = vmatprep.subr.mxu0 0.0
    %356 = vmatpush2.msra.mxu0 0.0
    %357 = vmatprep.subr.mxu0 0.0
    %358 = vmatpush2.msra.mxu0 0.0
    %359 = vmatprep.subr.mxu0 0.0
    %360 = vmatpush2.msra.mxu0 0.0
    %361 = vmatprep.subr.mxu0 0.0
    %362 = vmatpush2.msra.mxu0 0.0
    %363 = vmatprep.mubr.f32.mxu0 0.0
    %364 = vmatmul.mubr.f32.gmra.mxu0 %v163
    %v365 = vpop.f32.mrf.mxu0
    %v366 = vadd.f32 %v152, %v365
    %v367 = vpop.f32.mrf.mxu0
    %v368 = vadd.f32 %v156, %v367
    %369 = vmatprep.mubr.f32.mxu0 0.0
    %370 = vmatmul.mubr.f32.gmra.mxu0 %v166
    %v371 = vpop.f32.mrf.mxu0
    %v372 = vadd.f32 %v152, %v371
    %v373 = vpop.f32.mrf.mxu0
    %v374 = vadd.f32 %v156, %v373
    %375 = vmatprep.mubr.f32.mxu0 0.0
    %376 = vmatmul.mubr.f32.gmra.mxu0 %v169
    %v377 = vpop.f32.mrf.mxu0
    %v378 = vadd.f32 %v152, %v377
    %v379 = vpop.f32.mrf.mxu0
    %v380 = vadd.f32 %v156, %v379
    %381 = vmatprep.mubr.f32.mxu0 0.0
    %382 = vmatmul.mubr.f32.gmra.mxu0 %v172
    %v383 = vpop.f32.mrf.mxu0
    %v384 = vadd.f32 %v152, %v383
    %v385 = vpop.f32.mrf.mxu0
    %v386 = vadd.f32 %v156, %v385
    %387 = vmatprep.mubr.f32.mxu0 0.0
    %388 = vmatmul.mubr.f32.gmra.mxu0 %v175
    %v389 = vpop.f32.mrf.mxu0
    %v390 = vadd.f32 %v152, %v389
    %v391 = vpop.f32.mrf.mxu0
    %v392 = vadd.f32 %v156, %v391
    %393 = vmatprep.mubr.f32.mxu0 0.0
    %394 = vmatmul.mubr.f32.gmra.mxu0 %v178
    %v395 = vpop.f32.mrf.mxu0
    %v396 = vadd.f32 %v152, %v395
    %v397 = vpop.f32.mrf.mxu0
    %v398 = vadd.f32 %v156, %v397
    %399 = vmatprep.mubr.f32.mxu0 0.0
    %400 = vmatmul.mubr.f32.gmra.mxu0 %v181
    %v401 = vpop.f32.mrf.mxu0
    %v402 = vadd.f32 %v152, %v401
    %v403 = vpop.f32.mrf.mxu0
    %v404 = vadd.f32 %v156, %v403
    %405 = vmatprep.mubr.f32.mxu0 0.0
    %406 = vmatmul.mubr.f32.gmra.mxu0 %v184
    %v407 = vpop.f32.mrf.mxu0
    %v408 = vadd.f32 %v152, %v407
    %v409 = vpop.f32.mrf.mxu0
    %v410 = vadd.f32 %v156, %v409
    %411 = vdwg.mxu0
    %412 = vst [vmem:[#allocation2] sm:$0xff] %v253
    %413 = vst [vmem:[#allocation2 + $0x8] sm:$0xff] %v255
    %414 = vst [vmem:[#allocation2 + $0x10] sm:$0xff] %v366
    %415 = vst [vmem:[#allocation2 + $0x18] sm:$0xff] %v368
    %416 = vst [vmem:[#allocation2 + $0x20] sm:$0xff] %v259
    %417 = vst [vmem:[#allocation2 + $0x28] sm:$0xff] %v261
    %418 = vst [vmem:[#allocation2 + $0x30] sm:$0xff] %v372
    %419 = vst [vmem:[#allocation2 + $0x38] sm:$0xff] %v374
    %420 = vst [vmem:[#allocation2 + $0x40] sm:$0xff] %v265
    %421 = vst [vmem:[#allocation2 + $0x48] sm:$0xff] %v267
    %422 = vst [vmem:[#allocation2 + $0x50] sm:$0xff] %v378
    %423 = vst [vmem:[#allocation2 + $0x58] sm:$0xff] %v380
    %424 = vst [vmem:[#allocation2 + $0x60] sm:$0xff] %v271
    %425 = vst [vmem:[#allocation2 + $0x68] sm:$0xff] %v273
    %426 = vst [vmem:[#allocation2 + $0x70] sm:$0xff] %v384
    %427 = vst [vmem:[#allocation2 + $0x78] sm:$0xff] %v386
    %428 = vst [vmem:[#allocation2 + $0x80] sm:$0xff] %v277
    %429 = vst [vmem:[#allocation2 + $0x88] sm:$0xff] %v279
    %430 = vst [vmem:[#allocation2 + $0x90] sm:$0xff] %v390
    %431 = vst [vmem:[#allocation2 + $0x98] sm:$0xff] %v392
    %432 = vst [vmem:[#allocation2 + $0xa0] sm:$0xff] %v283
    %433 = vst [vmem:[#allocation2 + $0xa8] sm:$0xff] %v285
    %434 = vst [vmem:[#allocation2 + $0xb0] sm:$0xff] %v396
    %435 = vst [vmem:[#allocation2 + $0xb8] sm:$0xff] %v398
    %436 = vst [vmem:[#allocation2 + $0xc0] sm:$0xff] %v289
    %437 = vst [vmem:[#allocation2 + $0xc8] sm:$0xff] %v291
    %438 = vst [vmem:[#allocation2 + $0xd0] sm:$0xff] %v402
    %439 = vst [vmem:[#allocation2 + $0xd8] sm:$0xff] %v404
    %440 = vst [vmem:[#allocation2 + $0xe0] sm:$0xff] %v295
    %441 = vst [vmem:[#allocation2 + $0xe8] sm:$0xff] %v297
    %442 = vst [vmem:[#allocation2 + $0xf0] sm:$0xff] %v408
    %443 = vst [vmem:[#allocation2 + $0xf8] sm:$0xff] %v410
    %v444 = vld [vmem:[#allocation9] sm:$0xff]
    %v445 = vld [vmem:[#allocation9 + $0x8] sm:$0xff]
    %v446 = vld [vmem:[#allocation9 + $0x10] sm:$0xff]
    %v447 = vld [vmem:[#allocation9 + $0x18] sm:$0xff]
    %v448 = vld [vmem:[#allocation9 + $0x20] sm:$0xff]
    %v449 = vld [vmem:[#allocation9 + $0x28] sm:$0xff]
    %v450 = vld [vmem:[#allocation9 + $0x30] sm:$0xff]
    %v451 = vld [vmem:[#allocation9 + $0x38] sm:$0xff]
    %v452 = vld [vmem:[#allocation9 + $0x40] sm:$0xff]
    %v453 = vld [vmem:[#allocation9 + $0x48] sm:$0xff]
    %v454 = vld [vmem:[#allocation9 + $0x50] sm:$0xff]
    %v455 = vld [vmem:[#allocation9 + $0x58] sm:$0xff]
    %v456 = vld [vmem:[#allocation9 + $0x60] sm:$0xff]
    %v457 = vld [vmem:[#allocation9 + $0x68] sm:$0xff]
    %v458 = vld [vmem:[#allocation9 + $0x70] sm:$0xff]
    %v459 = vld [vmem:[#allocation9 + $0x78] sm:$0xff]
    %v460 = vld [vmem:[#allocation9 + $0x80] sm:$0xff]
    %v461 = vld [vmem:[#allocation9 + $0x88] sm:$0xff]
    %v462 = vld [vmem:[#allocation9 + $0x90] sm:$0xff]
    %v463 = vld [vmem:[#allocation9 + $0x98] sm:$0xff]
    %v464 = vld [vmem:[#allocation9 + $0xa0] sm:$0xff]
    %v465 = vld [vmem:[#allocation9 + $0xa8] sm:$0xff]
    %v466 = vld [vmem:[#allocation9 + $0xb0] sm:$0xff]
    %v467 = vld [vmem:[#allocation9 + $0xb8] sm:$0xff]
    %v468 = vld [vmem:[#allocation9 + $0xc0] sm:$0xff]
    %v469 = vld [vmem:[#allocation9 + $0xc8] sm:$0xff]
    %v470 = vld [vmem:[#allocation9 + $0xd0] sm:$0xff]
    %v471 = vld [vmem:[#allocation9 + $0xd8] sm:$0xff]
    %v472 = vld [vmem:[#allocation9 + $0xe0] sm:$0xff]
    %v473 = vld [vmem:[#allocation9 + $0xe8] sm:$0xff]
    %v474 = vld [vmem:[#allocation9 + $0xf0] sm:$0xff]
    %v475 = vld [vmem:[#allocation9 + $0xf8] sm:$0xff]
    %v476 = vld [vmem:[#allocation9 + $0x100] sm:$0xff]
    %v477 = vld [vmem:[#allocation9 + $0x108] sm:$0xff]
    %v478 = vld [vmem:[#allocation9 + $0x110] sm:$0xff]
    %v479 = vld [vmem:[#allocation9 + $0x118] sm:$0xff]
    %v480 = vld [vmem:[#allocation9 + $0x120] sm:$0xff]
    %v481 = vld [vmem:[#allocation9 + $0x128] sm:$0xff]
    %v482 = vld [vmem:[#allocation9 + $0x130] sm:$0xff]
    %v483 = vld [vmem:[#allocation9 + $0x138] sm:$0xff]
    %v484 = vld [vmem:[#allocation9 + $0x140] sm:$0xff]
    %v485 = vld [vmem:[#allocation9 + $0x148] sm:$0xff]
    %v486 = vld [vmem:[#allocation9 + $0x150] sm:$0xff]
    %v487 = vld [vmem:[#allocation9 + $0x158] sm:$0xff]
    %v488 = vld [vmem:[#allocation9 + $0x160] sm:$0xff]
    %v489 = vld [vmem:[#allocation9 + $0x168] sm:$0xff]
    %v490 = vld [vmem:[#allocation9 + $0x170] sm:$0xff]
    %v491 = vld [vmem:[#allocation9 + $0x178] sm:$0xff]
    %v492 = vld [vmem:[#allocation9 + $0x180] sm:$0xff]
    %v493 = vld [vmem:[#allocation9 + $0x188] sm:$0xff]
    %v494 = vld [vmem:[#allocation9 + $0x190] sm:$0xff]
    %v495 = vld [vmem:[#allocation9 + $0x198] sm:$0xff]
    %v496 = vld [vmem:[#allocation9 + $0x1a0] sm:$0xff]
    %v497 = vld [vmem:[#allocation9 + $0x1a8] sm:$0xff]
    %v498 = vld [vmem:[#allocation9 + $0x1b0] sm:$0xff]
    %v499 = vld [vmem:[#allocation9 + $0x1b8] sm:$0xff]
    %v500 = vld [vmem:[#allocation9 + $0x1c0] sm:$0xff]
    %v501 = vld [vmem:[#allocation9 + $0x1c8] sm:$0xff]
    %v502 = vld [vmem:[#allocation9 + $0x1d0] sm:$0xff]
    %v503 = vld [vmem:[#allocation9 + $0x1d8] sm:$0xff]
    %v504 = vld [vmem:[#allocation9 + $0x1e0] sm:$0xff]
    %v505 = vld [vmem:[#allocation9 + $0x1e8] sm:$0xff]
    %v506 = vld [vmem:[#allocation9 + $0x1f0] sm:$0xff]
    %v507 = vld [vmem:[#allocation9 + $0x1f8] sm:$0xff]
    %v508 = vld [vmem:[#allocation2] sm:$0xff]
    %v509 = vld [vmem:[#allocation2 + $0x8] sm:$0xff]
    %v510 = vld [vmem:[#allocation2 + $0x10] sm:$0xff]
    %v511 = vld [vmem:[#allocation2 + $0x18] sm:$0xff]
    %512 = vmatprep.subr.mxu0 %v505
    %513 = vmatpush1.msra.mxu0 %v504
    %514 = vmatprep.subr.mxu0 %v501
    %515 = vmatpush1.msra.mxu0 %v500
    %516 = vmatprep.subr.mxu0 %v497
    %517 = vmatpush1.msra.mxu0 %v496
    %518 = vmatprep.subr.mxu0 %v493
    %519 = vmatpush1.msra.mxu0 %v492
    %520 = vmatprep.subr.mxu0 %v489
    %521 = vmatpush1.msra.mxu0 %v488
    %522 = vmatprep.subr.mxu0 %v485
    %523 = vmatpush1.msra.mxu0 %v484
    %524 = vmatprep.subr.mxu0 %v481
    %525 = vmatpush1.msra.mxu0 %v480
    %526 = vmatprep.subr.mxu0 %v477
    %527 = vmatpush1.msra.mxu0 %v476
    %528 = vmatprep.subr.mxu0 %v473
    %529 = vmatpush1.msra.mxu0 %v472
    %530 = vmatprep.subr.mxu0 %v469
    %531 = vmatpush1.msra.mxu0 %v468
    %532 = vmatprep.subr.mxu0 %v465
    %533 = vmatpush1.msra.mxu0 %v464
    %534 = vmatprep.subr.mxu0 %v461
    %535 = vmatpush1.msra.mxu0 %v460
    %536 = vmatprep.subr.mxu0 %v457
    %537 = vmatpush1.msra.mxu0 %v456
    %538 = vmatprep.subr.mxu0 %v453
    %539 = vmatpush1.msra.mxu0 %v452
    %540 = vmatprep.subr.mxu0 %v449
    %541 = vmatpush1.msra.mxu0 %v448
    %542 = vmatprep.subr.mxu0 %v445
    %543 = vmatpush1.msra.mxu0 %v444
    %544 = vmatprep.subr.mxu0 0.0
    %545 = vmatpush2.msra.mxu0 0.0
    %546 = vmatprep.subr.mxu0 0.0
    %547 = vmatpush2.msra.mxu0 0.0
    %548 = vmatprep.subr.mxu0 0.0
    %549 = vmatpush2.msra.mxu0 0.0
    %550 = vmatprep.subr.mxu0 0.0
    %551 = vmatpush2.msra.mxu0 0.0
    %552 = vmatprep.subr.mxu0 0.0
    %553 = vmatpush2.msra.mxu0 0.0
    %554 = vmatprep.subr.mxu0 0.0
    %555 = vmatpush2.msra.mxu0 0.0
    %556 = vmatprep.subr.mxu0 0.0
    %557 = vmatpush2.msra.mxu0 0.0
    %558 = vmatprep.subr.mxu0 0.0
    %559 = vmatpush2.msra.mxu0 0.0
    %560 = vmatprep.subr.mxu0 0.0
    %561 = vmatpush2.msra.mxu0 0.0
    %562 = vmatprep.subr.mxu0 0.0
    %563 = vmatpush2.msra.mxu0 0.0
    %564 = vmatprep.subr.mxu0 0.0
    %565 = vmatpush2.msra.mxu0 0.0
    %566 = vmatprep.subr.mxu0 0.0
    %567 = vmatpush2.msra.mxu0 0.0
    %568 = vmatprep.subr.mxu0 0.0
    %569 = vmatpush2.msra.mxu0 0.0
    %570 = vmatprep.subr.mxu0 0.0
    %571 = vmatpush2.msra.mxu0 0.0
    %572 = vmatprep.subr.mxu0 0.0
    %573 = vmatpush2.msra.mxu0 0.0
    %574 = vmatprep.subr.mxu0 0.0
    %575 = vmatpush2.msra.mxu0 0.0
    %576 = vmatprep.mubr.f32.mxu0 0.0
    %577 = vmatmul.mubr.f32.gmra.mxu0 0.0
    %v578 = vpop.f32.mrf.mxu0
    %v579 = vadd.f32 0.0, %v578
    %v580 = vpop.f32.mrf.mxu0
    %v581 = vadd.f32 0.0, %v580
    %582 = vdwg.mxu0
    %583 = vmatprep.subr.mxu0 %v507
    %584 = vmatpush1.msra.mxu0 %v506
    %585 = vmatprep.subr.mxu0 %v503
    %586 = vmatpush1.msra.mxu0 %v502
    %587 = vmatprep.subr.mxu0 %v499
    %588 = vmatpush1.msra.mxu0 %v498
    %589 = vmatprep.subr.mxu0 %v495
    %590 = vmatpush1.msra.mxu0 %v494
    %591 = vmatprep.subr.mxu0 %v491
    %592 = vmatpush1.msra.mxu0 %v490
    %593 = vmatprep.subr.mxu0 %v487
    %594 = vmatpush1.msra.mxu0 %v486
    %595 = vmatprep.subr.mxu0 %v483
    %596 = vmatpush1.msra.mxu0 %v482
    %597 = vmatprep.subr.mxu0 %v479
    %598 = vmatpush1.msra.mxu0 %v478
    %599 = vmatprep.subr.mxu0 %v475
    %600 = vmatpush1.msra.mxu0 %v474
    %601 = vmatprep.subr.mxu0 %v471
    %602 = vmatpush1.msra.mxu0 %v470
    %603 = vmatprep.subr.mxu0 %v467
    %604 = vmatpush1.msra.mxu0 %v466
    %605 = vmatprep.subr.mxu0 %v463
    %606 = vmatpush1.msra.mxu0 %v462
    %607 = vmatprep.subr.mxu0 %v459
    %608 = vmatpush1.msra.mxu0 %v458
    %609 = vmatprep.subr.mxu0 %v455
    %610 = vmatpush1.msra.mxu0 %v454
    %611 = vmatprep.subr.mxu0 %v451
    %612 = vmatpush1.msra.mxu0 %v450
    %613 = vmatprep.subr.mxu0 %v447
    %614 = vmatpush1.msra.mxu0 %v446
    %615 = vmatprep.subr.mxu0 0.0
    %616 = vmatpush2.msra.mxu0 0.0
    %617 = vmatprep.subr.mxu0 0.0
    %618 = vmatpush2.msra.mxu0 0.0
    %619 = vmatprep.subr.mxu0 0.0
    %620 = vmatpush2.msra.mxu0 0.0
    %621 = vmatprep.subr.mxu0 0.0
    %622 = vmatpush2.msra.mxu0 0.0
    %623 = vmatprep.subr.mxu0 0.0
    %624 = vmatpush2.msra.mxu0 0.0
    %625 = vmatprep.subr.mxu0 0.0
    %626 = vmatpush2.msra.mxu0 0.0
    %627 = vmatprep.subr.mxu0 0.0
    %628 = vmatpush2.msra.mxu0 0.0
    %629 = vmatprep.subr.mxu0 0.0
    %630 = vmatpush2.msra.mxu0 0.0
    %631 = vmatprep.subr.mxu0 0.0
    %632 = vmatpush2.msra.mxu0 0.0
    %633 = vmatprep.subr.mxu0 0.0
    %634 = vmatpush2.msra.mxu0 0.0
    %635 = vmatprep.subr.mxu0 0.0
    %636 = vmatpush2.msra.mxu0 0.0
    %637 = vmatprep.subr.mxu0 0.0
    %638 = vmatpush2.msra.mxu0 0.0
    %639 = vmatprep.subr.mxu0 0.0
    %640 = vmatpush2.msra.mxu0 0.0
    %641 = vmatprep.subr.mxu0 0.0
    %642 = vmatpush2.msra.mxu0 0.0
    %643 = vmatprep.subr.mxu0 0.0
    %644 = vmatpush2.msra.mxu0 0.0
    %645 = vmatprep.subr.mxu0 0.0
    %646 = vmatpush2.msra.mxu0 0.0
    %647 = vmatprep.mubr.f32.mxu0 0.0
    %648 = vmatmul.mubr.f32.gmra.mxu0 0.0
    %v649 = vpop.f32.mrf.mxu0
    %v650 = vadd.f32 0.0, %v649
    %v651 = vpop.f32.mrf.mxu0
    %v652 = vadd.f32 0.0, %v651
    %653 = vdwg.mxu0
    %v654 = vadd.f32 %v508, %v579
    %v655 = vadd.f32 %v509, %v581
    %v656 = vadd.f32 %v510, %v650
    %v657 = vadd.f32 %v511, %v652
    %v658 = vxor.u32 %v654, 2147483648
    %v659 = vmul.f32 %v658, 1.442695
    %v660 = vpow.pop %v659
    %v661 = vadd.f32 %v660, 1.0
    %v662 = vrcp.pop %v661
    %v663 = vmul.f32 1.0, %v662
    %v664 = vxor.u32 %v655, 2147483648
    %v665 = vmul.f32 %v664, 1.442695
    %v666 = vpow.pop %v665
    %v667 = vadd.f32 %v666, 1.0
    %v668 = vrcp.pop %v667
    %v669 = vmul.f32 1.0, %v668
    %v670 = vtanh.pop %v656
    %v671 = vxor.u32 %v657, 2147483648
    %v672 = vmul.f32 %v671, 1.442695
    %v673 = vpow.pop %v672
    %v674 = vadd.f32 %v673, 1.0
    %v675 = vrcp.pop %v674
    %v676 = vmul.f32 1.0, %v675
    %v677 = vmul.f32 %v669, 0.0
    %v678 = vmul.f32 %v663, %v670
    %v679 = vadd.f32 %v677, %v678
    %v680 = vtanh.pop %v679
    %v681 = vmul.f32 %v676, %v680
    %682 = vst [vmem:[#allocation3] sm:$0xff] %v681
    %s683 = scalar_lea.vmem [#allocation2], 32
    %v684 = vld [vmem:[%s683] sm:$0xff]
    %v685 = vld [vmem:[%s683 + $0x8] sm:$0xff]
    %v686 = vld [vmem:[%s683 + $0x10] sm:$0xff]
    %v687 = vld [vmem:[%s683 + $0x18] sm:$0xff]
    %688 = vmatprep.subr.mxu0 %v505
    %689 = vmatpush1.msra.mxu0 %v504
    %690 = vmatprep.subr.mxu0 %v501
    %691 = vmatpush1.msra.mxu0 %v500
    %692 = vmatprep.subr.mxu0 %v497
    %693 = vmatpush1.msra.mxu0 %v496
    %694 = vmatprep.subr.mxu0 %v493
    %695 = vmatpush1.msra.mxu0 %v492
    %696 = vmatprep.subr.mxu0 %v489
    %697 = vmatpush1.msra.mxu0 %v488
    %698 = vmatprep.subr.mxu0 %v485
    %699 = vmatpush1.msra.mxu0 %v484
    %700 = vmatprep.subr.mxu0 %v481
    %701 = vmatpush1.msra.mxu0 %v480
    %702 = vmatprep.subr.mxu0 %v477
    %703 = vmatpush1.msra.mxu0 %v476
    %704 = vmatprep.subr.mxu0 %v473
    %705 = vmatpush1.msra.mxu0 %v472
    %706 = vmatprep.subr.mxu0 %v469
    %707 = vmatpush1.msra.mxu0 %v468
    %708 = vmatprep.subr.mxu0 %v465
    %709 = vmatpush1.msra.mxu0 %v464
    %710 = vmatprep.subr.mxu0 %v461
    %711 = vmatpush1.msra.mxu0 %v460
    %712 = vmatprep.subr.mxu0 %v457
    %713 = vmatpush1.msra.mxu0 %v456
    %714 = vmatprep.subr.mxu0 %v453
    %715 = vmatpush1.msra.mxu0 %v452
    %716 = vmatprep.subr.mxu0 %v449
    %717 = vmatpush1.msra.mxu0 %v448
    %718 = vmatprep.subr.mxu0 %v445
    %719 = vmatpush1.msra.mxu0 %v444
    %720 = vmatprep.subr.mxu0 0.0
    %721 = vmatpush2.msra.mxu0 0.0
    %722 = vmatprep.subr.mxu0 0.0
    %723 = vmatpush2.msra.mxu0 0.0
    %724 = vmatprep.subr.mxu0 0.0
    %725 = vmatpush2.msra.mxu0 0.0
    %726 = vmatprep.subr.mxu0 0.0
    %727 = vmatpush2.msra.mxu0 0.0
    %728 = vmatprep.subr.mxu0 0.0
    %729 = vmatpush2.msra.mxu0 0.0
    %730 = vmatprep.subr.mxu0 0.0
    %731 = vmatpush2.msra.mxu0 0.0
    %732 = vmatprep.subr.mxu0 0.0
    %733 = vmatpush2.msra.mxu0 0.0
    %734 = vmatprep.subr.mxu0 0.0
    %735 = vmatpush2.msra.mxu0 0.0
    %736 = vmatprep.subr.mxu0 0.0
    %737 = vmatpush2.msra.mxu0 0.0
    %738 = vmatprep.subr.mxu0 0.0
    %739 = vmatpush2.msra.mxu0 0.0
    %740 = vmatprep.subr.mxu0 0.0
    %741 = vmatpush2.msra.mxu0 0.0
    %742 = vmatprep.subr.mxu0 0.0
    %743 = vmatpush2.msra.mxu0 0.0
    %744 = vmatprep.subr.mxu0 0.0
    %745 = vmatpush2.msra.mxu0 0.0
    %746 = vmatprep.subr.mxu0 0.0
    %747 = vmatpush2.msra.mxu0 0.0
    %748 = vmatprep.subr.mxu0 0.0
    %749 = vmatpush2.msra.mxu0 0.0
    %750 = vmatprep.subr.mxu0 0.0
    %751 = vmatpush2.msra.mxu0 0.0
    %752 = vmatprep.mubr.f32.mxu0 0.0
    %753 = vmatmul.mubr.f32.gmra.mxu0 %v681
    %v754 = vpop.f32.mrf.mxu0
    %v755 = vadd.f32 0.0, %v754
    %v756 = vpop.f32.mrf.mxu0
    %v757 = vadd.f32 0.0, %v756
    %758 = vdwg.mxu0
    %759 = vmatprep.subr.mxu0 %v507
    %760 = vmatpush1.msra.mxu0 %v506
    %761 = vmatprep.subr.mxu0 %v503
    %762 = vmatpush1.msra.mxu0 %v502
    %763 = vmatprep.subr.mxu0 %v499
    %764 = vmatpush1.msra.mxu0 %v498
    %765 = vmatprep.subr.mxu0 %v495
    %766 = vmatpush1.msra.mxu0 %v494
    %767 = vmatprep.subr.mxu0 %v491
    %768 = vmatpush1.msra.mxu0 %v490
    %769 = vmatprep.subr.mxu0 %v487
    %770 = vmatpush1.msra.mxu0 %v486
    %771 = vmatprep.subr.mxu0 %v483
    %772 = vmatpush1.msra.mxu0 %v482
    %773 = vmatprep.subr.mxu0 %v479
    %774 = vmatpush1.msra.mxu0 %v478
    %775 = vmatprep.subr.mxu0 %v475
    %776 = vmatpush1.msra.mxu0 %v474
    %777 = vmatprep.subr.mxu0 %v471
    %778 = vmatpush1.msra.mxu0 %v470
    %779 = vmatprep.subr.mxu0 %v467
    %780 = vmatpush1.msra.mxu0 %v466
    %781 = vmatprep.subr.mxu0 %v463
    %782 = vmatpush1.msra.mxu0 %v462
    %783 = vmatprep.subr.mxu0 %v459
    %784 = vmatpush1.msra.mxu0 %v458
    %785 = vmatprep.subr.mxu0 %v455
    %786 = vmatpush1.msra.mxu0 %v454
    %787 = vmatprep.subr.mxu0 %v451
    %788 = vmatpush1.msra.mxu0 %v450
    %789 = vmatprep.subr.mxu0 %v447
    %790 = vmatpush1.msra.mxu0 %v446
    %791 = vmatprep.subr.mxu0 0.0
    %792 = vmatpush2.msra.mxu0 0.0
    %793 = vmatprep.subr.mxu0 0.0
    %794 = vmatpush2.msra.mxu0 0.0
    %795 = vmatprep.subr.mxu0 0.0
    %796 = vmatpush2.msra.mxu0 0.0
    %797 = vmatprep.subr.mxu0 0.0
    %798 = vmatpush2.msra.mxu0 0.0
    %799 = vmatprep.subr.mxu0 0.0
    %800 = vmatpush2.msra.mxu0 0.0
    %801 = vmatprep.subr.mxu0 0.0
    %802 = vmatpush2.msra.mxu0 0.0
    %803 = vmatprep.subr.mxu0 0.0
    %804 = vmatpush2.msra.mxu0 0.0
    %805 = vmatprep.subr.mxu0 0.0
    %806 = vmatpush2.msra.mxu0 0.0
    %807 = vmatprep.subr.mxu0 0.0
    %808 = vmatpush2.msra.mxu0 0.0
    %809 = vmatprep.subr.mxu0 0.0
    %810 = vmatpush2.msra.mxu0 0.0
    %811 = vmatprep.subr.mxu0 0.0
    %812 = vmatpush2.msra.mxu0 0.0
    %813 = vmatprep.subr.mxu0 0.0
    %814 = vmatpush2.msra.mxu0 0.0
    %815 = vmatprep.subr.mxu0 0.0
    %816 = vmatpush2.msra.mxu0 0.0
    %817 = vmatprep.subr.mxu0 0.0
    %818 = vmatpush2.msra.mxu0 0.0
    %819 = vmatprep.subr.mxu0 0.0
    %820 = vmatpush2.msra.mxu0 0.0
    %821 = vmatprep.subr.mxu0 0.0
    %822 = vmatpush2.msra.mxu0 0.0
    %823 = vmatprep.mubr.f32.mxu0 0.0
    %824 = vmatmul.mubr.f32.gmra.mxu0 %v681
    %v825 = vpop.f32.mrf.mxu0
    %v826 = vadd.f32 0.0, %v825
    %v827 = vpop.f32.mrf.mxu0
    %v828 = vadd.f32 0.0, %v827
    %829 = vdwg.mxu0
    %v830 = vadd.f32 %v684, %v755
    %v831 = vadd.f32 %v685, %v757
    %v832 = vadd.f32 %v686, %v826
    %v833 = vadd.f32 %v687, %v828
    %v834 = vxor.u32 %v830, 2147483648
    %v835 = vmul.f32 %v834, 1.442695
    %v836 = vpow.pop %v835
    %v837 = vadd.f32 %v836, 1.0
    %v838 = vrcp.pop %v837
    %v839 = vmul.f32 1.0, %v838
    %v840 = vxor.u32 %v831, 2147483648
    %v841 = vmul.f32 %v840, 1.442695
    %v842 = vpow.pop %v841
    %v843 = vadd.f32 %v842, 1.0
    %v844 = vrcp.pop %v843
    %v845 = vmul.f32 1.0, %v844
    %v846 = vtanh.pop %v832
    %v847 = vxor.u32 %v833, 2147483648
    %v848 = vmul.f32 %v847, 1.442695
    %v849 = vpow.pop %v848
    %v850 = vadd.f32 %v849, 1.0
    %v851 = vrcp.pop %v850
    %v852 = vmul.f32 1.0, %v851
    %v853 = vmul.f32 %v845, %v679
    %v854 = vmul.f32 %v839, %v846
    %v855 = vadd.f32 %v853, %v854
    %v856 = vtanh.pop %v855
    %v857 = vmul.f32 %v852, %v856
    %s858 = scalar_lea.vmem [#allocation3], 8
    %859 = vst [vmem:[%s858] sm:$0xff] %v857
    %s860 = scalar_lea.vmem [#allocation2], 64
    %v861 = vld [vmem:[%s860] sm:$0xff]
    %v862 = vld [vmem:[%s860 + $0x8] sm:$0xff]
    %v863 = vld [vmem:[%s860 + $0x10] sm:$0xff]
    %v864 = vld [vmem:[%s860 + $0x18] sm:$0xff]
    %865 = vmatprep.subr.mxu0 %v505
    %866 = vmatpush1.msra.mxu0 %v504
    %867 = vmatprep.subr.mxu0 %v501
    %868 = vmatpush1.msra.mxu0 %v500
    %869 = vmatprep.subr.mxu0 %v497
    %870 = vmatpush1.msra.mxu0 %v496
    %871 = vmatprep.subr.mxu0 %v493
    %872 = vmatpush1.msra.mxu0 %v492
    %873 = vmatprep.subr.mxu0 %v489
    %874 = vmatpush1.msra.mxu0 %v488
    %875 = vmatprep.subr.mxu0 %v485
    %876 = vmatpush1.msra.mxu0 %v484
    %877 = vmatprep.subr.mxu0 %v481
    %878 = vmatpush1.msra.mxu0 %v480
    %879 = vmatprep.subr.mxu0 %v477
    %880 = vmatpush1.msra.mxu0 %v476
    %881 = vmatprep.subr.mxu0 %v473
    %882 = vmatpush1.msra.mxu0 %v472
    %883 = vmatprep.subr.mxu0 %v469
    %884 = vmatpush1.msra.mxu0 %v468
    %885 = vmatprep.subr.mxu0 %v465
    %886 = vmatpush1.msra.mxu0 %v464
    %887 = vmatprep.subr.mxu0 %v461
    %888 = vmatpush1.msra.mxu0 %v460
    %889 = vmatprep.subr.mxu0 %v457
    %890 = vmatpush1.msra.mxu0 %v456
    %891 = vmatprep.subr.mxu0 %v453
    %892 = vmatpush1.msra.mxu0 %v452
    %893 = vmatprep.subr.mxu0 %v449
    %894 = vmatpush1.msra.mxu0 %v448
    %895 = vmatprep.subr.mxu0 %v445
    %896 = vmatpush1.msra.mxu0 %v444
    %897 = vmatprep.subr.mxu0 0.0
    %898 = vmatpush2.msra.mxu0 0.0
    %899 = vmatprep.subr.mxu0 0.0
    %900 = vmatpush2.msra.mxu0 0.0
    %901 = vmatprep.subr.mxu0 0.0
    %902 = vmatpush2.msra.mxu0 0.0
    %903 = vmatprep.subr.mxu0 0.0
    %904 = vmatpush2.msra.mxu0 0.0
    %905 = vmatprep.subr.mxu0 0.0
    %906 = vmatpush2.msra.mxu0 0.0
    %907 = vmatprep.subr.mxu0 0.0
    %908 = vmatpush2.msra.mxu0 0.0
    %909 = vmatprep.subr.mxu0 0.0
    %910 = vmatpush2.msra.mxu0 0.0
    %911 = vmatprep.subr.mxu0 0.0
    %912 = vmatpush2.msra.mxu0 0.0
    %913 = vmatprep.subr.mxu0 0.0
    %914 = vmatpush2.msra.mxu0 0.0
    %915 = vmatprep.subr.mxu0 0.0
    %916 = vmatpush2.msra.mxu0 0.0
    %917 = vmatprep.subr.mxu0 0.0
    %918 = vmatpush2.msra.mxu0 0.0
    %919 = vmatprep.subr.mxu0 0.0
    %920 = vmatpush2.msra.mxu0 0.0
    %921 = vmatprep.subr.mxu0 0.0
    %922 = vmatpush2.msra.mxu0 0.0
    %923 = vmatprep.subr.mxu0 0.0
    %924 = vmatpush2.msra.mxu0 0.0
    %925 = vmatprep.subr.mxu0 0.0
    %926 = vmatpush2.msra.mxu0 0.0
    %927 = vmatprep.subr.mxu0 0.0
    %928 = vmatpush2.msra.mxu0 0.0
    %929 = vmatprep.mubr.f32.mxu0 0.0
    %930 = vmatmul.mubr.f32.gmra.mxu0 %v857
    %v931 = vpop.f32.mrf.mxu0
    %v932 = vadd.f32 0.0, %v931
    %v933 = vpop.f32.mrf.mxu0
    %v934 = vadd.f32 0.0, %v933
    %935 = vdwg.mxu0
    %936 = vmatprep.subr.mxu0 %v507
    %937 = vmatpush1.msra.mxu0 %v506
    %938 = vmatprep.subr.mxu0 %v503
    %939 = vmatpush1.msra.mxu0 %v502
    %940 = vmatprep.subr.mxu0 %v499
    %941 = vmatpush1.msra.mxu0 %v498
    %942 = vmatprep.subr.mxu0 %v495
    %943 = vmatpush1.msra.mxu0 %v494
    %944 = vmatprep.subr.mxu0 %v491
    %945 = vmatpush1.msra.mxu0 %v490
    %946 = vmatprep.subr.mxu0 %v487
    %947 = vmatpush1.msra.mxu0 %v486
    %948 = vmatprep.subr.mxu0 %v483
    %949 = vmatpush1.msra.mxu0 %v482
    %950 = vmatprep.subr.mxu0 %v479
    %951 = vmatpush1.msra.mxu0 %v478
    %952 = vmatprep.subr.mxu0 %v475
    %953 = vmatpush1.msra.mxu0 %v474
    %954 = vmatprep.subr.mxu0 %v471
    %955 = vmatpush1.msra.mxu0 %v470
    %956 = vmatprep.subr.mxu0 %v467
    %957 = vmatpush1.msra.mxu0 %v466
    %958 = vmatprep.subr.mxu0 %v463
    %959 = vmatpush1.msra.mxu0 %v462
    %960 = vmatprep.subr.mxu0 %v459
    %961 = vmatpush1.msra.mxu0 %v458
    %962 = vmatprep.subr.mxu0 %v455
    %963 = vmatpush1.msra.mxu0 %v454
    %964 = vmatprep.subr.mxu0 %v451
    %965 = vmatpush1.msra.mxu0 %v450
    %966 = vmatprep.subr.mxu0 %v447
    %967 = vmatpush1.msra.mxu0 %v446
    %968 = vmatprep.subr.mxu0 0.0
    %969 = vmatpush2.msra.mxu0 0.0
    %970 = vmatprep.subr.mxu0 0.0
    %971 = vmatpush2.msra.mxu0 0.0
    %972 = vmatprep.subr.mxu0 0.0
    %973 = vmatpush2.msra.mxu0 0.0
    %974 = vmatprep.subr.mxu0 0.0
    %975 = vmatpush2.msra.mxu0 0.0
    %976 = vmatprep.subr.mxu0 0.0
    %977 = vmatpush2.msra.mxu0 0.0
    %978 = vmatprep.subr.mxu0 0.0
    %979 = vmatpush2.msra.mxu0 0.0
    %980 = vmatprep.subr.mxu0 0.0
    %981 = vmatpush2.msra.mxu0 0.0
    %982 = vmatprep.subr.mxu0 0.0
    %983 = vmatpush2.msra.mxu0 0.0
    %984 = vmatprep.subr.mxu0 0.0
    %985 = vmatpush2.msra.mxu0 0.0
    %986 = vmatprep.subr.mxu0 0.0
    %987 = vmatpush2.msra.mxu0 0.0
    %988 = vmatprep.subr.mxu0 0.0
    %989 = vmatpush2.msra.mxu0 0.0
    %990 = vmatprep.subr.mxu0 0.0
    %991 = vmatpush2.msra.mxu0 0.0
    %992 = vmatprep.subr.mxu0 0.0
    %993 = vmatpush2.msra.mxu0 0.0
    %994 = vmatprep.subr.mxu0 0.0
    %995 = vmatpush2.msra.mxu0 0.0
    %996 = vmatprep.subr.mxu0 0.0
    %997 = vmatpush2.msra.mxu0 0.0
    %998 = vmatprep.subr.mxu0 0.0
    %999 = vmatpush2.msra.mxu0 0.0
    %1000 = vmatprep.mubr.f32.mxu0 0.0
    %1001 = vmatmul.mubr.f32.gmra.mxu0 %v857
    %v1002 = vpop.f32.mrf.mxu0
    %v1003 = vadd.f32 0.0, %v1002
    %v1004 = vpop.f32.mrf.mxu0
    %v1005 = vadd.f32 0.0, %v1004
    %1006 = vdwg.mxu0
    %v1007 = vadd.f32 %v861, %v932
    %v1008 = vadd.f32 %v862, %v934
    %v1009 = vadd.f32 %v863, %v1003
    %v1010 = vadd.f32 %v864, %v1005
    %v1011 = vxor.u32 %v1007, 2147483648
    %v1012 = vmul.f32 %v1011, 1.442695
    %v1013 = vpow.pop %v1012
    %v1014 = vadd.f32 %v1013, 1.0
    %v1015 = vrcp.pop %v1014
    %v1016 = vmul.f32 1.0, %v1015
    %v1017 = vxor.u32 %v1008, 2147483648
    %v1018 = vmul.f32 %v1017, 1.442695
    %v1019 = vpow.pop %v1018
    %v1020 = vadd.f32 %v1019, 1.0
    %v1021 = vrcp.pop %v1020
    %v1022 = vmul.f32 1.0, %v1021
    %v1023 = vtanh.pop %v1009
    %v1024 = vxor.u32 %v1010, 2147483648
    %v1025 = vmul.f32 %v1024, 1.442695
    %v1026 = vpow.pop %v1025
    %v1027 = vadd.f32 %v1026, 1.0
    %v1028 = vrcp.pop %v1027
    %v1029 = vmul.f32 1.0, %v1028
    %v1030 = vmul.f32 %v1022, %v855
    %v1031 = vmul.f32 %v1016, %v1023
    %v1032 = vadd.f32 %v1030, %v1031
    %v1033 = vtanh.pop %v1032
    %v1034 = vmul.f32 %v1029, %v1033
    %s1035 = scalar_lea.vmem [#allocation3], 16
    %1036 = vst [vmem:[%s1035] sm:$0xff] %v1034
    %s1037 = scalar_lea.vmem [#allocation2], 96
    %v1038 = vld [vmem:[%s1037] sm:$0xff]
    %v1039 = vld [vmem:[%s1037 + $0x8] sm:$0xff]
    %v1040 = vld [vmem:[%s1037 + $0x10] sm:$0xff]
    %v1041 = vld [vmem:[%s1037 + $0x18] sm:$0xff]
    %1042 = vmatprep.subr.mxu0 %v505
    %1043 = vmatpush1.msra.mxu0 %v504
    %1044 = vmatprep.subr.mxu0 %v501
    %1045 = vmatpush1.msra.mxu0 %v500
    %1046 = vmatprep.subr.mxu0 %v497
    %1047 = vmatpush1.msra.mxu0 %v496
    %1048 = vmatprep.subr.mxu0 %v493
    %1049 = vmatpush1.msra.mxu0 %v492
    %1050 = vmatprep.subr.mxu0 %v489
    %1051 = vmatpush1.msra.mxu0 %v488
    %1052 = vmatprep.subr.mxu0 %v485
    %1053 = vmatpush1.msra.mxu0 %v484
    %1054 = vmatprep.subr.mxu0 %v481
    %1055 = vmatpush1.msra.mxu0 %v480
    %1056 = vmatprep.subr.mxu0 %v477
    %1057 = vmatpush1.msra.mxu0 %v476
    %1058 = vmatprep.subr.mxu0 %v473
    %1059 = vmatpush1.msra.mxu0 %v472
    %1060 = vmatprep.subr.mxu0 %v469
    %1061 = vmatpush1.msra.mxu0 %v468
    %1062 = vmatprep.subr.mxu0 %v465
    %1063 = vmatpush1.msra.mxu0 %v464
    %1064 = vmatprep.subr.mxu0 %v461
    %1065 = vmatpush1.msra.mxu0 %v460
    %1066 = vmatprep.subr.mxu0 %v457
    %1067 = vmatpush1.msra.mxu0 %v456
    %1068 = vmatprep.subr.mxu0 %v453
    %1069 = vmatpush1.msra.mxu0 %v452
    %1070 = vmatprep.subr.mxu0 %v449
    %1071 = vmatpush1.msra.mxu0 %v448
    %1072 = vmatprep.subr.mxu0 %v445
    %1073 = vmatpush1.msra.mxu0 %v444
    %1074 = vmatprep.subr.mxu0 0.0
    %1075 = vmatpush2.msra.mxu0 0.0
    %1076 = vmatprep.subr.mxu0 0.0
    %1077 = vmatpush2.msra.mxu0 0.0
    %1078 = vmatprep.subr.mxu0 0.0
    %1079 = vmatpush2.msra.mxu0 0.0
    %1080 = vmatprep.subr.mxu0 0.0
    %1081 = vmatpush2.msra.mxu0 0.0
    %1082 = vmatprep.subr.mxu0 0.0
    %1083 = vmatpush2.msra.mxu0 0.0
    %1084 = vmatprep.subr.mxu0 0.0
    %1085 = vmatpush2.msra.mxu0 0.0
    %1086 = vmatprep.subr.mxu0 0.0
    %1087 = vmatpush2.msra.mxu0 0.0
    %1088 = vmatprep.subr.mxu0 0.0
    %1089 = vmatpush2.msra.mxu0 0.0
    %1090 = vmatprep.subr.mxu0 0.0
    %1091 = vmatpush2.msra.mxu0 0.0
    %1092 = vmatprep.subr.mxu0 0.0
    %1093 = vmatpush2.msra.mxu0 0.0
    %1094 = vmatprep.subr.mxu0 0.0
    %1095 = vmatpush2.msra.mxu0 0.0
    %1096 = vmatprep.subr.mxu0 0.0
    %1097 = vmatpush2.msra.mxu0 0.0
    %1098 = vmatprep.subr.mxu0 0.0
    %1099 = vmatpush2.msra.mxu0 0.0
    %1100 = vmatprep.subr.mxu0 0.0
    %1101 = vmatpush2.msra.mxu0 0.0
    %1102 = vmatprep.subr.mxu0 0.0
    %1103 = vmatpush2.msra.mxu0 0.0
    %1104 = vmatprep.subr.mxu0 0.0
    %1105 = vmatpush2.msra.mxu0 0.0
    %1106 = vmatprep.mubr.f32.mxu0 0.0
    %1107 = vmatmul.mubr.f32.gmra.mxu0 %v1034
    %v1108 = vpop.f32.mrf.mxu0
    %v1109 = vadd.f32 0.0, %v1108
    %v1110 = vpop.f32.mrf.mxu0
    %v1111 = vadd.f32 0.0, %v1110
    %1112 = vdwg.mxu0
    %1113 = vmatprep.subr.mxu0 %v507
    %1114 = vmatpush1.msra.mxu0 %v506
    %1115 = vmatprep.subr.mxu0 %v503
    %1116 = vmatpush1.msra.mxu0 %v502
    %1117 = vmatprep.subr.mxu0 %v499
    %1118 = vmatpush1.msra.mxu0 %v498
    %1119 = vmatprep.subr.mxu0 %v495
    %1120 = vmatpush1.msra.mxu0 %v494
    %1121 = vmatprep.subr.mxu0 %v491
    %1122 = vmatpush1.msra.mxu0 %v490
    %1123 = vmatprep.subr.mxu0 %v487
    %1124 = vmatpush1.msra.mxu0 %v486
    %1125 = vmatprep.subr.mxu0 %v483
    %1126 = vmatpush1.msra.mxu0 %v482
    %1127 = vmatprep.subr.mxu0 %v479
    %1128 = vmatpush1.msra.mxu0 %v478
    %1129 = vmatprep.subr.mxu0 %v475
    %1130 = vmatpush1.msra.mxu0 %v474
    %1131 = vmatprep.subr.mxu0 %v471
    %1132 = vmatpush1.msra.mxu0 %v470
    %1133 = vmatprep.subr.mxu0 %v467
    %1134 = vmatpush1.msra.mxu0 %v466
    %1135 = vmatprep.subr.mxu0 %v463
    %1136 = vmatpush1.msra.mxu0 %v462
    %1137 = vmatprep.subr.mxu0 %v459
    %1138 = vmatpush1.msra.mxu0 %v458
    %1139 = vmatprep.subr.mxu0 %v455
    %1140 = vmatpush1.msra.mxu0 %v454
    %1141 = vmatprep.subr.mxu0 %v451
    %1142 = vmatpush1.msra.mxu0 %v450
    %1143 = vmatprep.subr.mxu0 %v447
    %1144 = vmatpush1.msra.mxu0 %v446
    %1145 = vmatprep.subr.mxu0 0.0
    %1146 = vmatpush2.msra.mxu0 0.0
    %1147 = vmatprep.subr.mxu0 0.0
    %1148 = vmatpush2.msra.mxu0 0.0
    %1149 = vmatprep.subr.mxu0 0.0
    %1150 = vmatpush2.msra.mxu0 0.0
    %1151 = vmatprep.subr.mxu0 0.0
    %1152 = vmatpush2.msra.mxu0 0.0
    %1153 = vmatprep.subr.mxu0 0.0
    %1154 = vmatpush2.msra.mxu0 0.0
    %1155 = vmatprep.subr.mxu0 0.0
    %1156 = vmatpush2.msra.mxu0 0.0
    %1157 = vmatprep.subr.mxu0 0.0
    %1158 = vmatpush2.msra.mxu0 0.0
    %1159 = vmatprep.subr.mxu0 0.0
    %1160 = vmatpush2.msra.mxu0 0.0
    %1161 = vmatprep.subr.mxu0 0.0
    %1162 = vmatpush2.msra.mxu0 0.0
    %1163 = vmatprep.subr.mxu0 0.0
    %1164 = vmatpush2.msra.mxu0 0.0
    %1165 = vmatprep.subr.mxu0 0.0
    %1166 = vmatpush2.msra.mxu0 0.0
    %1167 = vmatprep.subr.mxu0 0.0
    %1168 = vmatpush2.msra.mxu0 0.0
    %1169 = vmatprep.subr.mxu0 0.0
    %1170 = vmatpush2.msra.mxu0 0.0
    %1171 = vmatprep.subr.mxu0 0.0
    %1172 = vmatpush2.msra.mxu0 0.0
    %1173 = vmatprep.subr.mxu0 0.0
    %1174 = vmatpush2.msra.mxu0 0.0
    %1175 = vmatprep.subr.mxu0 0.0
    %1176 = vmatpush2.msra.mxu0 0.0
    %1177 = vmatprep.mubr.f32.mxu0 0.0
    %1178 = vmatmul.mubr.f32.gmra.mxu0 %v1034
    %v1179 = vpop.f32.mrf.mxu0
    %v1180 = vadd.f32 0.0, %v1179
    %v1181 = vpop.f32.mrf.mxu0
    %v1182 = vadd.f32 0.0, %v1181
    %1183 = vdwg.mxu0
    %v1184 = vadd.f32 %v1038, %v1109
    %v1185 = vadd.f32 %v1039, %v1111
    %v1186 = vadd.f32 %v1040, %v1180
    %v1187 = vadd.f32 %v1041, %v1182
    %v1188 = vxor.u32 %v1184, 2147483648
    %v1189 = vmul.f32 %v1188, 1.442695
    %v1190 = vpow.pop %v1189
    %v1191 = vadd.f32 %v1190, 1.0
    %v1192 = vrcp.pop %v1191
    %v1193 = vmul.f32 1.0, %v1192
    %v1194 = vxor.u32 %v1185, 2147483648
    %v1195 = vmul.f32 %v1194, 1.442695
    %v1196 = vpow.pop %v1195
    %v1197 = vadd.f32 %v1196, 1.0
    %v1198 = vrcp.pop %v1197
    %v1199 = vmul.f32 1.0, %v1198
    %v1200 = vtanh.pop %v1186
    %v1201 = vxor.u32 %v1187, 2147483648
    %v1202 = vmul.f32 %v1201, 1.442695
    %v1203 = vpow.pop %v1202
    %v1204 = vadd.f32 %v1203, 1.0
    %v1205 = vrcp.pop %v1204
    %v1206 = vmul.f32 1.0, %v1205
    %v1207 = vmul.f32 %v1199, %v1032
    %v1208 = vmul.f32 %v1193, %v1200
    %v1209 = vadd.f32 %v1207, %v1208
    %v1210 = vtanh.pop %v1209
    %v1211 = vmul.f32 %v1206, %v1210
    %s1212 = scalar_lea.vmem [#allocation3], 24
    %1213 = vst [vmem:[%s1212] sm:$0xff] %v1211
    %s1214 = scalar_lea.vmem [#allocation2], 128
    %v1215 = vld [vmem:[%s1214] sm:$0xff]
    %v1216 = vld [vmem:[%s1214 + $0x8] sm:$0xff]
    %v1217 = vld [vmem:[%s1214 + $0x10] sm:$0xff]
    %v1218 = vld [vmem:[%s1214 + $0x18] sm:$0xff]
    %1219 = vmatprep.subr.mxu0 %v505
    %1220 = vmatpush1.msra.mxu0 %v504
    %1221 = vmatprep.subr.mxu0 %v501
    %1222 = vmatpush1.msra.mxu0 %v500
    %1223 = vmatprep.subr.mxu0 %v497
    %1224 = vmatpush1.msra.mxu0 %v496
    %1225 = vmatprep.subr.mxu0 %v493
    %1226 = vmatpush1.msra.mxu0 %v492
    %1227 = vmatprep.subr.mxu0 %v489
    %1228 = vmatpush1.msra.mxu0 %v488
    %1229 = vmatprep.subr.mxu0 %v485
    %1230 = vmatpush1.msra.mxu0 %v484
    %1231 = vmatprep.subr.mxu0 %v481
    %1232 = vmatpush1.msra.mxu0 %v480
    %1233 = vmatprep.subr.mxu0 %v477
    %1234 = vmatpush1.msra.mxu0 %v476
    %1235 = vmatprep.subr.mxu0 %v473
    %1236 = vmatpush1.msra.mxu0 %v472
    %1237 = vmatprep.subr.mxu0 %v469
    %1238 = vmatpush1.msra.mxu0 %v468
    %1239 = vmatprep.subr.mxu0 %v465
    %1240 = vmatpush1.msra.mxu0 %v464
    %1241 = vmatprep.subr.mxu0 %v461
    %1242 = vmatpush1.msra.mxu0 %v460
    %1243 = vmatprep.subr.mxu0 %v457
    %1244 = vmatpush1.msra.mxu0 %v456
    %1245 = vmatprep.subr.mxu0 %v453
    %1246 = vmatpush1.msra.mxu0 %v452
    %1247 = vmatprep.subr.mxu0 %v449
    %1248 = vmatpush1.msra.mxu0 %v448
    %1249 = vmatprep.subr.mxu0 %v445
    %1250 = vmatpush1.msra.mxu0 %v444
    %1251 = vmatprep.subr.mxu0 0.0
    %1252 = vmatpush2.msra.mxu0 0.0
    %1253 = vmatprep.subr.mxu0 0.0
    %1254 = vmatpush2.msra.mxu0 0.0
    %1255 = vmatprep.subr.mxu0 0.0
    %1256 = vmatpush2.msra.mxu0 0.0
    %1257 = vmatprep.subr.mxu0 0.0
    %1258 = vmatpush2.msra.mxu0 0.0
    %1259 = vmatprep.subr.mxu0 0.0
    %1260 = vmatpush2.msra.mxu0 0.0
    %1261 = vmatprep.subr.mxu0 0.0
    %1262 = vmatpush2.msra.mxu0 0.0
    %1263 = vmatprep.subr.mxu0 0.0
    %1264 = vmatpush2.msra.mxu0 0.0
    %1265 = vmatprep.subr.mxu0 0.0
    %1266 = vmatpush2.msra.mxu0 0.0
    %1267 = vmatprep.subr.mxu0 0.0
    %1268 = vmatpush2.msra.mxu0 0.0
    %1269 = vmatprep.subr.mxu0 0.0
    %1270 = vmatpush2.msra.mxu0 0.0
    %1271 = vmatprep.subr.mxu0 0.0
    %1272 = vmatpush2.msra.mxu0 0.0
    %1273 = vmatprep.subr.mxu0 0.0
    %1274 = vmatpush2.msra.mxu0 0.0
    %1275 = vmatprep.subr.mxu0 0.0
    %1276 = vmatpush2.msra.mxu0 0.0
    %1277 = vmatprep.subr.mxu0 0.0
    %1278 = vmatpush2.msra.mxu0 0.0
    %1279 = vmatprep.subr.mxu0 0.0
    %1280 = vmatpush2.msra.mxu0 0.0
    %1281 = vmatprep.subr.mxu0 0.0
    %1282 = vmatpush2.msra.mxu0 0.0
    %1283 = vmatprep.mubr.f32.mxu0 0.0
    %1284 = vmatmul.mubr.f32.gmra.mxu0 %v1211
    %v1285 = vpop.f32.mrf.mxu0
    %v1286 = vadd.f32 0.0, %v1285
    %v1287 = vpop.f32.mrf.mxu0
    %v1288 = vadd.f32 0.0, %v1287
    %1289 = vdwg.mxu0
    %1290 = vmatprep.subr.mxu0 %v507
    %1291 = vmatpush1.msra.mxu0 %v506
    %1292 = vmatprep.subr.mxu0 %v503
    %1293 = vmatpush1.msra.mxu0 %v502
    %1294 = vmatprep.subr.mxu0 %v499
    %1295 = vmatpush1.msra.mxu0 %v498
    %1296 = vmatprep.subr.mxu0 %v495
    %1297 = vmatpush1.msra.mxu0 %v494
    %1298 = vmatprep.subr.mxu0 %v491
    %1299 = vmatpush1.msra.mxu0 %v490
    %1300 = vmatprep.subr.mxu0 %v487
    %1301 = vmatpush1.msra.mxu0 %v486
    %1302 = vmatprep.subr.mxu0 %v483
    %1303 = vmatpush1.msra.mxu0 %v482
    %1304 = vmatprep.subr.mxu0 %v479
    %1305 = vmatpush1.msra.mxu0 %v478
    %1306 = vmatprep.subr.mxu0 %v475
    %1307 = vmatpush1.msra.mxu0 %v474
    %1308 = vmatprep.subr.mxu0 %v471
    %1309 = vmatpush1.msra.mxu0 %v470
    %1310 = vmatprep.subr.mxu0 %v467
    %1311 = vmatpush1.msra.mxu0 %v466
    %1312 = vmatprep.subr.mxu0 %v463
    %1313 = vmatpush1.msra.mxu0 %v462
    %1314 = vmatprep.subr.mxu0 %v459
    %1315 = vmatpush1.msra.mxu0 %v458
    %1316 = vmatprep.subr.mxu0 %v455
    %1317 = vmatpush1.msra.mxu0 %v454
    %1318 = vmatprep.subr.mxu0 %v451
    %1319 = vmatpush1.msra.mxu0 %v450
    %1320 = vmatprep.subr.mxu0 %v447
    %1321 = vmatpush1.msra.mxu0 %v446
    %1322 = vmatprep.subr.mxu0 0.0
    %1323 = vmatpush2.msra.mxu0 0.0
    %1324 = vmatprep.subr.mxu0 0.0
    %1325 = vmatpush2.msra.mxu0 0.0
    %1326 = vmatprep.subr.mxu0 0.0
    %1327 = vmatpush2.msra.mxu0 0.0
    %1328 = vmatprep.subr.mxu0 0.0
    %1329 = vmatpush2.msra.mxu0 0.0
    %1330 = vmatprep.subr.mxu0 0.0
    %1331 = vmatpush2.msra.mxu0 0.0
    %1332 = vmatprep.subr.mxu0 0.0
    %1333 = vmatpush2.msra.mxu0 0.0
    %1334 = vmatprep.subr.mxu0 0.0
    %1335 = vmatpush2.msra.mxu0 0.0
    %1336 = vmatprep.subr.mxu0 0.0
    %1337 = vmatpush2.msra.mxu0 0.0
    %1338 = vmatprep.subr.mxu0 0.0
    %1339 = vmatpush2.msra.mxu0 0.0
    %1340 = vmatprep.subr.mxu0 0.0
    %1341 = vmatpush2.msra.mxu0 0.0
    %1342 = vmatprep.subr.mxu0 0.0
    %1343 = vmatpush2.msra.mxu0 0.0
    %1344 = vmatprep.subr.mxu0 0.0
    %1345 = vmatpush2.msra.mxu0 0.0
    %1346 = vmatprep.subr.mxu0 0.0
    %1347 = vmatpush2.msra.mxu0 0.0
    %1348 = vmatprep.subr.mxu0 0.0
    %1349 = vmatpush2.msra.mxu0 0.0
    %1350 = vmatprep.subr.mxu0 0.0
    %1351 = vmatpush2.msra.mxu0 0.0
    %1352 = vmatprep.subr.mxu0 0.0
    %1353 = vmatpush2.msra.mxu0 0.0
    %1354 = vmatprep.mubr.f32.mxu0 0.0
    %1355 = vmatmul.mubr.f32.gmra.mxu0 %v1211
    %v1356 = vpop.f32.mrf.mxu0
    %v1357 = vadd.f32 0.0, %v1356
    %v1358 = vpop.f32.mrf.mxu0
    %v1359 = vadd.f32 0.0, %v1358
    %1360 = vdwg.mxu0
    %v1361 = vadd.f32 %v1215, %v1286
    %v1362 = vadd.f32 %v1216, %v1288
    %v1363 = vadd.f32 %v1217, %v1357
    %v1364 = vadd.f32 %v1218, %v1359
    %v1365 = vxor.u32 %v1361, 2147483648
    %v1366 = vmul.f32 %v1365, 1.442695
    %v1367 = vpow.pop %v1366
    %v1368 = vadd.f32 %v1367, 1.0
    %v1369 = vrcp.pop %v1368
    %v1370 = vmul.f32 1.0, %v1369
    %v1371 = vxor.u32 %v1362, 2147483648
    %v1372 = vmul.f32 %v1371, 1.442695
    %v1373 = vpow.pop %v1372
    %v1374 = vadd.f32 %v1373, 1.0
    %v1375 = vrcp.pop %v1374
    %v1376 = vmul.f32 1.0, %v1375
    %v1377 = vtanh.pop %v1363
    %v1378 = vxor.u32 %v1364, 2147483648
    %v1379 = vmul.f32 %v1378, 1.442695
    %v1380 = vpow.pop %v1379
    %v1381 = vadd.f32 %v1380, 1.0
    %v1382 = vrcp.pop %v1381
    %v1383 = vmul.f32 1.0, %v1382
    %v1384 = vmul.f32 %v1376, %v1209
    %v1385 = vmul.f32 %v1370, %v1377
    %v1386 = vadd.f32 %v1384, %v1385
    %v1387 = vtanh.pop %v1386
    %v1388 = vmul.f32 %v1383, %v1387
    %s1389 = scalar_lea.vmem [#allocation3], 32
    %1390 = vst [vmem:[%s1389] sm:$0xff] %v1388
    %s1391 = scalar_lea.vmem [#allocation2], 160
    %v1392 = vld [vmem:[%s1391] sm:$0xff]
    %v1393 = vld [vmem:[%s1391 + $0x8] sm:$0xff]
    %v1394 = vld [vmem:[%s1391 + $0x10] sm:$0xff]
    %v1395 = vld [vmem:[%s1391 + $0x18] sm:$0xff]
    %1396 = vmatprep.subr.mxu0 %v505
    %1397 = vmatpush1.msra.mxu0 %v504
    %1398 = vmatprep.subr.mxu0 %v501
    %1399 = vmatpush1.msra.mxu0 %v500
    %1400 = vmatprep.subr.mxu0 %v497
    %1401 = vmatpush1.msra.mxu0 %v496
    %1402 = vmatprep.subr.mxu0 %v493
    %1403 = vmatpush1.msra.mxu0 %v492
    %1404 = vmatprep.subr.mxu0 %v489
    %1405 = vmatpush1.msra.mxu0 %v488
    %1406 = vmatprep.subr.mxu0 %v485
    %1407 = vmatpush1.msra.mxu0 %v484
    %1408 = vmatprep.subr.mxu0 %v481
    %1409 = vmatpush1.msra.mxu0 %v480
    %1410 = vmatprep.subr.mxu0 %v477
    %1411 = vmatpush1.msra.mxu0 %v476
    %1412 = vmatprep.subr.mxu0 %v473
    %1413 = vmatpush1.msra.mxu0 %v472
    %1414 = vmatprep.subr.mxu0 %v469
    %1415 = vmatpush1.msra.mxu0 %v468
    %1416 = vmatprep.subr.mxu0 %v465
    %1417 = vmatpush1.msra.mxu0 %v464
    %1418 = vmatprep.subr.mxu0 %v461
    %1419 = vmatpush1.msra.mxu0 %v460
    %1420 = vmatprep.subr.mxu0 %v457
    %1421 = vmatpush1.msra.mxu0 %v456
    %1422 = vmatprep.subr.mxu0 %v453
    %1423 = vmatpush1.msra.mxu0 %v452
    %1424 = vmatprep.subr.mxu0 %v449
    %1425 = vmatpush1.msra.mxu0 %v448
    %1426 = vmatprep.subr.mxu0 %v445
    %1427 = vmatpush1.msra.mxu0 %v444
    %1428 = vmatprep.subr.mxu0 0.0
    %1429 = vmatpush2.msra.mxu0 0.0
    %1430 = vmatprep.subr.mxu0 0.0
    %1431 = vmatpush2.msra.mxu0 0.0
    %1432 = vmatprep.subr.mxu0 0.0
    %1433 = vmatpush2.msra.mxu0 0.0
    %1434 = vmatprep.subr.mxu0 0.0
    %1435 = vmatpush2.msra.mxu0 0.0
    %1436 = vmatprep.subr.mxu0 0.0
    %1437 = vmatpush2.msra.mxu0 0.0
    %1438 = vmatprep.subr.mxu0 0.0
    %1439 = vmatpush2.msra.mxu0 0.0
    %1440 = vmatprep.subr.mxu0 0.0
    %1441 = vmatpush2.msra.mxu0 0.0
    %1442 = vmatprep.subr.mxu0 0.0
    %1443 = vmatpush2.msra.mxu0 0.0
    %1444 = vmatprep.subr.mxu0 0.0
    %1445 = vmatpush2.msra.mxu0 0.0
    %1446 = vmatprep.subr.mxu0 0.0
    %1447 = vmatpush2.msra.mxu0 0.0
    %1448 = vmatprep.subr.mxu0 0.0
    %1449 = vmatpush2.msra.mxu0 0.0
    %1450 = vmatprep.subr.mxu0 0.0
    %1451 = vmatpush2.msra.mxu0 0.0
    %1452 = vmatprep.subr.mxu0 0.0
    %1453 = vmatpush2.msra.mxu0 0.0
    %1454 = vmatprep.subr.mxu0 0.0
    %1455 = vmatpush2.msra.mxu0 0.0
    %1456 = vmatprep.subr.mxu0 0.0
    %1457 = vmatpush2.msra.mxu0 0.0
    %1458 = vmatprep.subr.mxu0 0.0
    %1459 = vmatpush2.msra.mxu0 0.0
    %1460 = vmatprep.mubr.f32.mxu0 0.0
    %1461 = vmatmul.mubr.f32.gmra.mxu0 %v1388
    %v1462 = vpop.f32.mrf.mxu0
    %v1463 = vadd.f32 0.0, %v1462
    %v1464 = vpop.f32.mrf.mxu0
    %v1465 = vadd.f32 0.0, %v1464
    %1466 = vdwg.mxu0
    %1467 = vmatprep.subr.mxu0 %v507
    %1468 = vmatpush1.msra.mxu0 %v506
    %1469 = vmatprep.subr.mxu0 %v503
    %1470 = vmatpush1.msra.mxu0 %v502
    %1471 = vmatprep.subr.mxu0 %v499
    %1472 = vmatpush1.msra.mxu0 %v498
    %1473 = vmatprep.subr.mxu0 %v495
    %1474 = vmatpush1.msra.mxu0 %v494
    %1475 = vmatprep.subr.mxu0 %v491
    %1476 = vmatpush1.msra.mxu0 %v490
    %1477 = vmatprep.subr.mxu0 %v487
    %1478 = vmatpush1.msra.mxu0 %v486
    %1479 = vmatprep.subr.mxu0 %v483
    %1480 = vmatpush1.msra.mxu0 %v482
    %1481 = vmatprep.subr.mxu0 %v479
    %1482 = vmatpush1.msra.mxu0 %v478
    %1483 = vmatprep.subr.mxu0 %v475
    %1484 = vmatpush1.msra.mxu0 %v474
    %1485 = vmatprep.subr.mxu0 %v471
    %1486 = vmatpush1.msra.mxu0 %v470
    %1487 = vmatprep.subr.mxu0 %v467
    %1488 = vmatpush1.msra.mxu0 %v466
    %1489 = vmatprep.subr.mxu0 %v463
    %1490 = vmatpush1.msra.mxu0 %v462
    %1491 = vmatprep.subr.mxu0 %v459
    %1492 = vmatpush1.msra.mxu0 %v458
    %1493 = vmatprep.subr.mxu0 %v455
    %1494 = vmatpush1.msra.mxu0 %v454
    %1495 = vmatprep.subr.mxu0 %v451
    %1496 = vmatpush1.msra.mxu0 %v450
    %1497 = vmatprep.subr.mxu0 %v447
    %1498 = vmatpush1.msra.mxu0 %v446
    %1499 = vmatprep.subr.mxu0 0.0
    %1500 = vmatpush2.msra.mxu0 0.0
    %1501 = vmatprep.subr.mxu0 0.0
    %1502 = vmatpush2.msra.mxu0 0.0
    %1503 = vmatprep.subr.mxu0 0.0
    %1504 = vmatpush2.msra.mxu0 0.0
    %1505 = vmatprep.subr.mxu0 0.0
    %1506 = vmatpush2.msra.mxu0 0.0
    %1507 = vmatprep.subr.mxu0 0.0
    %1508 = vmatpush2.msra.mxu0 0.0
    %1509 = vmatprep.subr.mxu0 0.0
    %1510 = vmatpush2.msra.mxu0 0.0
    %1511 = vmatprep.subr.mxu0 0.0
    %1512 = vmatpush2.msra.mxu0 0.0
    %1513 = vmatprep.subr.mxu0 0.0
    %1514 = vmatpush2.msra.mxu0 0.0
    %1515 = vmatprep.subr.mxu0 0.0
    %1516 = vmatpush2.msra.mxu0 0.0
    %1517 = vmatprep.subr.mxu0 0.0
    %1518 = vmatpush2.msra.mxu0 0.0
    %1519 = vmatprep.subr.mxu0 0.0
    %1520 = vmatpush2.msra.mxu0 0.0
    %1521 = vmatprep.subr.mxu0 0.0
    %1522 = vmatpush2.msra.mxu0 0.0
    %1523 = vmatprep.subr.mxu0 0.0
    %1524 = vmatpush2.msra.mxu0 0.0
    %1525 = vmatprep.subr.mxu0 0.0
    %1526 = vmatpush2.msra.mxu0 0.0
    %1527 = vmatprep.subr.mxu0 0.0
    %1528 = vmatpush2.msra.mxu0 0.0
    %1529 = vmatprep.subr.mxu0 0.0
    %1530 = vmatpush2.msra.mxu0 0.0
    %1531 = vmatprep.mubr.f32.mxu0 0.0
    %1532 = vmatmul.mubr.f32.gmra.mxu0 %v1388
    %v1533 = vpop.f32.mrf.mxu0
    %v1534 = vadd.f32 0.0, %v1533
    %v1535 = vpop.f32.mrf.mxu0
    %v1536 = vadd.f32 0.0, %v1535
    %1537 = vdwg.mxu0
    %v1538 = vadd.f32 %v1392, %v1463
    %v1539 = vadd.f32 %v1393, %v1465
    %v1540 = vadd.f32 %v1394, %v1534
    %v1541 = vadd.f32 %v1395, %v1536
    %v1542 = vxor.u32 %v1538, 2147483648
    %v1543 = vmul.f32 %v1542, 1.442695
    %v1544 = vpow.pop %v1543
    %v1545 = vadd.f32 %v1544, 1.0
    %v1546 = vrcp.pop %v1545
    %v1547 = vmul.f32 1.0, %v1546
    %v1548 = vxor.u32 %v1539, 2147483648
    %v1549 = vmul.f32 %v1548, 1.442695
    %v1550 = vpow.pop %v1549
    %v1551 = vadd.f32 %v1550, 1.0
    %v1552 = vrcp.pop %v1551
    %v1553 = vmul.f32 1.0, %v1552
    %v1554 = vtanh.pop %v1540
    %v1555 = vxor.u32 %v1541, 2147483648
    %v1556 = vmul.f32 %v1555, 1.442695
    %v1557 = vpow.pop %v1556
    %v1558 = vadd.f32 %v1557, 1.0
    %v1559 = vrcp.pop %v1558
    %v1560 = vmul.f32 1.0, %v1559
    %v1561 = vmul.f32 %v1553, %v1386
    %v1562 = vmul.f32 %v1547, %v1554
    %v1563 = vadd.f32 %v1561, %v1562
    %v1564 = vtanh.pop %v1563
    %v1565 = vmul.f32 %v1560, %v1564
    %s1566 = scalar_lea.vmem [#allocation3], 40
    %1567 = vst [vmem:[%s1566] sm:$0xff] %v1565
    %s1568 = scalar_lea.vmem [#allocation2], 192
    %v1569 = vld [vmem:[%s1568] sm:$0xff]
    %v1570 = vld [vmem:[%s1568 + $0x8] sm:$0xff]
    %v1571 = vld [vmem:[%s1568 + $0x10] sm:$0xff]
    %v1572 = vld [vmem:[%s1568 + $0x18] sm:$0xff]
    %1573 = vmatprep.subr.mxu0 %v505
    %1574 = vmatpush1.msra.mxu0 %v504
    %1575 = vmatprep.subr.mxu0 %v501
    %1576 = vmatpush1.msra.mxu0 %v500
    %1577 = vmatprep.subr.mxu0 %v497
    %1578 = vmatpush1.msra.mxu0 %v496
    %1579 = vmatprep.subr.mxu0 %v493
    %1580 = vmatpush1.msra.mxu0 %v492
    %1581 = vmatprep.subr.mxu0 %v489
    %1582 = vmatpush1.msra.mxu0 %v488
    %1583 = vmatprep.subr.mxu0 %v485
    %1584 = vmatpush1.msra.mxu0 %v484
    %1585 = vmatprep.subr.mxu0 %v481
    %1586 = vmatpush1.msra.mxu0 %v480
    %1587 = vmatprep.subr.mxu0 %v477
    %1588 = vmatpush1.msra.mxu0 %v476
    %1589 = vmatprep.subr.mxu0 %v473
    %1590 = vmatpush1.msra.mxu0 %v472
    %1591 = vmatprep.subr.mxu0 %v469
    %1592 = vmatpush1.msra.mxu0 %v468
    %1593 = vmatprep.subr.mxu0 %v465
    %1594 = vmatpush1.msra.mxu0 %v464
    %1595 = vmatprep.subr.mxu0 %v461
    %1596 = vmatpush1.msra.mxu0 %v460
    %1597 = vmatprep.subr.mxu0 %v457
    %1598 = vmatpush1.msra.mxu0 %v456
    %1599 = vmatprep.subr.mxu0 %v453
    %1600 = vmatpush1.msra.mxu0 %v452
    %1601 = vmatprep.subr.mxu0 %v449
    %1602 = vmatpush1.msra.mxu0 %v448
    %1603 = vmatprep.subr.mxu0 %v445
    %1604 = vmatpush1.msra.mxu0 %v444
    %1605 = vmatprep.subr.mxu0 0.0
    %1606 = vmatpush2.msra.mxu0 0.0
    %1607 = vmatprep.subr.mxu0 0.0
    %1608 = vmatpush2.msra.mxu0 0.0
    %1609 = vmatprep.subr.mxu0 0.0
    %1610 = vmatpush2.msra.mxu0 0.0
    %1611 = vmatprep.subr.mxu0 0.0
    %1612 = vmatpush2.msra.mxu0 0.0
    %1613 = vmatprep.subr.mxu0 0.0
    %1614 = vmatpush2.msra.mxu0 0.0
    %1615 = vmatprep.subr.mxu0 0.0
    %1616 = vmatpush2.msra.mxu0 0.0
    %1617 = vmatprep.subr.mxu0 0.0
    %1618 = vmatpush2.msra.mxu0 0.0
    %1619 = vmatprep.subr.mxu0 0.0
    %1620 = vmatpush2.msra.mxu0 0.0
    %1621 = vmatprep.subr.mxu0 0.0
    %1622 = vmatpush2.msra.mxu0 0.0
    %1623 = vmatprep.subr.mxu0 0.0
    %1624 = vmatpush2.msra.mxu0 0.0
    %1625 = vmatprep.subr.mxu0 0.0
    %1626 = vmatpush2.msra.mxu0 0.0
    %1627 = vmatprep.subr.mxu0 0.0
    %1628 = vmatpush2.msra.mxu0 0.0
    %1629 = vmatprep.subr.mxu0 0.0
    %1630 = vmatpush2.msra.mxu0 0.0
    %1631 = vmatprep.subr.mxu0 0.0
    %1632 = vmatpush2.msra.mxu0 0.0
    %1633 = vmatprep.subr.mxu0 0.0
    %1634 = vmatpush2.msra.mxu0 0.0
    %1635 = vmatprep.subr.mxu0 0.0
    %1636 = vmatpush2.msra.mxu0 0.0
    %1637 = vmatprep.mubr.f32.mxu0 0.0
    %1638 = vmatmul.mubr.f32.gmra.mxu0 %v1565
    %v1639 = vpop.f32.mrf.mxu0
    %v1640 = vadd.f32 0.0, %v1639
    %v1641 = vpop.f32.mrf.mxu0
    %v1642 = vadd.f32 0.0, %v1641
    %1643 = vdwg.mxu0
    %1644 = vmatprep.subr.mxu0 %v507
    %1645 = vmatpush1.msra.mxu0 %v506
    %1646 = vmatprep.subr.mxu0 %v503
    %1647 = vmatpush1.msra.mxu0 %v502
    %1648 = vmatprep.subr.mxu0 %v499
    %1649 = vmatpush1.msra.mxu0 %v498
    %1650 = vmatprep.subr.mxu0 %v495
    %1651 = vmatpush1.msra.mxu0 %v494
    %1652 = vmatprep.subr.mxu0 %v491
    %1653 = vmatpush1.msra.mxu0 %v490
    %1654 = vmatprep.subr.mxu0 %v487
    %1655 = vmatpush1.msra.mxu0 %v486
    %1656 = vmatprep.subr.mxu0 %v483
    %1657 = vmatpush1.msra.mxu0 %v482
    %1658 = vmatprep.subr.mxu0 %v479
    %1659 = vmatpush1.msra.mxu0 %v478
    %1660 = vmatprep.subr.mxu0 %v475
    %1661 = vmatpush1.msra.mxu0 %v474
    %1662 = vmatprep.subr.mxu0 %v471
    %1663 = vmatpush1.msra.mxu0 %v470
    %1664 = vmatprep.subr.mxu0 %v467
    %1665 = vmatpush1.msra.mxu0 %v466
    %1666 = vmatprep.subr.mxu0 %v463
    %1667 = vmatpush1.msra.mxu0 %v462
    %1668 = vmatprep.subr.mxu0 %v459
    %1669 = vmatpush1.msra.mxu0 %v458
    %1670 = vmatprep.subr.mxu0 %v455
    %1671 = vmatpush1.msra.mxu0 %v454
    %1672 = vmatprep.subr.mxu0 %v451
    %1673 = vmatpush1.msra.mxu0 %v450
    %1674 = vmatprep.subr.mxu0 %v447
    %1675 = vmatpush1.msra.mxu0 %v446
    %1676 = vmatprep.subr.mxu0 0.0
    %1677 = vmatpush2.msra.mxu0 0.0
    %1678 = vmatprep.subr.mxu0 0.0
    %1679 = vmatpush2.msra.mxu0 0.0
    %1680 = vmatprep.subr.mxu0 0.0
    %1681 = vmatpush2.msra.mxu0 0.0
    %1682 = vmatprep.subr.mxu0 0.0
    %1683 = vmatpush2.msra.mxu0 0.0
    %1684 = vmatprep.subr.mxu0 0.0
    %1685 = vmatpush2.msra.mxu0 0.0
    %1686 = vmatprep.subr.mxu0 0.0
    %1687 = vmatpush2.msra.mxu0 0.0
    %1688 = vmatprep.subr.mxu0 0.0
    %1689 = vmatpush2.msra.mxu0 0.0
    %1690 = vmatprep.subr.mxu0 0.0
    %1691 = vmatpush2.msra.mxu0 0.0
    %1692 = vmatprep.subr.mxu0 0.0
    %1693 = vmatpush2.msra.mxu0 0.0
    %1694 = vmatprep.subr.mxu0 0.0
    %1695 = vmatpush2.msra.mxu0 0.0
    %1696 = vmatprep.subr.mxu0 0.0
    %1697 = vmatpush2.msra.mxu0 0.0
    %1698 = vmatprep.subr.mxu0 0.0
    %1699 = vmatpush2.msra.mxu0 0.0
    %1700 = vmatprep.subr.mxu0 0.0
    %1701 = vmatpush2.msra.mxu0 0.0
    %1702 = vmatprep.subr.mxu0 0.0
    %1703 = vmatpush2.msra.mxu0 0.0
    %1704 = vmatprep.subr.mxu0 0.0
    %1705 = vmatpush2.msra.mxu0 0.0
    %1706 = vmatprep.subr.mxu0 0.0
    %1707 = vmatpush2.msra.mxu0 0.0
    %1708 = vmatprep.mubr.f32.mxu0 0.0
    %1709 = vmatmul.mubr.f32.gmra.mxu0 %v1565
    %v1710 = vpop.f32.mrf.mxu0
    %v1711 = vadd.f32 0.0, %v1710
    %v1712 = vpop.f32.mrf.mxu0
    %v1713 = vadd.f32 0.0, %v1712
    %1714 = vdwg.mxu0
    %v1715 = vadd.f32 %v1569, %v1640
    %v1716 = vadd.f32 %v1570, %v1642
    %v1717 = vadd.f32 %v1571, %v1711
    %v1718 = vadd.f32 %v1572, %v1713
    %v1719 = vxor.u32 %v1715, 2147483648
    %v1720 = vmul.f32 %v1719, 1.442695
    %v1721 = vpow.pop %v1720
    %v1722 = vadd.f32 %v1721, 1.0
    %v1723 = vrcp.pop %v1722
    %v1724 = vmul.f32 1.0, %v1723
    %v1725 = vxor.u32 %v1716, 2147483648
    %v1726 = vmul.f32 %v1725, 1.442695
    %v1727 = vpow.pop %v1726
    %v1728 = vadd.f32 %v1727, 1.0
    %v1729 = vrcp.pop %v1728
    %v1730 = vmul.f32 1.0, %v1729
    %v1731 = vtanh.pop %v1717
    %v1732 = vxor.u32 %v1718, 2147483648
    %v1733 = vmul.f32 %v1732, 1.442695
    %v1734 = vpow.pop %v1733
    %v1735 = vadd.f32 %v1734, 1.0
    %v1736 = vrcp.pop %v1735
    %v1737 = vmul.f32 1.0, %v1736
    %v1738 = vmul.f32 %v1730, %v1563
    %v1739 = vmul.f32 %v1724, %v1731
    %v1740 = vadd.f32 %v1738, %v1739
    %v1741 = vtanh.pop %v1740
    %v1742 = vmul.f32 %v1737, %v1741
    %s1743 = scalar_lea.vmem [#allocation3], 48
    %1744 = vst [vmem:[%s1743] sm:$0xff] %v1742
    %s1745 = scalar_lea.vmem [#allocation2], 224
    %v1746 = vld [vmem:[%s1745] sm:$0xff]
    %v1747 = vld [vmem:[%s1745 + $0x8] sm:$0xff]
    %v1748 = vld [vmem:[%s1745 + $0x10] sm:$0xff]
    %v1749 = vld [vmem:[%s1745 + $0x18] sm:$0xff]
    %1750 = vmatprep.subr.mxu0 %v505
    %1751 = vmatpush1.msra.mxu0 %v504
    %1752 = vmatprep.subr.mxu0 %v501
    %1753 = vmatpush1.msra.mxu0 %v500
    %1754 = vmatprep.subr.mxu0 %v497
    %1755 = vmatpush1.msra.mxu0 %v496
    %1756 = vmatprep.subr.mxu0 %v493
    %1757 = vmatpush1.msra.mxu0 %v492
    %1758 = vmatprep.subr.mxu0 %v489
    %1759 = vmatpush1.msra.mxu0 %v488
    %1760 = vmatprep.subr.mxu0 %v485
    %1761 = vmatpush1.msra.mxu0 %v484
    %1762 = vmatprep.subr.mxu0 %v481
    %1763 = vmatpush1.msra.mxu0 %v480
    %1764 = vmatprep.subr.mxu0 %v477
    %1765 = vmatpush1.msra.mxu0 %v476
    %1766 = vmatprep.subr.mxu0 %v473
    %1767 = vmatpush1.msra.mxu0 %v472
    %1768 = vmatprep.subr.mxu0 %v469
    %1769 = vmatpush1.msra.mxu0 %v468
    %1770 = vmatprep.subr.mxu0 %v465
    %1771 = vmatpush1.msra.mxu0 %v464
    %1772 = vmatprep.subr.mxu0 %v461
    %1773 = vmatpush1.msra.mxu0 %v460
    %1774 = vmatprep.subr.mxu0 %v457
    %1775 = vmatpush1.msra.mxu0 %v456
    %1776 = vmatprep.subr.mxu0 %v453
    %1777 = vmatpush1.msra.mxu0 %v452
    %1778 = vmatprep.subr.mxu0 %v449
    %1779 = vmatpush1.msra.mxu0 %v448
    %1780 = vmatprep.subr.mxu0 %v445
    %1781 = vmatpush1.msra.mxu0 %v444
    %1782 = vmatprep.subr.mxu0 0.0
    %1783 = vmatpush2.msra.mxu0 0.0
    %1784 = vmatprep.subr.mxu0 0.0
    %1785 = vmatpush2.msra.mxu0 0.0
    %1786 = vmatprep.subr.mxu0 0.0
    %1787 = vmatpush2.msra.mxu0 0.0
    %1788 = vmatprep.subr.mxu0 0.0
    %1789 = vmatpush2.msra.mxu0 0.0
    %1790 = vmatprep.subr.mxu0 0.0
    %1791 = vmatpush2.msra.mxu0 0.0
    %1792 = vmatprep.subr.mxu0 0.0
    %1793 = vmatpush2.msra.mxu0 0.0
    %1794 = vmatprep.subr.mxu0 0.0
    %1795 = vmatpush2.msra.mxu0 0.0
    %1796 = vmatprep.subr.mxu0 0.0
    %1797 = vmatpush2.msra.mxu0 0.0
    %1798 = vmatprep.subr.mxu0 0.0
    %1799 = vmatpush2.msra.mxu0 0.0
    %1800 = vmatprep.subr.mxu0 0.0
    %1801 = vmatpush2.msra.mxu0 0.0
    %1802 = vmatprep.subr.mxu0 0.0
    %1803 = vmatpush2.msra.mxu0 0.0
    %1804 = vmatprep.subr.mxu0 0.0
    %1805 = vmatpush2.msra.mxu0 0.0
    %1806 = vmatprep.subr.mxu0 0.0
    %1807 = vmatpush2.msra.mxu0 0.0
    %1808 = vmatprep.subr.mxu0 0.0
    %1809 = vmatpush2.msra.mxu0 0.0
    %1810 = vmatprep.subr.mxu0 0.0
    %1811 = vmatpush2.msra.mxu0 0.0
    %1812 = vmatprep.subr.mxu0 0.0
    %1813 = vmatpush2.msra.mxu0 0.0
    %1814 = vmatprep.mubr.f32.mxu0 0.0
    %1815 = vmatmul.mubr.f32.gmra.mxu0 %v1742
    %v1816 = vpop.f32.mrf.mxu0
    %v1817 = vadd.f32 0.0, %v1816
    %v1818 = vpop.f32.mrf.mxu0
    %v1819 = vadd.f32 0.0, %v1818
    %1820 = vdwg.mxu0
    %1821 = vmatprep.subr.mxu0 %v507
    %1822 = vmatpush1.msra.mxu0 %v506
    %1823 = vmatprep.subr.mxu0 %v503
    %1824 = vmatpush1.msra.mxu0 %v502
    %1825 = vmatprep.subr.mxu0 %v499
    %1826 = vmatpush1.msra.mxu0 %v498
    %1827 = vmatprep.subr.mxu0 %v495
    %1828 = vmatpush1.msra.mxu0 %v494
    %1829 = vmatprep.subr.mxu0 %v491
    %1830 = vmatpush1.msra.mxu0 %v490
    %1831 = vmatprep.subr.mxu0 %v487
    %1832 = vmatpush1.msra.mxu0 %v486
    %1833 = vmatprep.subr.mxu0 %v483
    %1834 = vmatpush1.msra.mxu0 %v482
    %1835 = vmatprep.subr.mxu0 %v479
    %1836 = vmatpush1.msra.mxu0 %v478
    %1837 = vmatprep.subr.mxu0 %v475
    %1838 = vmatpush1.msra.mxu0 %v474
    %1839 = vmatprep.subr.mxu0 %v471
    %1840 = vmatpush1.msra.mxu0 %v470
    %1841 = vmatprep.subr.mxu0 %v467
    %1842 = vmatpush1.msra.mxu0 %v466
    %1843 = vmatprep.subr.mxu0 %v463
    %1844 = vmatpush1.msra.mxu0 %v462
    %1845 = vmatprep.subr.mxu0 %v459
    %1846 = vmatpush1.msra.mxu0 %v458
    %1847 = vmatprep.subr.mxu0 %v455
    %1848 = vmatpush1.msra.mxu0 %v454
    %1849 = vmatprep.subr.mxu0 %v451
    %1850 = vmatpush1.msra.mxu0 %v450
    %1851 = vmatprep.subr.mxu0 %v447
    %1852 = vmatpush1.msra.mxu0 %v446
    %1853 = vmatprep.subr.mxu0 0.0
    %1854 = vmatpush2.msra.mxu0 0.0
    %1855 = vmatprep.subr.mxu0 0.0
    %1856 = vmatpush2.msra.mxu0 0.0
    %1857 = vmatprep.subr.mxu0 0.0
    %1858 = vmatpush2.msra.mxu0 0.0
    %1859 = vmatprep.subr.mxu0 0.0
    %1860 = vmatpush2.msra.mxu0 0.0
    %1861 = vmatprep.subr.mxu0 0.0
    %1862 = vmatpush2.msra.mxu0 0.0
    %1863 = vmatprep.subr.mxu0 0.0
    %1864 = vmatpush2.msra.mxu0 0.0
    %1865 = vmatprep.subr.mxu0 0.0
    %1866 = vmatpush2.msra.mxu0 0.0
    %1867 = vmatprep.subr.mxu0 0.0
    %1868 = vmatpush2.msra.mxu0 0.0
    %1869 = vmatprep.subr.mxu0 0.0
    %1870 = vmatpush2.msra.mxu0 0.0
    %1871 = vmatprep.subr.mxu0 0.0
    %1872 = vmatpush2.msra.mxu0 0.0
    %1873 = vmatprep.subr.mxu0 0.0
    %1874 = vmatpush2.msra.mxu0 0.0
    %1875 = vmatprep.subr.mxu0 0.0
    %1876 = vmatpush2.msra.mxu0 0.0
    %1877 = vmatprep.subr.mxu0 0.0
    %1878 = vmatpush2.msra.mxu0 0.0
    %1879 = vmatprep.subr.mxu0 0.0
    %1880 = vmatpush2.msra.mxu0 0.0
    %1881 = vmatprep.subr.mxu0 0.0
    %1882 = vmatpush2.msra.mxu0 0.0
    %1883 = vmatprep.subr.mxu0 0.0
    %1884 = vmatpush2.msra.mxu0 0.0
    %1885 = vmatprep.mubr.f32.mxu0 0.0
    %1886 = vmatmul.mubr.f32.gmra.mxu0 %v1742
    %v1887 = vpop.f32.mrf.mxu0
    %v1888 = vadd.f32 0.0, %v1887
    %v1889 = vpop.f32.mrf.mxu0
    %v1890 = vadd.f32 0.0, %v1889
    %1891 = vdwg.mxu0
    %v1892 = vadd.f32 %v1746, %v1817
    %v1893 = vadd.f32 %v1747, %v1819
    %v1894 = vadd.f32 %v1748, %v1888
    %v1895 = vadd.f32 %v1749, %v1890
    %v1896 = vxor.u32 %v1892, 2147483648
    %v1897 = vmul.f32 %v1896, 1.442695
    %v1898 = vpow.pop %v1897
    %v1899 = vadd.f32 %v1898, 1.0
    %v1900 = vrcp.pop %v1899
    %v1901 = vmul.f32 1.0, %v1900
    %v1902 = vxor.u32 %v1893, 2147483648
    %v1903 = vmul.f32 %v1902, 1.442695
    %v1904 = vpow.pop %v1903
    %v1905 = vadd.f32 %v1904, 1.0
    %v1906 = vrcp.pop %v1905
    %v1907 = vmul.f32 1.0, %v1906
    %v1908 = vtanh.pop %v1894
    %v1909 = vxor.u32 %v1895, 2147483648
    %v1910 = vmul.f32 %v1909, 1.442695
    %v1911 = vpow.pop %v1910
    %v1912 = vadd.f32 %v1911, 1.0
    %v1913 = vrcp.pop %v1912
    %v1914 = vmul.f32 1.0, %v1913
    %v1915 = vmul.f32 %v1907, %v1740
    %v1916 = vmul.f32 %v1901, %v1908
    %v1917 = vadd.f32 %v1915, %v1916
    %v1918 = vtanh.pop %v1917
    %v1919 = vmul.f32 %v1914, %v1918
    %s1920 = scalar_lea.vmem [#allocation3], 56
    %1921 = vst [vmem:[%s1920] sm:$0xff] %v1919
    %v1922 = vld [vmem:[#allocation3] sm:$0xff]
    %v1923 = vld [vmem:[#allocation3 + $0x8] sm:$0xff]
    %v1924 = vld [vmem:[#allocation3 + $0x10] sm:$0xff]
    %v1925 = vld [vmem:[#allocation3 + $0x18] sm:$0xff]
    %v1926 = vld [vmem:[#allocation3 + $0x20] sm:$0xff]
    %v1927 = vld [vmem:[#allocation3 + $0x28] sm:$0xff]
    %v1928 = vld [vmem:[#allocation3 + $0x30] sm:$0xff]
    %v1929 = vld [vmem:[#allocation3 + $0x38] sm:$0xff]
    %v1930 = vld [vmem:[#allocation10] sm:$0xff]
    %v1931 = vld [vmem:[#allocation10 + $0x8] sm:$0xff]
    %v1932 = vld [vmem:[#allocation10 + $0x10] sm:$0xff]
    %v1933 = vld [vmem:[#allocation10 + $0x18] sm:$0xff]
    %v1934 = vld [vmem:[%s5] sm:$0x1]
    %v1936 = vlaneseq
    %v1937 = vshrl.u32 %v1936, 7
    %v1938 = vsub.s32 0, %v1937
    %v1939 = vrot.slane %v1934, %v1938
    %1941 = vmatprep.subr.mxu0 0.0
    %1942 = vmatpush1.msra.mxu0 0.0
    %1943 = vmatprep.subr.mxu0 0.0
    %1944 = vmatpush1.msra.mxu0 0.0
    %1945 = vmatprep.subr.mxu0 0.0
    %1946 = vmatpush1.msra.mxu0 0.0
    %1947 = vmatprep.subr.mxu0 0.0
    %1948 = vmatpush1.msra.mxu0 0.0
    %1949 = vmatprep.subr.mxu0 0.0
    %1950 = vmatpush1.msra.mxu0 0.0
    %1951 = vmatprep.subr.mxu0 0.0
    %1952 = vmatpush1.msra.mxu0 0.0
    %1953 = vmatprep.subr.mxu0 0.0
    %1954 = vmatpush1.msra.mxu0 0.0
    %1955 = vmatprep.subr.mxu0 0.0
    %1956 = vmatpush1.msra.mxu0 0.0
    %1957 = vmatprep.subr.mxu0 0.0
    %1958 = vmatpush1.msra.mxu0 0.0
    %1959 = vmatprep.subr.mxu0 0.0
    %1960 = vmatpush1.msra.mxu0 0.0
    %1961 = vmatprep.subr.mxu0 0.0
    %1962 = vmatpush1.msra.mxu0 0.0
    %1963 = vmatprep.subr.mxu0 0.0
    %1964 = vmatpush1.msra.mxu0 0.0
    %1965 = vmatprep.subr.mxu0 0.0
    %1966 = vmatpush1.msra.mxu0 %v1933
    %1967 = vmatprep.subr.mxu0 0.0
    %1968 = vmatpush1.msra.mxu0 %v1932
    %1969 = vmatprep.subr.mxu0 0.0
    %1970 = vmatpush1.msra.mxu0 %v1931
    %1971 = vmatprep.subr.mxu0 0.0
    %1972 = vmatpush1.msra.mxu0 %v1930
    %1973 = vmatprep.subr.mxu0 0.0
    %1974 = vmatpush2.msra.mxu0 0.0
    %1975 = vmatprep.subr.mxu0 0.0
    %1976 = vmatpush2.msra.mxu0 0.0
    %1977 = vmatprep.subr.mxu0 0.0
    %1978 = vmatpush2.msra.mxu0 0.0
    %1979 = vmatprep.subr.mxu0 0.0
    %1980 = vmatpush2.msra.mxu0 0.0
    %1981 = vmatprep.subr.mxu0 0.0
    %1982 = vmatpush2.msra.mxu0 0.0
    %1983 = vmatprep.subr.mxu0 0.0
    %1984 = vmatpush2.msra.mxu0 0.0
    %1985 = vmatprep.subr.mxu0 0.0
    %1986 = vmatpush2.msra.mxu0 0.0
    %1987 = vmatprep.subr.mxu0 0.0
    %1988 = vmatpush2.msra.mxu0 0.0
    %1989 = vmatprep.subr.mxu0 0.0
    %1990 = vmatpush2.msra.mxu0 0.0
    %1991 = vmatprep.subr.mxu0 0.0
    %1992 = vmatpush2.msra.mxu0 0.0
    %1993 = vmatprep.subr.mxu0 0.0
    %1994 = vmatpush2.msra.mxu0 0.0
    %1995 = vmatprep.subr.mxu0 0.0
    %1996 = vmatpush2.msra.mxu0 0.0
    %1997 = vmatprep.subr.mxu0 0.0
    %1998 = vmatpush2.msra.mxu0 0.0
    %1999 = vmatprep.subr.mxu0 0.0
    %2000 = vmatpush2.msra.mxu0 0.0
    %2001 = vmatprep.subr.mxu0 0.0
    %2002 = vmatpush2.msra.mxu0 0.0
    %2003 = vmatprep.subr.mxu0 0.0
    %2004 = vmatpush2.msra.mxu0 0.0
    %2005 = vmatprep.mubr.f32.mxu0 0.0
    %2006 = vmatmul.mubr.f32.gmra.mxu0 %v163
    %v2007 = vpop.f32.mrf.mxu0
    %v2008 = vadd.f32 %v1939, %v2007
    %v2009 = vpop.f32.mrf.mxu0
    %2010 = vmatprep.mubr.f32.mxu0 0.0
    %2011 = vmatmul.mubr.f32.gmra.mxu0 %v166
    %v2012 = vpop.f32.mrf.mxu0
    %v2013 = vadd.f32 %v1939, %v2012
    %v2014 = vpop.f32.mrf.mxu0
    %2015 = vmatprep.mubr.f32.mxu0 0.0
    %2016 = vmatmul.mubr.f32.gmra.mxu0 %v169
    %v2017 = vpop.f32.mrf.mxu0
    %v2018 = vadd.f32 %v1939, %v2017
    %v2019 = vpop.f32.mrf.mxu0
    %2020 = vmatprep.mubr.f32.mxu0 0.0
    %2021 = vmatmul.mubr.f32.gmra.mxu0 %v172
    %v2022 = vpop.f32.mrf.mxu0
    %v2023 = vadd.f32 %v1939, %v2022
    %v2024 = vpop.f32.mrf.mxu0
    %2025 = vmatprep.mubr.f32.mxu0 0.0
    %2026 = vmatmul.mubr.f32.gmra.mxu0 %v175
    %v2027 = vpop.f32.mrf.mxu0
    %v2028 = vadd.f32 %v1939, %v2027
    %v2029 = vpop.f32.mrf.mxu0
    %2030 = vmatprep.mubr.f32.mxu0 0.0
    %2031 = vmatmul.mubr.f32.gmra.mxu0 %v178
    %v2032 = vpop.f32.mrf.mxu0
    %v2033 = vadd.f32 %v1939, %v2032
    %v2034 = vpop.f32.mrf.mxu0
    %2035 = vmatprep.mubr.f32.mxu0 0.0
    %2036 = vmatmul.mubr.f32.gmra.mxu0 %v181
    %v2037 = vpop.f32.mrf.mxu0
    %v2038 = vadd.f32 %v1939, %v2037
    %v2039 = vpop.f32.mrf.mxu0
    %2040 = vmatprep.mubr.f32.mxu0 0.0
    %2041 = vmatmul.mubr.f32.gmra.mxu0 %v184
    %v2042 = vpop.f32.mrf.mxu0
    %v2043 = vadd.f32 %v1939, %v2042
    %v2044 = vpop.f32.mrf.mxu0
    %2045 = vdwg.mxu0
    %v2046 = vmul.f32 %v2008, %v2008
    %v2047 = vmul.f32 %v2013, %v2013
    %v2048 = vmul.f32 %v2018, %v2018
    %v2049 = vmul.f32 %v2023, %v2023
    %v2050 = vmul.f32 %v2028, %v2028
    %v2051 = vmul.f32 %v2033, %v2033
    %v2052 = vmul.f32 %v2038, %v2038
    %v2053 = vmul.f32 %v2043, %v2043
    %v2054 = vadd.f32 %v2046, %v2047
    %v2055 = vadd.f32 %v2054, %v2048
    %v2056 = vadd.f32 %v2055, %v2049
    %v2057 = vadd.f32 %v2056, %v2050
    %v2058 = vadd.f32 %v2057, %v2051
    %v2059 = vadd.f32 %v2058, %v2052
    %v2060 = vadd.f32 %v2059, %v2053
    %v2061 = vrsqrt.pop %v2060
    %v2062 = vmul.f32 %v2060, %v2061
    %vm2063 = vcmp.eq.f32.partialorder %v2060, inf
    %v2064 = vsel %vm2063, %v2060, %v2062
    %vm2065 = vcmp.eq.f32.partialorder %v2060, 0.0
    %v2066 = vand.u32 %v2060, 2147483648
    %v2067 = vsel %vm2065, %v2066, %v2064
    %v2068 = vmax.f32 %v2067, 1e-12
    %v2069 = vmul.f32 %v2013, %v1922
    %v2070 = vmul.f32 %v2018, %v1923
    %v2071 = vmul.f32 %v2023, %v1924
    %v2072 = vmul.f32 %v2028, %v1925
    %v2073 = vmul.f32 %v2033, %v1926
    %v2074 = vmul.f32 %v2038, %v1927
    %v2075 = vmul.f32 %v2043, %v1928
    %v2076 = vadd.f32 %v2069, %v2070
    %v2077 = vadd.f32 %v2076, %v2071
    %v2078 = vadd.f32 %v2077, %v2072
    %v2079 = vadd.f32 %v2078, %v2073
    %v2080 = vadd.f32 %v2079, %v2074
    %v2081 = vadd.f32 %v2080, %v2075
    %v2082 = vmul.f32 %v1922, %v1922
    %v2083 = vmul.f32 %v1923, %v1923
    %v2084 = vmul.f32 %v1924, %v1924
    %v2085 = vmul.f32 %v1925, %v1925
    %v2086 = vmul.f32 %v1926, %v1926
    %v2087 = vmul.f32 %v1927, %v1927
    %v2088 = vmul.f32 %v1928, %v1928
    %v2089 = vadd.f32 %v2082, %v2083
    %v2090 = vadd.f32 %v2089, %v2084
    %v2091 = vadd.f32 %v2090, %v2085
    %v2092 = vadd.f32 %v2091, %v2086
    %v2093 = vadd.f32 %v2092, %v2087
    %v2094 = vadd.f32 %v2093, %v2088
    %v2095 = vrsqrt.pop %v2094
    %v2096 = vmul.f32 %v2094, %v2095
    %vm2097 = vcmp.eq.f32.partialorder %v2094, inf
    %v2098 = vsel %vm2097, %v2094, %v2096
    %vm2099 = vcmp.eq.f32.partialorder %v2094, 0.0
    %v2100 = vand.u32 %v2094, 2147483648
    %v2101 = vsel %vm2099, %v2100, %v2098
    %v2102 = vmax.f32 %v2101, 1e-12
    %v2103 = vmul.f32 %v2068, %v2102
    %v2104 = vrcp.pop %v2103
    %v2105 = vmul.f32 %v2081, %v2104
    %v2106 = vmul.f32 %v2008, %v1922
    %v2107 = vmul.f32 %v2013, %v1923
    %v2108 = vmul.f32 %v2018, %v1924
    %v2109 = vmul.f32 %v2023, %v1925
    %v2110 = vmul.f32 %v2028, %v1926
    %v2111 = vmul.f32 %v2033, %v1927
    %v2112 = vmul.f32 %v2038, %v1928
    %v2113 = vmul.f32 %v2043, %v1929
    %v2114 = vadd.f32 %v2106, %v2107
    %v2115 = vadd.f32 %v2114, %v2108
    %v2116 = vadd.f32 %v2115, %v2109
    %v2117 = vadd.f32 %v2116, %v2110
    %v2118 = vadd.f32 %v2117, %v2111
    %v2119 = vadd.f32 %v2118, %v2112
    %v2120 = vadd.f32 %v2119, %v2113
    %v2121 = vmul.f32 %v1929, %v1929
    %v2122 = vadd.f32 %v2094, %v2121
    %v2123 = vrsqrt.pop %v2122
    %v2124 = vmul.f32 %v2122, %v2123
    %vm2125 = vcmp.eq.f32.partialorder %v2122, inf
    %v2126 = vsel %vm2125, %v2122, %v2124
    %vm2127 = vcmp.eq.f32.partialorder %v2122, 0.0
    %v2128 = vand.u32 %v2122, 2147483648
    %v2129 = vsel %vm2127, %v2128, %v2126
    %v2130 = vmax.f32 %v2129, 1e-12
    %v2131 = vmul.f32 %v2068, %v2130
    %v2132 = vrcp.pop %v2131
    %v2133 = vmul.f32 %v2120, %v2132
    %v2134 = vmul.f32 %v2008, %v2105
    %v2135 = vmul.f32 %v2013, %v2105
    %v2136 = vmul.f32 %v2018, %v2105
    %v2137 = vmul.f32 %v2023, %v2105
    %v2138 = vmul.f32 %v2028, %v2105
    %v2139 = vmul.f32 %v2033, %v2105
    %v2140 = vmul.f32 %v2038, %v2105
    %v2141 = vmul.f32 %v2043, %v2105
    %v2142 = vadd.f32 %v2134, %v1922
    %v2143 = vadd.f32 %v2135, %v1923
    %v2144 = vadd.f32 %v2136, %v1924
    %v2145 = vadd.f32 %v2137, %v1925
    %v2146 = vadd.f32 %v2138, %v1926
    %v2147 = vadd.f32 %v2139, %v1927
    %v2148 = vadd.f32 %v2140, %v1928
    %v2149 = vadd.f32 %v2141, %v1929
    %v2150 = vmul.f32 %v2142, %v2133
    %v2151 = vmul.f32 %v2143, %v2133
    %v2152 = vmul.f32 %v2144, %v2133
    %v2153 = vmul.f32 %v2145, %v2133
    %v2154 = vmul.f32 %v2146, %v2133
    %v2155 = vmul.f32 %v2147, %v2133
    %v2156 = vmul.f32 %v2148, %v2133
    %v2157 = vmul.f32 %v2149, %v2133
    %v2158 = vld [vmem:[#allocation12] sm:$0xff]
    %v2159 = vld [vmem:[#allocation12 + $0x8] sm:$0xff]
    %v2160 = vld [vmem:[#allocation12 + $0x10] sm:$0xff]
    %v2161 = vld [vmem:[#allocation12 + $0x18] sm:$0xff]
    %v2162 = vld [vmem:[#allocation12 + $0x20] sm:$0xff]
    %v2163 = vld [vmem:[#allocation12 + $0x28] sm:$0xff]
    %v2164 = vld [vmem:[#allocation12 + $0x30] sm:$0xff]
    %v2165 = vld [vmem:[#allocation12 + $0x38] sm:$0xff]
    %v2166 = vld [vmem:[#allocation12 + $0x40] sm:$0xff]
    %v2167 = vld [vmem:[#allocation12 + $0x48] sm:$0xff]
    %v2168 = vld [vmem:[#allocation12 + $0x50] sm:$0xff]
    %v2169 = vld [vmem:[#allocation12 + $0x58] sm:$0xff]
    %v2170 = vld [vmem:[#allocation12 + $0x60] sm:$0xff]
    %v2171 = vld [vmem:[#allocation12 + $0x68] sm:$0xff]
    %v2172 = vld [vmem:[#allocation12 + $0x70] sm:$0xff]
    %v2173 = vld [vmem:[#allocation12 + $0x78] sm:$0xff]
    %v2174 = vld [vmem:[#allocation13] sm:$0xff]
    %v2175 = vld [vmem:[#allocation13 + $0x8] sm:$0xff]
    %v2176 = vld [vmem:[#allocation13 + $0x10] sm:$0xff]
    %v2177 = vld [vmem:[#allocation13 + $0x18] sm:$0xff]
    %v2178 = vld [vmem:[#allocation13 + $0x20] sm:$0xff]
    %v2179 = vld [vmem:[#allocation13 + $0x28] sm:$0xff]
    %v2180 = vld [vmem:[#allocation13 + $0x30] sm:$0xff]
    %v2181 = vld [vmem:[#allocation13 + $0x38] sm:$0xff]
    %v2182 = vld [vmem:[#allocation13 + $0x40] sm:$0xff]
    %v2183 = vld [vmem:[#allocation13 + $0x48] sm:$0xff]
    %v2184 = vld [vmem:[#allocation13 + $0x50] sm:$0xff]
    %v2185 = vld [vmem:[#allocation13 + $0x58] sm:$0xff]
    %v2186 = vld [vmem:[#allocation13 + $0x60] sm:$0xff]
    %v2187 = vld [vmem:[#allocation13 + $0x68] sm:$0xff]
    %v2188 = vld [vmem:[#allocation13 + $0x70] sm:$0xff]
    %v2189 = vld [vmem:[#allocation13 + $0x78] sm:$0xff]
    %2190 = vmatprep.subr.mxu0 0.0
    %2191 = vmatpush1.msra.mxu0 %v2189
    %2192 = vmatprep.subr.mxu0 0.0
    %2193 = vmatpush1.msra.mxu0 %v2188
    %2194 = vmatprep.subr.mxu0 0.0
    %2195 = vmatpush1.msra.mxu0 %v2187
    %2196 = vmatprep.subr.mxu0 0.0
    %2197 = vmatpush1.msra.mxu0 %v2186
    %2198 = vmatprep.subr.mxu0 0.0
    %2199 = vmatpush1.msra.mxu0 %v2185
    %2200 = vmatprep.subr.mxu0 0.0
    %2201 = vmatpush1.msra.mxu0 %v2184
    %2202 = vmatprep.subr.mxu0 0.0
    %2203 = vmatpush1.msra.mxu0 %v2183
    %2204 = vmatprep.subr.mxu0 0.0
    %2205 = vmatpush1.msra.mxu0 %v2182
    %2206 = vmatprep.subr.mxu0 0.0
    %2207 = vmatpush1.msra.mxu0 %v2181
    %2208 = vmatprep.subr.mxu0 0.0
    %2209 = vmatpush1.msra.mxu0 %v2180
    %2210 = vmatprep.subr.mxu0 0.0
    %2211 = vmatpush1.msra.mxu0 %v2179
    %2212 = vmatprep.subr.mxu0 0.0
    %2213 = vmatpush1.msra.mxu0 %v2178
    %2214 = vmatprep.subr.mxu0 0.0
    %2215 = vmatpush1.msra.mxu0 %v2177
    %2216 = vmatprep.subr.mxu0 0.0
    %2217 = vmatpush1.msra.mxu0 %v2176
    %2218 = vmatprep.subr.mxu0 0.0
    %2219 = vmatpush1.msra.mxu0 %v2175
    %2220 = vmatprep.subr.mxu0 0.0
    %2221 = vmatpush1.msra.mxu0 %v2174
    %2222 = vmatprep.subr.mxu0 0.0
    %2223 = vmatpush2.msra.mxu0 0.0
    %2224 = vmatprep.subr.mxu0 0.0
    %2225 = vmatpush2.msra.mxu0 0.0
    %2226 = vmatprep.subr.mxu0 0.0
    %2227 = vmatpush2.msra.mxu0 0.0
    %2228 = vmatprep.subr.mxu0 0.0
    %2229 = vmatpush2.msra.mxu0 0.0
    %2230 = vmatprep.subr.mxu0 0.0
    %2231 = vmatpush2.msra.mxu0 0.0
    %2232 = vmatprep.subr.mxu0 0.0
    %2233 = vmatpush2.msra.mxu0 0.0
    %2234 = vmatprep.subr.mxu0 0.0
    %2235 = vmatpush2.msra.mxu0 0.0
    %2236 = vmatprep.subr.mxu0 0.0
    %2237 = vmatpush2.msra.mxu0 0.0
    %2238 = vmatprep.subr.mxu0 0.0
    %2239 = vmatpush2.msra.mxu0 0.0
    %2240 = vmatprep.subr.mxu0 0.0
    %2241 = vmatpush2.msra.mxu0 0.0
    %2242 = vmatprep.subr.mxu0 0.0
    %2243 = vmatpush2.msra.mxu0 0.0
    %2244 = vmatprep.subr.mxu0 0.0
    %2245 = vmatpush2.msra.mxu0 0.0
    %2246 = vmatprep.subr.mxu0 0.0
    %2247 = vmatpush2.msra.mxu0 0.0
    %2248 = vmatprep.subr.mxu0 0.0
    %2249 = vmatpush2.msra.mxu0 0.0
    %2250 = vmatprep.subr.mxu0 0.0
    %2251 = vmatpush2.msra.mxu0 0.0
    %2252 = vmatprep.subr.mxu0 0.0
    %2253 = vmatpush2.msra.mxu0 0.0
    %2254 = vmatprep.mubr.f32.mxu0 0.0
    %2255 = vmatmul.mubr.f32.gmra.mxu0 %v1922
    %v2256 = vpop.f32.mrf.mxu0
    %v2257 = vadd.f32 0.0, %v2256
    %v2258 = vpop.f32.mrf.mxu0
    %2259 = vmatprep.mubr.f32.mxu0 0.0
    %2260 = vmatmul.mubr.f32.gmra.mxu0 %v1923
    %v2261 = vpop.f32.mrf.mxu0
    %v2262 = vadd.f32 0.0, %v2261
    %v2263 = vpop.f32.mrf.mxu0
    %2264 = vmatprep.mubr.f32.mxu0 0.0
    %2265 = vmatmul.mubr.f32.gmra.mxu0 %v1924
    %v2266 = vpop.f32.mrf.mxu0
    %v2267 = vadd.f32 0.0, %v2266
    %v2268 = vpop.f32.mrf.mxu0
    %2269 = vmatprep.mubr.f32.mxu0 0.0
    %2270 = vmatmul.mubr.f32.gmra.mxu0 %v1925
    %v2271 = vpop.f32.mrf.mxu0
    %v2272 = vadd.f32 0.0, %v2271
    %v2273 = vpop.f32.mrf.mxu0
    %2274 = vmatprep.mubr.f32.mxu0 0.0
    %2275 = vmatmul.mubr.f32.gmra.mxu0 %v1926
    %v2276 = vpop.f32.mrf.mxu0
    %v2277 = vadd.f32 0.0, %v2276
    %v2278 = vpop.f32.mrf.mxu0
    %2279 = vmatprep.mubr.f32.mxu0 0.0
    %2280 = vmatmul.mubr.f32.gmra.mxu0 %v1927
    %v2281 = vpop.f32.mrf.mxu0
    %v2282 = vadd.f32 0.0, %v2281
    %v2283 = vpop.f32.mrf.mxu0
    %2284 = vmatprep.mubr.f32.mxu0 0.0
    %2285 = vmatmul.mubr.f32.gmra.mxu0 %v1928
    %v2286 = vpop.f32.mrf.mxu0
    %v2287 = vadd.f32 0.0, %v2286
    %v2288 = vpop.f32.mrf.mxu0
    %2289 = vmatprep.mubr.f32.mxu0 0.0
    %2290 = vmatmul.mubr.f32.gmra.mxu0 %v1929
    %v2291 = vpop.f32.mrf.mxu0
    %v2292 = vadd.f32 0.0, %v2291
    %v2293 = vpop.f32.mrf.mxu0
    %2294 = vdwg.mxu0
    %2295 = vmatprep.subr.mxu0 0.0
    %2296 = vmatpush1.msra.mxu0 %v2173
    %2297 = vmatprep.subr.mxu0 0.0
    %2298 = vmatpush1.msra.mxu0 %v2172
    %2299 = vmatprep.subr.mxu0 0.0
    %2300 = vmatpush1.msra.mxu0 %v2171
    %2301 = vmatprep.subr.mxu0 0.0
    %2302 = vmatpush1.msra.mxu0 %v2170
    %2303 = vmatprep.subr.mxu0 0.0
    %2304 = vmatpush1.msra.mxu0 %v2169
    %2305 = vmatprep.subr.mxu0 0.0
    %2306 = vmatpush1.msra.mxu0 %v2168
    %2307 = vmatprep.subr.mxu0 0.0
    %2308 = vmatpush1.msra.mxu0 %v2167
    %2309 = vmatprep.subr.mxu0 0.0
    %2310 = vmatpush1.msra.mxu0 %v2166
    %2311 = vmatprep.subr.mxu0 0.0
    %2312 = vmatpush1.msra.mxu0 %v2165
    %2313 = vmatprep.subr.mxu0 0.0
    %2314 = vmatpush1.msra.mxu0 %v2164
    %2315 = vmatprep.subr.mxu0 0.0
    %2316 = vmatpush1.msra.mxu0 %v2163
    %2317 = vmatprep.subr.mxu0 0.0
    %2318 = vmatpush1.msra.mxu0 %v2162
    %2319 = vmatprep.subr.mxu0 0.0
    %2320 = vmatpush1.msra.mxu0 %v2161
    %2321 = vmatprep.subr.mxu0 0.0
    %2322 = vmatpush1.msra.mxu0 %v2160
    %2323 = vmatprep.subr.mxu0 0.0
    %2324 = vmatpush1.msra.mxu0 %v2159
    %2325 = vmatprep.subr.mxu0 0.0
    %2326 = vmatpush1.msra.mxu0 %v2158
    %2327 = vmatprep.subr.mxu0 0.0
    %2328 = vmatpush2.msra.mxu0 0.0
    %2329 = vmatprep.subr.mxu0 0.0
    %2330 = vmatpush2.msra.mxu0 0.0
    %2331 = vmatprep.subr.mxu0 0.0
    %2332 = vmatpush2.msra.mxu0 0.0
    %2333 = vmatprep.subr.mxu0 0.0
    %2334 = vmatpush2.msra.mxu0 0.0
    %2335 = vmatprep.subr.mxu0 0.0
    %2336 = vmatpush2.msra.mxu0 0.0
    %2337 = vmatprep.subr.mxu0 0.0
    %2338 = vmatpush2.msra.mxu0 0.0
    %2339 = vmatprep.subr.mxu0 0.0
    %2340 = vmatpush2.msra.mxu0 0.0
    %2341 = vmatprep.subr.mxu0 0.0
    %2342 = vmatpush2.msra.mxu0 0.0
    %2343 = vmatprep.subr.mxu0 0.0
    %2344 = vmatpush2.msra.mxu0 0.0
    %2345 = vmatprep.subr.mxu0 0.0
    %2346 = vmatpush2.msra.mxu0 0.0
    %2347 = vmatprep.subr.mxu0 0.0
    %2348 = vmatpush2.msra.mxu0 0.0
    %2349 = vmatprep.subr.mxu0 0.0
    %2350 = vmatpush2.msra.mxu0 0.0
    %2351 = vmatprep.subr.mxu0 0.0
    %2352 = vmatpush2.msra.mxu0 0.0
    %2353 = vmatprep.subr.mxu0 0.0
    %2354 = vmatpush2.msra.mxu0 0.0
    %2355 = vmatprep.subr.mxu0 0.0
    %2356 = vmatpush2.msra.mxu0 0.0
    %2357 = vmatprep.subr.mxu0 0.0
    %2358 = vmatpush2.msra.mxu0 0.0
    %2359 = vmatprep.mubr.f32.mxu0 0.0
    %2360 = vmatmul.mubr.f32.gmra.mxu0 %v2150
    %v2361 = vpop.f32.mrf.mxu0
    %v2362 = vadd.f32 %v2257, %v2361
    %v2363 = vpop.f32.mrf.mxu0
    %2364 = vmatprep.mubr.f32.mxu0 0.0
    %2365 = vmatmul.mubr.f32.gmra.mxu0 %v2151
    %v2366 = vpop.f32.mrf.mxu0
    %v2367 = vadd.f32 %v2262, %v2366
    %v2368 = vpop.f32.mrf.mxu0
    %2369 = vmatprep.mubr.f32.mxu0 0.0
    %2370 = vmatmul.mubr.f32.gmra.mxu0 %v2152
    %v2371 = vpop.f32.mrf.mxu0
    %v2372 = vadd.f32 %v2267, %v2371
    %v2373 = vpop.f32.mrf.mxu0
    %2374 = vmatprep.mubr.f32.mxu0 0.0
    %2375 = vmatmul.mubr.f32.gmra.mxu0 %v2153
    %v2376 = vpop.f32.mrf.mxu0
    %v2377 = vadd.f32 %v2272, %v2376
    %v2378 = vpop.f32.mrf.mxu0
    %2379 = vmatprep.mubr.f32.mxu0 0.0
    %2380 = vmatmul.mubr.f32.gmra.mxu0 %v2154
    %v2381 = vpop.f32.mrf.mxu0
    %v2382 = vadd.f32 %v2277, %v2381
    %v2383 = vpop.f32.mrf.mxu0
    %2384 = vmatprep.mubr.f32.mxu0 0.0
    %2385 = vmatmul.mubr.f32.gmra.mxu0 %v2155
    %v2386 = vpop.f32.mrf.mxu0
    %v2387 = vadd.f32 %v2282, %v2386
    %v2388 = vpop.f32.mrf.mxu0
    %2389 = vmatprep.mubr.f32.mxu0 0.0
    %2390 = vmatmul.mubr.f32.gmra.mxu0 %v2156
    %v2391 = vpop.f32.mrf.mxu0
    %v2392 = vadd.f32 %v2287, %v2391
    %v2393 = vpop.f32.mrf.mxu0
    %2394 = vmatprep.mubr.f32.mxu0 0.0
    %2395 = vmatmul.mubr.f32.gmra.mxu0 %v2157
    %v2396 = vpop.f32.mrf.mxu0
    %v2397 = vadd.f32 %v2292, %v2396
    %v2398 = vpop.f32.mrf.mxu0
    %2399 = vdwg.mxu0
    %v2400 = vld [vmem:[%s8] sm:$0x1]
    %v2402 = vlaneseq
    %v2403 = vshrl.u32 %v2402, 7
    %v2404 = vsub.s32 0, %v2403
    %v2405 = vrot.slane %v2400, %v2404
    %v2407 = vadd.f32 %v2362, %v2405
    %v2408 = vadd.f32 %v2367, %v2405
    %v2409 = vadd.f32 %v2372, %v2405
    %v2410 = vadd.f32 %v2377, %v2405
    %v2411 = vadd.f32 %v2382, %v2405
    %v2412 = vadd.f32 %v2387, %v2405
    %v2413 = vadd.f32 %v2392, %v2405
    %v2414 = vadd.f32 %v2397, %v2405
    %v2415 = vmul.f32 %v2407, %v2133
    %v2416 = vmul.f32 %v2408, %v2133
    %v2417 = vmul.f32 %v2409, %v2133
    %v2418 = vmul.f32 %v2410, %v2133
    %v2419 = vmul.f32 %v2411, %v2133
    %v2420 = vmul.f32 %v2412, %v2133
    %v2421 = vmul.f32 %v2413, %v2133
    %v2422 = vmul.f32 %v2414, %v2133
    %2423 = vst [vmem:[#allocation15] sm:$0xff] %v2415
    %2424 = vst [vmem:[#allocation15 + $0x8] sm:$0xff] %v2416
    %2425 = vst [vmem:[#allocation15 + $0x10] sm:$0xff] %v2417
    %2426 = vst [vmem:[#allocation15 + $0x18] sm:$0xff] %v2418
    %2427 = vst [vmem:[#allocation15 + $0x20] sm:$0xff] %v2419
    %2428 = vst [vmem:[#allocation15 + $0x28] sm:$0xff] %v2420
    %2429 = vst [vmem:[#allocation15 + $0x30] sm:$0xff] %v2421
    %2430 = vst [vmem:[#allocation15 + $0x38] sm:$0xff] %v2422
    // Predicated region
    $region62: #{tpu_custom_call.1} parent=1 // pred_check
      _
    $region63: #{tpu_custom_call.1} parent=1 // pred_check_branch
      %2432 = sbr.rel (0) target = $region65
    $region64: #{tpu_custom_call.1} parent=1 // pred_region
      %s2434 = ssub.s32 1024, 1024
      %2435 = vsyncadd [#allocation6], %s2434
      %s2436 = sshll.u32 [#allocation15], 4
      %s2437 = int_to_ptr.vmem [resolvable:$true] %s2436
      %2442 = dma.vmem_to_hbm [thread:$0]  %s2437, 1024, %s9, [#allocation6], 128, 128, 8
    $region65: #{tpu_custom_call.1} parent=1 // pred_fallthru
      _
    // Predicated region
    $region66: #{tpu_custom_call.1} parent=1 // pred_check
      _
    $region67: #{tpu_custom_call.1} parent=1 // pred_check_branch
      %2444 = sbr.rel (0) target = $region69
    $region68: #{tpu_custom_call.1} parent=1 // pred_region
      %2445 = dma.done [#allocation6], 1024
    $region69: #{tpu_custom_call.1} parent=1 // pred_fallthru
      _
    %2446 = vsyncpa [#allocation5], 1
    %2447 = vsyncpa [#allocation8], 1
    %2448 = vsyncpa [#allocation11], 1
    %2449 = vsyncpa [#allocation14], 1
    %2450 = vsyncpa [#allocation6], 1

</llo_original>
